<compile_context>
chip_gen: v7x
topology: tpu7x:2x2x1
jax: 0.10.0
libtpu: 0.0.40
codegen_flags: <defaults>
</compile_context>

<pallas_src>
import functools

import jax
import jax.numpy as jnp
from jax.experimental import pallas as pl
from jax.experimental.pallas import tpu as pltpu


# ----------------------------------------------------------------------------
# Model constants
# ----------------------------------------------------------------------------
POOLING_SIZE = 7
FEAT_STRIDE = 16
DOUT_BASE = 32        # dout_base_model
HIDDEN = 64           # _head_to_tail hidden dim
N_ANCHORS = 9
ROIS_PER_IMG = 8
LANES = 128
NEG_INF = -1e30


def _round_up(x, m):
    return ((x + m - 1) // m) * m


def _pad_last(a, n):
    pad = [(0, 0)] * (a.ndim - 1) + [(0, n - a.shape[-1])]
    return jnp.pad(a, pad)


def _pad_axis(a, n, axis):
    pad = [(0, 0)] * a.ndim
    pad[axis] = (0, n - a.shape[axis])
    return jnp.pad(a, pad)


# ----------------------------------------------------------------------------
# Kernel 1: fused base 3x3 conv + ReLU + 16x16 max pool (stride 16)
# ----------------------------------------------------------------------------
def _base_conv_pool_kernel(cols_ref, w_ref, b_ref, o_ref, *, s, w_img):
    # cols_ref: [1, 1, s*W, 27]  im2col rows for one 16-row strip of one image
    # w_ref:    [27, 128] bf16   b_ref: [1, 128] f32
    # o_ref:    [1, 1, Wf, 128]  one pooled row of the /16 feature map
    acc = jnp.dot(cols_ref[0, 0], w_ref[...],
                  preferred_element_type=jnp.float32)      # [s*W, 128]
    acc = jnp.maximum(acc + b_ref[...], 0.0)                # bias + ReLU
    cp = acc.shape[-1]
    wf = w_img // s
    acc = acc.reshape(s, w_img, cp)                         # [16, W, 128]
    acc = jnp.max(acc, axis=0)                              # max over strip rows
    acc = acc.reshape(wf, s, cp)                            # [Wf, 16, 128]
    o_ref[0, 0] = jnp.max(acc, axis=1).astype(o_ref.dtype)  # max over 16 cols


def base_conv_pool(cols, w27, bias, B, Hf, Wf, s, W):
    """cols: [B, Hf, s*W, 27] bf16 -> base_feat [B, Hf, Wf, 128] bf16.

    Channels >= DOUT_BASE are exact zeros (output padded to 128 lanes)."""
    K = cols.shape[-1]
    kern = functools.partial(_base_conv_pool_kernel, s=s, w_img=W)
    return pl.pallas_call(
        kern,
        out_shape=jax.ShapeDtypeStruct((B, Hf, Wf, LANES), jnp.bfloat16),
        grid=(B, Hf),
        in_specs=[
            pl.BlockSpec((1, 1, s * W, K), lambda b, h: (b, h, 0, 0)),
            pl.BlockSpec((K, LANES), lambda b, h: (0, 0)),
            pl.BlockSpec((1, LANES), lambda b, h: (0, 0)),
        ],
        out_specs=pl.BlockSpec((1, 1, Wf, LANES), lambda b, h: (b, h, 0, 0)),
        compiler_params=pltpu.CompilerParams(
            dimension_semantics=("parallel", "parallel")),
    )(cols, w27, bias)


# ----------------------------------------------------------------------------
# Kernel 2: fused RPN 3x3 conv + ReLU + 1x1 cls/bbox heads
# ----------------------------------------------------------------------------
def _rpn_fused_kernel(cols_ref, wc_ref, bc_ref, wh_ref, bh_ref, o_ref):
    feat = jnp.dot(cols_ref[...], wc_ref[...], preferred_element_type=jnp.float32)
    feat = jnp.maximum(feat + bc_ref[...], 0.0)             # RPN conv + ReLU (VMEM)
    head = jnp.dot(feat.astype(jnp.bfloat16), wh_ref[...],
                   preferred_element_type=jnp.float32)
    o_ref[...] = head + bh_ref[...]                         # [cls(18) | bbox(36) | pad]


def rpn_fused(cols, wc, bc, wh, bh):
    """cols: [M, 9*C] bf16 -> [M, 128] f32 (cls scores | bbox deltas | zero pad)."""
    M, K = cols.shape
    TM = 256 if M >= 256 else _round_up(M, 8)
    Mp = _round_up(M, TM)
    if Mp != M:
        cols = _pad_axis(cols, Mp, 0)
    out = pl.pallas_call(
        _rpn_fused_kernel,
        out_shape=jax.ShapeDtypeStruct((Mp, LANES), jnp.float32),
        grid=(Mp // TM,),
        in_specs=[
            pl.BlockSpec((TM, K), lambda i: (i, 0)),
            pl.BlockSpec((K, LANES), lambda i: (0, 0)),
            pl.BlockSpec((1, LANES), lambda i: (0, 0)),
            pl.BlockSpec((LANES, LANES), lambda i: (0, 0)),
            pl.BlockSpec((1, LANES), lambda i: (0, 0)),
        ],
        out_specs=pl.BlockSpec((TM, LANES), lambda i: (i, 0)),
        compiler_params=pltpu.CompilerParams(dimension_semantics=("parallel",)),
    )(cols, wc, bc, wh, bh)
    return out[:M]


# ----------------------------------------------------------------------------
# Kernel 3: ROI-Align as a per-ROI bilinear-weights @ feature matmul
#           (batch index scalar-prefetched into the feature index_map)
# ----------------------------------------------------------------------------
def _roi_align_kernel(bidx_ref, w_ref, f_ref, o_ref):
    del bidx_ref  # consumed by the feature BlockSpec index_map
    o_ref[0] = jnp.dot(w_ref[0], f_ref[0],
                       preferred_element_type=jnp.float32).astype(o_ref.dtype)


def roi_align_pallas(feat_flat, winterp, batch_idx):
    """feat_flat: [B, Hf*Wf, 128] bf16, winterp: [R, P*P, Hf*Wf] bf16,
    batch_idx: [R] int32 -> pooled [R, P*P, 128] bf16."""
    B, S, C = feat_flat.shape
    R, PP, _ = winterp.shape
    grid_spec = pltpu.PrefetchScalarGridSpec(
        num_scalar_prefetch=1,
        grid=(R,),
        in_specs=[
            pl.BlockSpec((1, PP, S), lambda r, bidx: (r, 0, 0)),
            pl.BlockSpec((1, S, C), lambda r, bidx: (bidx[r], 0, 0)),
        ],
        out_specs=pl.BlockSpec((1, PP, C), lambda r, bidx: (r, 0, 0)),
    )
    return pl.pallas_call(
        _roi_align_kernel,
        out_shape=jax.ShapeDtypeStruct((R, PP, C), jnp.bfloat16),
        grid_spec=grid_spec,
        compiler_params=pltpu.CompilerParams(dimension_semantics=("arbitrary",)),
    )(batch_idx, winterp, feat_flat)


# ----------------------------------------------------------------------------
# Kernel 4: fused head: fc6 + ReLU + fc7 + ReLU + cls/bbox heads + softmax
# ----------------------------------------------------------------------------
def _head_fused_kernel(x_ref, w6_ref, b6_ref, w7_ref, b7_ref,
                       wc_ref, bc_ref, wb_ref, bb_ref, cls_ref, bbox_ref):
    h = jnp.dot(x_ref[...], w6_ref[...], preferred_element_type=jnp.float32)
    h = jnp.maximum(h + b6_ref[...], 0.0)                          # fc6 + ReLU
    h = jnp.dot(h.astype(jnp.bfloat16), w7_ref[...],
                preferred_element_type=jnp.float32)
    h = jnp.maximum(h + b7_ref[...], 0.0)                          # fc7 + ReLU
    hb = h.astype(jnp.bfloat16)
    logits = jnp.dot(hb, wc_ref[...], preferred_element_type=jnp.float32) + bc_ref[...]
    m = jnp.max(logits, axis=-1, keepdims=True)                    # padded logits are -1e30
    e = jnp.exp(logits - m)
    denom = jnp.sum(e, axis=-1, keepdims=True)
    cls_ref[...] = e * pl.reciprocal(denom, approx=True)           # softmax
    bbox_ref[...] = jnp.dot(hb, wb_ref[...],
                            preferred_element_type=jnp.float32) + bb_ref[...]


def head_fused(x, w6, b6, w7, b7, wc, bc, wb, bb):
    """x: [R, fc_in] bf16 -> (cls_prob [R,128], bbox_pred [R,128]) f32 (lane padded)."""
    M, K = x.shape
    TM = 256 if M >= 256 else _round_up(M, 8)
    Mp = _round_up(M, TM)
    if Mp != M:
        x = _pad_axis(x, Mp, 0)
    const = lambda i: (0, 0)
    cls, bbox = pl.pallas_call(
        _head_fused_kernel,
        out_shape=(jax.ShapeDtypeStruct((Mp, LANES), jnp.float32),
                   jax.ShapeDtypeStruct((Mp, LANES), jnp.float32)),
        grid=(Mp // TM,),
        in_specs=[
            pl.BlockSpec((TM, K), lambda i: (i, 0)),
            pl.BlockSpec((K, LANES), const), pl.BlockSpec((1, LANES), const),
            pl.BlockSpec((LANES, LANES), const), pl.BlockSpec((1, LANES), const),
            pl.BlockSpec((LANES, LANES), const), pl.BlockSpec((1, LANES), const),
            pl.BlockSpec((LANES, LANES), const), pl.BlockSpec((1, LANES), const),
        ],
        out_specs=(pl.BlockSpec((TM, LANES), lambda i: (i, 0)),
                   pl.BlockSpec((TM, LANES), lambda i: (i, 0))),
        compiler_params=pltpu.CompilerParams(dimension_semantics=("parallel",)),
    )(x, w6, b6, w7, b7, wc, bc, wb, bb)
    return cls[:M], bbox[:M]


# ----------------------------------------------------------------------------
# Plain-JAX glue (tiny tensors only; fused by the surrounding jit)
# ----------------------------------------------------------------------------
def im2col_3x3(x_nhwc):
    """3x3 / stride 1 / pad 1 im2col -> [B, H, W, 9*C]."""
    B, H, W, C = x_nhwc.shape
    xp = jnp.pad(x_nhwc, ((0, 0), (1, 1), (1, 1), (0, 0)))
    patches = [xp[:, i:i + H, j:j + W, :] for i in range(3) for j in range(3)]
    return jnp.concatenate(patches, axis=-1)


def build_roi_interp(rois_flat, Hf, Wf, P, spatial_scale):
    """Bilinear ROI-Align sampling expressed as per-ROI weights [R, P*P, Hf*Wf].
    # TODO(synk): single bin-center sample per bin; torchvision ROIAlign with
    # sampling_ratio=0 averages an adaptive number of samples per bin."""
    b = rois_flat[:, 0].astype(jnp.int32)
    x1 = rois_flat[:, 1] * spatial_scale
    y1 = rois_flat[:, 2] * spatial_scale
    x2 = rois_flat[:, 3] * spatial_scale
    y2 = rois_flat[:, 4] * spatial_scale
    rw = jnp.maximum(x2 - x1, 1.0)
    rh = jnp.maximum(y2 - y1, 1.0)
    centers = (jnp.arange(P, dtype=jnp.float32) + 0.5) / P
    xs = jnp.clip(x1[:, None] + centers[None, :] * rw[:, None], 0.0, Wf - 1.0)
    ys = jnp.clip(y1[:, None] + centers[None, :] * rh[:, None], 0.0, Hf - 1.0)
    x0 = jnp.floor(xs)
    y0 = jnp.floor(ys)
    lx = xs - x0
    ly = ys - y0
    x0i = x0.astype(jnp.int32)
    y0i = y0.astype(jnp.int32)
    x1i = jnp.minimum(x0i + 1, Wf - 1)
    y1i = jnp.minimum(y0i + 1, Hf - 1)
    wx = (jax.nn.one_hot(x0i, Wf, dtype=jnp.float32) * (1.0 - lx)[..., None]
          + jax.nn.one_hot(x1i, Wf, dtype=jnp.float32) * lx[..., None])   # [R,P,Wf]
    wy = (jax.nn.one_hot(y0i, Hf, dtype=jnp.float32) * (1.0 - ly)[..., None]
          + jax.nn.one_hot(y1i, Hf, dtype=jnp.float32) * ly[..., None])   # [R,P,Hf]
    wmat = jnp.einsum("rph,rqw->rpqhw", wy, wx)            # separable bilinear weights
    R = rois_flat.shape[0]
    return b, wmat.reshape(R, P * P, Hf * Wf)


def make_grid_rois(batch_size, H, W, rois_per_img=8):
    """Deterministic ROIs (image coords) in place of the RPN proposal layer."""
    base = jnp.array(
        [[0, 0, W / 2 - 1, H / 2 - 1],
         [W / 2, 0, W - 1, H / 2 - 1],
         [0, H / 2, W / 2 - 1, H - 1],
         [W / 2, H / 2, W - 1, H - 1],
         [W / 4, H / 4, 3 * W / 4 - 1, 3 * H / 4 - 1],
         [0, 0, W - 1, H - 1],
         [W / 8, H / 8, 7 * W / 8 - 1, 7 * H / 8 - 1],
         [3 * W / 8, 3 * H / 8, 5 * W / 8 - 1, 5 * H / 8 - 1]],
        jnp.float32)[:rois_per_img]
    rois = []
    for b in range(batch_size):
        idx = jnp.full((rois_per_img, 1), float(b), jnp.float32)
        rois.append(jnp.concatenate([idx, base], axis=1))
    return jnp.stack(rois, 0)  # [B, rois_per_img, 5]


# ----------------------------------------------------------------------------
# Parameters (torch-layout init + matmul-ready / lane-padded prepped forms)
# ----------------------------------------------------------------------------
def init_params(key, n_classes):
    ks = jax.random.split(key, 8)

    def normal(k, shape, std):
        return std * jax.random.normal(k, shape, jnp.float32)

    fc_in = DOUT_BASE * POOLING_SIZE * POOLING_SIZE
    return {
        # torch conv layout [out, in, kh, kw]
        "base_w": normal(ks[0], (DOUT_BASE, 3, 3, 3), 0.01),
        "base_b": jnp.zeros((DOUT_BASE,), jnp.float32),
        "rpn_conv_w": normal(ks[1], (DOUT_BASE, DOUT_BASE, 3, 3), 0.01),
        "rpn_conv_b": jnp.zeros((DOUT_BASE,), jnp.float32),
        "rpn_cls_w": normal(ks[2], (2 * N_ANCHORS, DOUT_BASE, 1, 1), 0.01),
        "rpn_cls_b": jnp.zeros((2 * N_ANCHORS,), jnp.float32),
        "rpn_bbox_w": normal(ks[3], (4 * N_ANCHORS, DOUT_BASE, 1, 1), 0.01),
        "rpn_bbox_b": jnp.zeros((4 * N_ANCHORS,), jnp.float32),
        # linear layers stored as [in, out]
        "fc6_w": normal(ks[4], (fc_in, HIDDEN), 0.01),
        "fc6_b": jnp.zeros((HIDDEN,), jnp.float32),
        "fc7_w": normal(ks[5], (HIDDEN, HIDDEN), 0.01),
        "fc7_b": jnp.zeros((HIDDEN,), jnp.float32),
        "cls_w": normal(ks[6], (HIDDEN, n_classes), 0.01),
        "cls_b": jnp.zeros((n_classes,), jnp.float32),
        "bbox_w": normal(ks[7], (HIDDEN, 4 * n_classes), 0.001),
        "bbox_b": jnp.zeros((4 * n_classes,), jnp.float32),
    }


def prep_params(p, n_classes):
    f32, bf16 = jnp.float32, jnp.bfloat16
    # base conv: [out,in,3,3] -> [27, 128] (row = (kh*3+kw)*3 + cin, lane-padded out)
    w = jnp.transpose(p["base_w"], (2, 3, 1, 0)).reshape(9 * 3, DOUT_BASE)
    base_w27 = _pad_last(w, LANES).astype(bf16)
    base_b = _pad_last(p["base_b"][None, :], LANES).astype(f32)
    # RPN 3x3 conv as im2col matmul weight [9*32, 128]
    rpn_wc = jnp.transpose(p["rpn_conv_w"], (2, 3, 1, 0)).reshape(-1, DOUT_BASE)
    rpn_wc = _pad_last(rpn_wc, LANES).astype(bf16)
    rpn_bc = _pad_last(p["rpn_conv_b"][None, :], LANES).astype(f32)
    # RPN heads fused column-wise: [cls(18) | bbox(36)] -> [128, 128]
    wcls = jnp.transpose(p["rpn_cls_w"][:, :, 0, 0], (1, 0))      # [32, 18]
    wbox = jnp.transpose(p["rpn_bbox_w"][:, :, 0, 0], (1, 0))     # [32, 36]
    wh = jnp.concatenate([wcls, wbox], axis=1)                    # [32, 54]
    rpn_wh = _pad_last(_pad_axis(wh, LANES, 0), LANES).astype(bf16)
    bh = jnp.concatenate([p["rpn_cls_b"], p["rpn_bbox_b"]])[None, :]
    rpn_bh = _pad_last(bh, LANES).astype(f32)
    # fc6: permute rows from torch (c*49 + p) order to the kernel's (p*32 + c)
    # order so the ROI-align output can be fed without a transpose.
    P2 = POOLING_SIZE * POOLING_SIZE
    perm = (jnp.arange(DOUT_BASE)[None, :] * P2
            + jnp.arange(P2)[:, None]).reshape(-1)
    w6 = _pad_last(p["fc6_w"][perm], LANES).astype(bf16)          # [1568, 128]
    b6 = _pad_last(p["fc6_b"][None, :], LANES).astype(f32)
    w7 = _pad_last(_pad_axis(p["fc7_w"], LANES, 0), LANES).astype(bf16)
    b7 = _pad_last(p["fc7_b"][None, :], LANES).astype(f32)
    wc = _pad_last(_pad_axis(p["cls_w"], LANES, 0), LANES).astype(bf16)
    # padded class logits get -1e30 so the lane-dense softmax ignores them
    bc = jnp.full((1, LANES), NEG_INF, f32).at[0, :n_classes].set(p["cls_b"])
    wb = _pad_last(_pad_axis(p["bbox_w"], LANES, 0), LANES).astype(bf16)
    bb = _pad_last(p["bbox_b"][None, :], LANES).astype(f32)
    return dict(base_w27=base_w27, base_b=base_b, rpn_wc=rpn_wc, rpn_bc=rpn_bc,
                rpn_wh=rpn_wh, rpn_bh=rpn_bh, w6=w6, b6=b6, w7=w7, b7=b7,
                wc=wc, bc=bc, wb=wb, bb=bb)


# ----------------------------------------------------------------------------
# Jitted end-to-end forward (inference mode)
# ----------------------------------------------------------------------------
@functools.partial(jax.jit, static_argnames=("n_classes",))
def _forward_impl(prep, im_data, *, n_classes):
    B, _, H, W = im_data.shape
    s = FEAT_STRIDE
    Hf, Wf = H // s, W // s
    im_nhwc = jnp.transpose(im_data, (0, 2, 3, 1)).astype(jnp.bfloat16)

    # --- RCNN_base: im2col (JAX) + fused conv + ReLU + 16x16 max pool (1 kernel)
    cols = im2col_3x3(im_nhwc).reshape(B, Hf, s * W, 9 * 3)
    base_feat = base_conv_pool(cols, prep["base_w27"], prep["base_b"],
                               B, Hf, Wf, s, W)            # [B, Hf, Wf, 128]
    base_feat32 = base_feat[..., :DOUT_BASE]               # real channels

    # --- RCNN_rpn: fused conv + ReLU + cls/bbox heads (1 kernel)
    rpn_cols = im2col_3x3(base_feat32).reshape(B * Hf * Wf, 9 * DOUT_BASE)
    rpn_out = rpn_fused(rpn_cols, prep["rpn_wc"], prep["rpn_bc"],
                        prep["rpn_wh"], prep["rpn_bh"])
    rpn_cls_score = rpn_out[:, :2 * N_ANCHORS]
    rpn_bbox_pred = rpn_out[:, 2 * N_ANCHORS:6 * N_ANCHORS]
    # TODO(synk): anchor decode + NMS proposal layer not ported; deterministic
    # grid ROIs replace the proposals, so the RPN head outputs are unused below.
    del rpn_cls_score, rpn_bbox_pred
    rois = make_grid_rois(B, H, W, ROIS_PER_IMG)            # [B, 8, 5]

    # --- ROI align: bilinear weights @ features on the MXU (1 kernel)
    rois_flat = rois.reshape(-1, 5)
    batch_idx, winterp = build_roi_interp(rois_flat, Hf, Wf, POOLING_SIZE, 1.0 / s)
    feat_flat = base_feat.reshape(B, Hf * Wf, LANES)
    pooled = roi_align_pallas(feat_flat, winterp.astype(jnp.bfloat16),
                              batch_idx)                    # [R, 49, 128] bf16
    R = rois_flat.shape[0]
    pooled_flat = pooled[:, :, :DOUT_BASE].reshape(R, -1)   # [R, 1568] bf16

    # --- _head_to_tail + cls/bbox heads + softmax, fused (1 kernel)
    cls_prob_p, bbox_pred_p = head_fused(pooled_flat, prep["w6"], prep["b6"],
                                         prep["w7"], prep["b7"], prep["wc"],
                                         prep["bc"], prep["wb"], prep["bb"])
    cls_prob = cls_prob_p[:, :n_classes].reshape(B, ROIS_PER_IMG, -1)
    bbox_pred = bbox_pred_p[:, :4 * n_classes].reshape(B, ROIS_PER_IMG, -1)
    return rois, cls_prob, bbox_pred


# ----------------------------------------------------------------------------
# Model
# ----------------------------------------------------------------------------
class FasterRCNN:
    """JAX/Pallas port of _fasterRCNN.forward (inference mode)."""

    def __init__(self, classes, class_agnostic, key):
        self.classes = classes
        self.n_classes = len(classes)
        self.class_agnostic = class_agnostic
        self.training = False
        self.params = init_params(key, self.n_classes)
        self.prep = prep_params(self.params, self.n_classes)

    def forward(self, im_data, im_info, gt_boxes, num_boxes):
        del im_info, gt_boxes, num_boxes   # inference path only uses im_data here
        rois, cls_prob, bbox_pred = _forward_impl(self.prep, im_data,
                                                  n_classes=self.n_classes)
        rpn_loss_cls = 0
        rpn_loss_bbox = 0
        RCNN_loss_cls = 0
        RCNN_loss_bbox = 0
        rois_label = None
        # TODO(synk): training branch (proposal-target sampling, per-class bbox
        # gather, cross-entropy / smooth-L1 losses) not ported.
        return (rois, cls_prob, bbox_pred, rpn_loss_cls, rpn_loss_bbox,
                RCNN_loss_cls, RCNN_loss_bbox, rois_label)


# ----------------------------------------------------------------------------
if __name__ == "__main__":
    key = jax.random.PRNGKey(0)
    k_im, k_params = jax.random.split(key)

    B, H, W = 2, 64, 64
    im_data = jax.random.normal(k_im, (B, 3, H, W), jnp.float32)   # NCHW input
    im_info = jnp.array([[H, W, 1.0]] * B, jnp.float32)
    gt_boxes = jnp.zeros((B, 5, 5), jnp.float32)
    num_boxes = jnp.zeros((B,), jnp.int32)

    model = FasterRCNN(classes=("__background__", "car", "person", "dog"),
                       class_agnostic=False, key=k_params)

    rois, cls_prob, bbox_pred, *_ = model.forward(im_data, im_info, gt_boxes,
                                                  num_boxes)
    jax.block_until_ready((rois, cls_prob, bbox_pred))

    assert rois.shape == (B, ROIS_PER_IMG, 5)
    assert cls_prob.shape == (B, ROIS_PER_IMG, 4)
    assert bbox_pred.shape == (B, ROIS_PER_IMG, 16)
    assert bool(jnp.all(jnp.isfinite(cls_prob))) and bool(jnp.all(jnp.isfinite(bbox_pred)))
    print("KERNEL_OK")
</pallas_src>

<mosaic_0001>
module attributes {stable_mosaic.version = 11 : i64} {
  func.func @_base_conv_pool_kernel(%arg0: i32, %arg1: i32, %arg2: memref<1x1x1024x27xbf16, #tpu.memory_space<vmem>>, %arg3: memref<27x128xbf16, #tpu.memory_space<vmem>>, %arg4: memref<1x128xf32, #tpu.memory_space<vmem>>, %arg5: memref<1x1x4x128xbf16, #tpu.memory_space<vmem>>) attributes {dimension_semantics = [#tpu.dimension_semantics<parallel>, #tpu.dimension_semantics<parallel>], iteration_bounds = array<i64: 2, 4>, scalar_prefetch = 0 : i64, scratch_operands = 0 : i64, tpu.core_type = #tpu.core_type<tc>, window_params = [{transform_indices = @transform_0, window_bounds = array<i64: 1, 1, 1024, 27>}, {pipeline_mode = #tpu.pipeline_mode<synchronous>, transform_indices = @transform_1, window_bounds = array<i64: 27, 128>}, {pipeline_mode = #tpu.pipeline_mode<synchronous>, transform_indices = @transform_2, window_bounds = array<i64: 1, 128>}, {transform_indices = @transform_3, window_bounds = array<i64: 1, 1, 4, 128>}]} {
    %c0 = arith.constant 0 : index
    %c0_0 = arith.constant 0 : index
    %c0_1 = arith.constant 0 : index
    %c0_2 = arith.constant 0 : index
    %0 = vector.load %arg2[%c0, %c0_0, %c0_1, %c0_2] : memref<1x1x1024x27xbf16, #tpu.memory_space<vmem>>, vector<1x1x1024x27xbf16>
    %1 = vector.shape_cast %0 : vector<1x1x1024x27xbf16> to vector<1024x27xbf16>
    %c0_3 = arith.constant 0 : index
    %c0_4 = arith.constant 0 : index
    %2 = vector.load %arg3[%c0_3, %c0_4] : memref<27x128xbf16, #tpu.memory_space<vmem>>, vector<27x128xbf16>
    %cst = arith.constant dense<0.000000e+00> : vector<1024x128xf32>
    %3 = tpu.matmul %1, %2, %cst {dimension_numbers = #tpu.dot_dimension_numbers<[1], [0], [0], [1], [0, 0, 1, 1], [], []>} : vector<1024x27xbf16>, vector<27x128xbf16>, vector<1024x128xf32> -> vector<1024x128xf32>
    %c0_5 = arith.constant 0 : index
    %c0_6 = arith.constant 0 : index
    %4 = vector.load %arg4[%c0_5, %c0_6] : memref<1x128xf32, #tpu.memory_space<vmem>>, vector<1x128xf32>
    %5 = vector.broadcast %4 : vector<1x128xf32> to vector<1024x128xf32>
    %6 = arith.addf %3, %5 : vector<1024x128xf32>
    %cst_7 = arith.constant 0.000000e+00 : f32
    %7 = vector.broadcast %cst_7 : f32 to vector<1024x128xf32>
    %8 = arith.maximumf %6, %7 : vector<1024x128xf32>
    %9 = vector.shape_cast %8 : vector<1024x128xf32> to vector<16x64x128xf32>
    %cst_8 = arith.constant dense<0xFF800000> : vector<64x128xf32>
    %10 = vector.multi_reduction <maximumf>, %9, %cst_8 [0] : vector<16x64x128xf32> to vector<64x128xf32>
    %11 = vector.shape_cast %10 : vector<64x128xf32> to vector<4x16x128xf32>
    %cst_9 = arith.constant dense<0xFF800000> : vector<4x128xf32>
    %12 = vector.multi_reduction <maximumf>, %11, %cst_9 [1] : vector<4x16x128xf32> to vector<4x128xf32>
    %13 = arith.truncf %12 : vector<4x128xf32> to vector<4x128xbf16>
    %c0_10 = arith.constant 0 : index
    %c0_11 = arith.constant 0 : index
    %c0_12 = arith.constant 0 : index
    %c0_13 = arith.constant 0 : index
    %14 = vector.load %arg5[%c0_10, %c0_11, %c0_12, %c0_13] : memref<1x1x4x128xbf16, #tpu.memory_space<vmem>>, vector<1x1x4x128xbf16>
    %15 = vector.shape_cast %14 : vector<1x1x4x128xbf16> to vector<4x128xbf16>
    %16 = vector.shape_cast %13 : vector<4x128xbf16> to vector<1x1x4x128xbf16>
    tpu.vector_store %arg5[%c0_10, %c0_11, %c0_12, %c0_13], %16 {strides = array<i32>} : memref<1x1x4x128xbf16, #tpu.memory_space<vmem>>, vector<1x1x4x128xbf16>,
    return
  }
  func.func @transform_0(%arg0: i32, %arg1: i32) -> (i32, i32, i32, i32) {
    %c0_i32 = arith.constant 0 : i32
    %c0_i32_0 = arith.constant 0 : i32
    %c0_i32_1 = arith.constant 0 : i32
    return %arg0, %arg1, %c0_i32, %c0_i32_0 : i32, i32, i32, i32
  }
  func.func @transform_1(%arg0: i32, %arg1: i32) -> (i32, i32) {
    %c0_i32 = arith.constant 0 : i32
    %c0_i32_0 = arith.constant 0 : i32
    %c0_i32_1 = arith.constant 0 : i32
    return %c0_i32, %c0_i32_0 : i32, i32
  }
  func.func @transform_2(%arg0: i32, %arg1: i32) -> (i32, i32) {
    %c0_i32 = arith.constant 0 : i32
    %c0_i32_0 = arith.constant 0 : i32
    %c0_i32_1 = arith.constant 0 : i32
    return %c0_i32, %c0_i32_0 : i32, i32
  }
  func.func @transform_3(%arg0: i32, %arg1: i32) -> (i32, i32, i32, i32) {
    %c0_i32 = arith.constant 0 : i32
    %c0_i32_0 = arith.constant 0 : i32
    %c0_i32_1 = arith.constant 0 : i32
    return %arg0, %arg1, %c0_i32, %c0_i32_0 : i32, i32, i32, i32
  }
}

module attributes {stable_mosaic.version = 11 : i64} {
  func.func @_roi_align_kernel(%arg0: i32, %arg1: memref<16xi32, #tpu.memory_space<smem>>, %arg2: memref<1x49x16xbf16, #tpu.memory_space<vmem>>, %arg3: memref<1x16x128xbf16, #tpu.memory_space<vmem>>, %arg4: memref<1x49x128xbf16, #tpu.memory_space<vmem>>) attributes {dimension_semantics = [#tpu.dimension_semantics<arbitrary>], iteration_bounds = array<i64: 16>, scalar_prefetch = 1 : i64, scratch_operands = 0 : i64, tpu.core_type = #tpu.core_type<tc>, window_params = [{transform_indices = @transform_0, window_bounds = array<i64: 1, 49, 16>}, {transform_indices = @transform_1, window_bounds = array<i64: 1, 16, 128>}, {transform_indices = @transform_2, window_bounds = array<i64: 1, 49, 128>}]} {
    %c0 = arith.constant 0 : index
    %c0_0 = arith.constant 0 : index
    %c0_1 = arith.constant 0 : index
    %0 = vector.load %arg2[%c0, %c0_0, %c0_1] : memref<1x49x16xbf16, #tpu.memory_space<vmem>>, vector<1x49x16xbf16>
    %1 = vector.shape_cast %0 : vector<1x49x16xbf16> to vector<49x16xbf16>
    %c0_2 = arith.constant 0 : index
    %c0_3 = arith.constant 0 : index
    %c0_4 = arith.constant 0 : index
    %2 = vector.load %arg3[%c0_2, %c0_3, %c0_4] : memref<1x16x128xbf16, #tpu.memory_space<vmem>>, vector<1x16x128xbf16>
    %3 = vector.shape_cast %2 : vector<1x16x128xbf16> to vector<16x128xbf16>
    %cst = arith.constant dense<0.000000e+00> : vector<49x128xf32>
    %4 = tpu.matmul %1, %3, %cst {dimension_numbers = #tpu.dot_dimension_numbers<[1], [0], [0], [1], [0, 0, 1, 1], [], []>} : vector<49x16xbf16>, vector<16x128xbf16>, vector<49x128xf32> -> vector<49x128xf32>
    %5 = arith.truncf %4 : vector<49x128xf32> to vector<49x128xbf16>
    %c0_5 = arith.constant 0 : index
    %c0_6 = arith.constant 0 : index
    %c0_7 = arith.constant 0 : index
    %6 = vector.load %arg4[%c0_5, %c0_6, %c0_7] : memref<1x49x128xbf16, #tpu.memory_space<vmem>>, vector<1x49x128xbf16>
    %7 = vector.shape_cast %6 : vector<1x49x128xbf16> to vector<49x128xbf16>
    %8 = vector.shape_cast %5 : vector<49x128xbf16> to vector<1x49x128xbf16>
    tpu.vector_store %arg4[%c0_5, %c0_6, %c0_7], %8 {strides = array<i32>} : memref<1x49x128xbf16, #tpu.memory_space<vmem>>, vector<1x49x128xbf16>,
    return
  }
  func.func @transform_0(%arg0: i32, %arg1: memref<16xi32, #tpu.memory_space<smem>>) -> (i32, i32, i32) {
    %c0_i32 = arith.constant 0 : i32
    %c0_i32_0 = arith.constant 0 : i32
    %c0_i32_1 = arith.constant 0 : i32
    return %arg0, %c0_i32, %c0_i32_0 : i32, i32, i32
  }
  func.func @transform_1(%arg0: i32, %arg1: memref<16xi32, #tpu.memory_space<smem>>) -> (i32, i32, i32) {
    %0 = arith.index_cast %arg0 : i32 to index
    %1 = memref.load %arg1[%0] : memref<16xi32, #tpu.memory_space<smem>>
    %c0_i32 = arith.constant 0 : i32
    %c0_i32_0 = arith.constant 0 : i32
    %c0_i32_1 = arith.constant 0 : i32
    return %1, %c0_i32, %c0_i32_0 : i32, i32, i32
  }
  func.func @transform_2(%arg0: i32, %arg1: memref<16xi32, #tpu.memory_space<smem>>) -> (i32, i32, i32) {
    %c0_i32 = arith.constant 0 : i32
    %c0_i32_0 = arith.constant 0 : i32
    %c0_i32_1 = arith.constant 0 : i32
    return %arg0, %c0_i32, %c0_i32_0 : i32, i32, i32
  }
}

module attributes {stable_mosaic.version = 11 : i64} {
  func.func @_head_fused_kernel(%arg0: i32, %arg1: memref<16x1568xbf16, #tpu.memory_space<vmem>>, %arg2: memref<1568x128xbf16, #tpu.memory_space<vmem>>, %arg3: memref<1x128xf32, #tpu.memory_space<vmem>>, %arg4: memref<128x128xbf16, #tpu.memory_space<vmem>>, %arg5: memref<1x128xf32, #tpu.memory_space<vmem>>, %arg6: memref<128x128xbf16, #tpu.memory_space<vmem>>, %arg7: memref<1x128xf32, #tpu.memory_space<vmem>>, %arg8: memref<128x128xbf16, #tpu.memory_space<vmem>>, %arg9: memref<1x128xf32, #tpu.memory_space<vmem>>, %arg10: memref<16x128xf32, #tpu.memory_space<vmem>>, %arg11: memref<16x128xf32, #tpu.memory_space<vmem>>) attributes {dimension_semantics = [#tpu.dimension_semantics<parallel>], iteration_bounds = array<i64: 1>, scalar_prefetch = 0 : i64, scratch_operands = 0 : i64, tpu.core_type = #tpu.core_type<tc>, window_params = [{transform_indices = @transform_0, window_bounds = array<i64: 16, 1568>}, {pipeline_mode = #tpu.pipeline_mode<synchronous>, transform_indices = @transform_1, window_bounds = array<i64: 1568, 128>}, {pipeline_mode = #tpu.pipeline_mode<synchronous>, transform_indices = @transform_2, window_bounds = array<i64: 1, 128>}, {pipeline_mode = #tpu.pipeline_mode<synchronous>, transform_indices = @transform_3, window_bounds = array<i64: 128, 128>}, {pipeline_mode = #tpu.pipeline_mode<synchronous>, transform_indices = @transform_4, window_bounds = array<i64: 1, 128>}, {pipeline_mode = #tpu.pipeline_mode<synchronous>, transform_indices = @transform_5, window_bounds = array<i64: 128, 128>}, {pipeline_mode = #tpu.pipeline_mode<synchronous>, transform_indices = @transform_6, window_bounds = array<i64: 1, 128>}, {pipeline_mode = #tpu.pipeline_mode<synchronous>, transform_indices = @transform_7, window_bounds = array<i64: 128, 128>}, {pipeline_mode = #tpu.pipeline_mode<synchronous>, transform_indices = @transform_8, window_bounds = array<i64: 1, 128>}, {transform_indices = @transform_9, window_bounds = array<i64: 16, 128>}, {transform_indices = @transform_10, window_bounds = array<i64: 16, 128>}]} {
    %c0 = arith.constant 0 : index
    %c0_0 = arith.constant 0 : index
    %0 = vector.load %arg1[%c0, %c0_0] : memref<16x1568xbf16, #tpu.memory_space<vmem>>, vector<16x1568xbf16>
    %c0_1 = arith.constant 0 : index
    %c0_2 = arith.constant 0 : index
    %1 = vector.load %arg2[%c0_1, %c0_2] : memref<1568x128xbf16, #tpu.memory_space<vmem>>, vector<1568x128xbf16>
    %cst = arith.constant dense<0.000000e+00> : vector<16x128xf32>
    %2 = tpu.matmul %0, %1, %cst {dimension_numbers = #tpu.dot_dimension_numbers<[1], [0], [0], [1], [0, 0, 1, 1], [], []>} : vector<16x1568xbf16>, vector<1568x128xbf16>, vector<16x128xf32> -> vector<16x128xf32>
    %c0_3 = arith.constant 0 : index
    %c0_4 = arith.constant 0 : index
    %3 = vector.load %arg3[%c0_3, %c0_4] : memref<1x128xf32, #tpu.memory_space<vmem>>, vector<1x128xf32>
    %4 = vector.broadcast %3 : vector<1x128xf32> to vector<16x128xf32>
    %5 = arith.addf %2, %4 : vector<16x128xf32>
    %cst_5 = arith.constant 0.000000e+00 : f32
    %6 = vector.broadcast %cst_5 : f32 to vector<16x128xf32>
    %7 = arith.maximumf %5, %6 : vector<16x128xf32>
    %8 = arith.truncf %7 : vector<16x128xf32> to vector<16x128xbf16>
    %c0_6 = arith.constant 0 : index
    %c0_7 = arith.constant 0 : index
    %9 = vector.load %arg4[%c0_6, %c0_7] : memref<128x128xbf16, #tpu.memory_space<vmem>>, vector<128x128xbf16>
    %cst_8 = arith.constant dense<0.000000e+00> : vector<16x128xf32>
    %10 = tpu.matmul %8, %9, %cst_8 {dimension_numbers = #tpu.dot_dimension_numbers<[1], [0], [0], [1], [0, 0, 1, 1], [], []>} : vector<16x128xbf16>, vector<128x128xbf16>, vector<16x128xf32> -> vector<16x128xf32>
    %c0_9 = arith.constant 0 : index
    %c0_10 = arith.constant 0 : index
    %11 = vector.load %arg5[%c0_9, %c0_10] : memref<1x128xf32, #tpu.memory_space<vmem>>, vector<1x128xf32>
    %12 = vector.broadcast %11 : vector<1x128xf32> to vector<16x128xf32>
    %13 = arith.addf %10, %12 : vector<16x128xf32>
    %cst_11 = arith.constant 0.000000e+00 : f32
    %14 = vector.broadcast %cst_11 : f32 to vector<16x128xf32>
    %15 = arith.maximumf %13, %14 : vector<16x128xf32>
    %16 = arith.truncf %15 : vector<16x128xf32> to vector<16x128xbf16>
    %c0_12 = arith.constant 0 : index
    %c0_13 = arith.constant 0 : index
    %17 = vector.load %arg6[%c0_12, %c0_13] : memref<128x128xbf16, #tpu.memory_space<vmem>>, vector<128x128xbf16>
    %cst_14 = arith.constant dense<0.000000e+00> : vector<16x128xf32>
    %18 = tpu.matmul %16, %17, %cst_14 {dimension_numbers = #tpu.dot_dimension_numbers<[1], [0], [0], [1], [0, 0, 1, 1], [], []>} : vector<16x128xbf16>, vector<128x128xbf16>, vector<16x128xf32> -> vector<16x128xf32>
    %c0_15 = arith.constant 0 : index
    %c0_16 = arith.constant 0 : index
    %19 = vector.load %arg7[%c0_15, %c0_16] : memref<1x128xf32, #tpu.memory_space<vmem>>, vector<1x128xf32>
    %20 = vector.broadcast %19 : vector<1x128xf32> to vector<16x128xf32>
    %21 = arith.addf %18, %20 : vector<16x128xf32>
    %cst_17 = arith.constant dense<0xFF800000> : vector<16xf32>
    %22 = vector.multi_reduction <maximumf>, %21, %cst_17 [1] : vector<16x128xf32> to vector<16xf32>
    %23 = vector.shape_cast %22 : vector<16xf32> to vector<16x1xf32>
    %24 = vector.broadcast %23 : vector<16x1xf32> to vector<16x128xf32>
    %25 = arith.subf %21, %24 : vector<16x128xf32>
    %26 = math.exp %25 : vector<16x128xf32>
    %cst_18 = arith.constant dense<0.000000e+00> : vector<16xf32>
    %27 = vector.multi_reduction <add>, %26, %cst_18 [1] : vector<16x128xf32> to vector<16xf32>
    %28 = vector.shape_cast %27 : vector<16xf32> to vector<16x1xf32>
    %29 = tpu.reciprocal %28 {approx = true} : vector<16x1xf32> -> vector<16x1xf32>
    %30 = vector.broadcast %29 : vector<16x1xf32> to vector<16x128xf32>
    %31 = arith.mulf %26, %30 : vector<16x128xf32>
    %c0_19 = arith.constant 0 : index
    %c0_20 = arith.constant 0 : index
    %32 = vector.load %arg10[%c0_19, %c0_20] : memref<16x128xf32, #tpu.memory_space<vmem>>, vector<16x128xf32>
    tpu.vector_store %arg10[%c0_19, %c0_20], %31 {strides = array<i32>} : memref<16x128xf32, #tpu.memory_space<vmem>>, vector<16x128xf32>,
    %c0_21 = arith.constant 0 : index
    %c0_22 = arith.constant 0 : index
    %33 = vector.load %arg8[%c0_21, %c0_22] : memref<128x128xbf16, #tpu.memory_space<vmem>>, vector<128x128xbf16>
    %cst_23 = arith.constant dense<0.000000e+00> : vector<16x128xf32>
    %34 = tpu.matmul %16, %33, %cst_23 {dimension_numbers = #tpu.dot_dimension_numbers<[1], [0], [0], [1], [0, 0, 1, 1], [], []>} : vector<16x128xbf16>, vector<128x128xbf16>, vector<16x128xf32> -> vector<16x128xf32>
    %c0_24 = arith.constant 0 : index
    %c0_25 = arith.constant 0 : index
    %35 = vector.load %arg9[%c0_24, %c0_25] : memref<1x128xf32, #tpu.memory_space<vmem>>, vector<1x128xf32>
    %36 = vector.broadcast %35 : vector<1x128xf32> to vector<16x128xf32>
    %37 = arith.addf %34, %36 : vector<16x128xf32>
    %c0_26 = arith.constant 0 : index
    %c0_27 = arith.constant 0 : index
    %38 = vector.load %arg11[%c0_26, %c0_27] : memref<16x128xf32, #tpu.memory_space<vmem>>, vector<16x128xf32>
    tpu.vector_store %arg11[%c0_26, %c0_27], %37 {strides = array<i32>} : memref<16x128xf32, #tpu.memory_space<vmem>>, vector<16x128xf32>,
    return
  }
  func.func @transform_0(%arg0: i32) -> (i32, i32) {
    %c0_i32 = arith.constant 0 : i32
    %c0_i32_0 = arith.constant 0 : i32
    return %arg0, %c0_i32 : i32, i32
  }
  func.func @transform_1(%arg0: i32) -> (i32, i32) {
    %c0_i32 = arith.constant 0 : i32
    %c0_i32_0 = arith.constant 0 : i32
    %c0_i32_1 = arith.constant 0 : i32
    return %c0_i32, %c0_i32_0 : i32, i32
  }
  func.func @transform_2(%arg0: i32) -> (i32, i32) {
    %c0_i32 = arith.constant 0 : i32
    %c0_i32_0 = arith.constant 0 : i32
    %c0_i32_1 = arith.constant 0 : i32
    return %c0_i32, %c0_i32_0 : i32, i32
  }
  func.func @transform_3(%arg0: i32) -> (i32, i32) {
    %c0_i32 = arith.constant 0 : i32
    %c0_i32_0 = arith.constant 0 : i32
    %c0_i32_1 = arith.constant 0 : i32
    return %c0_i32, %c0_i32_0 : i32, i32
  }
  func.func @transform_4(%arg0: i32) -> (i32, i32) {
    %c0_i32 = arith.constant 0 : i32
    %c0_i32_0 = arith.constant 0 : i32
    %c0_i32_1 = arith.constant 0 : i32
    return %c0_i32, %c0_i32_0 : i32, i32
  }
  func.func @transform_5(%arg0: i32) -> (i32, i32) {
    %c0_i32 = arith.constant 0 : i32
    %c0_i32_0 = arith.constant 0 : i32
    %c0_i32_1 = arith.constant 0 : i32
    return %c0_i32, %c0_i32_0 : i32, i32
  }
  func.func @transform_6(%arg0: i32) -> (i32, i32) {
    %c0_i32 = arith.constant 0 : i32
    %c0_i32_0 = arith.constant 0 : i32
    %c0_i32_1 = arith.constant 0 : i32
    return %c0_i32, %c0_i32_0 : i32, i32
  }
  func.func @transform_7(%arg0: i32) -> (i32, i32) {
    %c0_i32 = arith.constant 0 : i32
    %c0_i32_0 = arith.constant 0 : i32
    %c0_i32_1 = arith.constant 0 : i32
    return %c0_i32, %c0_i32_0 : i32, i32
  }
  func.func @transform_8(%arg0: i32) -> (i32, i32) {
    %c0_i32 = arith.constant 0 : i32
    %c0_i32_0 = arith.constant 0 : i32
    %c0_i32_1 = arith.constant 0 : i32
    return %c0_i32, %c0_i32_0 : i32, i32
  }
  func.func @transform_9(%arg0: i32) -> (i32, i32) {
    %c0_i32 = arith.constant 0 : i32
    %c0_i32_0 = arith.constant 0 : i32
    return %arg0, %c0_i32 : i32, i32
  }
  func.func @transform_10(%arg0: i32) -> (i32, i32) {
    %c0_i32 = arith.constant 0 : i32
    %c0_i32_0 = arith.constant 0 : i32
    return %arg0, %c0_i32 : i32, i32
  }
}

</mosaic_0001>

<llo_original>
// kernel: _forward_impl.4
$region0: #{_forward_impl.4}
  #allocation0 [shape = 'u32[]', space=smem, size = 0x4, offset = 0x4, fixed_abs, tag = 'smem constant byte address 0x4 - core index']
  #allocation1 [shape = 'u32[144,128]{1,0:T(1,128)}', space=vmem, size = 0x12000, scoped, tag = 'internal scratch']
  #allocation2 [shape = 's32[1]{0}', space=sflag, size = 0x4, scoped, tag = 'scoped memory for _forward_impl.4']
  #allocation3 [shape = 'u8[512]{0}', space=smem, size = 0x200, scoped, tag = 'prefetched SMEM operand 0']
  %s0 = inlined_call_operand.vmem [shape: s32[16], index: 0, kind: input, shape index: {}]
  %s1 = inlined_call_operand.vmem [shape: bf16[16,49,16], index: 1, kind: input, shape index: {}]
  %s2 = inlined_call_operand.vmem [shape: bf16[2,16,128], index: 2, kind: input, shape index: {}]
  %s3 = inlined_call_operand.vmem [shape: bf16[16,49,128], index: 3, kind: output, shape index: {}]
  %s4 = sld [smem:[#allocation0]]
  $region41: #{_forward_impl.4} parent=0
    _
  %s6 = ssub.s32 1, %s4
  %s7 = scalar_select 0, %s6, %s4
  %s8 = sshll.u32 %s0, 4
  %s9 = int_to_ptr.vmem [resolvable:$true] %s8
  %11 = dma.vmem_to_smem %s9, 16, [#allocation3], [#allocation2]
  %12 = dma.done [#allocation2], 16
  %13 = sfence
  loop: start=0, step=1, limit=18
  $region2: #{_forward_impl.4} parent=0 // loop_pre_header
    _
  $region3: #{_forward_impl.4} parent=0 // loop_header
    %s15 = sphi 0, %s19
    %p16 = scmp.ge.s32.totalorder %s15, 18
    %s25 = sphi 0, %s27
    %s28 = sphi 0, %s25
    %s29 = sphi 0, %s28
    %s45 = sphi 0, %s29
    %s53 = sphi 0, %s55
    %s56 = sphi 0, %s53
    %s57 = sphi 0, %s56
    %s73 = sphi 0, %s57
    %s79 = sphi 0, %s81
    %s82 = sphi 0, %s79
    %s83 = sphi 0, %s82
    %s99 = sphi 0, %s83
  $region4: #{_forward_impl.4} parent=0 // loop_header_branch
    %18 = sbr.rel (%p16) target = $region8
  $region5: #{_forward_impl.4} parent=0 // loop_body
    %s20 = ssub.s32 %s15, 1
    %s21 = ssub.s32 %s15, 2
    %s22 = sadd.s32 %s15, 1
    %s23 = ssub.s32 %s15, %s22
    %p24 = scmp.eq.s32.totalorder %s23, 0
    %s26 = sadd.s32 %s25, 1
    %s27 = scalar_select %p24, %s25, %s26
    %p30 = pneg %p24
    %p31 = scmp.eq.s32.totalorder %s15, 15
    %p32 = por %p30, %p31
    %p33 = scmp.ne.s32.totalorder %s25, %s28
    %p34 = scmp.eq.s32.totalorder %s15, 0
    %p35 = por %p33, %p34
    %p36 = scmp.ne.s32.totalorder %s25, %s28
    %p37 = scmp.eq.s32.totalorder %s20, 15
    %p38 = por %p36, %p37
    %p39 = scmp.ne.s32.totalorder %s28, %s29
    %p40 = scmp.eq.s32.totalorder %s20, 0
    %p41 = por %p39, %p40
    %p42 = scmp.ne.s32.totalorder %s28, %s29
    %p43 = scmp.eq.s32.totalorder %s21, 15
    %p44 = por %p42, %p43
    %p46 = scmp.ne.s32.totalorder %s29, %s45
    %p47 = scmp.eq.s32.totalorder %s21, 0
    %p48 = por %p46, %p47
    %s49 = sld [smem:[#allocation3 + %s15]]
    %s50 = sld [smem:[#allocation3 + %s22]]
    %s51 = ssub.s32 %s49, %s50
    %p52 = scmp.eq.s32.totalorder %s51, 0
    %s54 = sadd.s32 %s53, 1
    %s55 = scalar_select %p52, %s53, %s54
    %p58 = pneg %p52
    %p59 = scmp.eq.s32.totalorder %s15, 15
    %p60 = por %p58, %p59
    %p61 = scmp.ne.s32.totalorder %s53, %s56
    %p62 = scmp.eq.s32.totalorder %s15, 0
    %p63 = por %p61, %p62
    %p64 = scmp.ne.s32.totalorder %s53, %s56
    %p65 = scmp.eq.s32.totalorder %s20, 15
    %p66 = por %p64, %p65
    %p67 = scmp.ne.s32.totalorder %s56, %s57
    %p68 = scmp.eq.s32.totalorder %s20, 0
    %p69 = por %p67, %p68
    %p70 = scmp.ne.s32.totalorder %s56, %s57
    %p71 = scmp.eq.s32.totalorder %s21, 15
    %p72 = por %p70, %p71
    %p74 = scmp.ne.s32.totalorder %s57, %s73
    %p75 = scmp.eq.s32.totalorder %s21, 0
    %p76 = por %p74, %p75
    %s77 = ssub.s32 %s15, %s22
    %p78 = scmp.eq.s32.totalorder %s77, 0
    %s80 = sadd.s32 %s79, 1
    %s81 = scalar_select %p78, %s79, %s80
    %p84 = pneg %p78
    %p85 = scmp.eq.s32.totalorder %s15, 15
    %p86 = por %p84, %p85
    %p87 = scmp.ne.s32.totalorder %s79, %s82
    %p88 = scmp.eq.s32.totalorder %s15, 0
    %p89 = por %p87, %p88
    %p90 = scmp.ne.s32.totalorder %s79, %s82
    %p91 = scmp.eq.s32.totalorder %s20, 15
    %p92 = por %p90, %p91
    %p93 = scmp.ne.s32.totalorder %s82, %s83
    %p94 = scmp.eq.s32.totalorder %s20, 0
    %p95 = por %p93, %p94
    %p96 = scmp.ne.s32.totalorder %s82, %s83
    %p97 = scmp.eq.s32.totalorder %s21, 15
    %p98 = por %p96, %p97
    %p100 = scmp.ne.s32.totalorder %s83, %s99
    %p101 = scmp.eq.s32.totalorder %s21, 0
    %p102 = por %p100, %p101
    %p103 = scmp.le.s32.totalorder 1, %s15
    %p104 = scmp.lt.s32.totalorder %s15, 17
    %p105 = pnand %p103, %p104
    %p106 = pneg %p105
    // Predicated region
    $region9: #{_forward_impl.4} parent=5 // pred_check
      _
    $region10: #{_forward_impl.4} parent=5 // pred_check_branch
      %108 = sbr.rel (%p105) target = $region12
    $region11: #{_forward_impl.4} parent=5 // pred_region
      %s109 = ssub.s32 %s15, 1
    $region12: #{_forward_impl.4} parent=5 // pred_fallthru
      _
    %p110 = scmp.lt.s32.totalorder %s15, 16
    // Predicated region
    $region13: #{_forward_impl.4} parent=5 // pred_check
      %p111 = pneg %p110
    $region14: #{_forward_impl.4} parent=5 // pred_check_branch
      %113 = sbr.rel (%p111) target = $region16
    $region15: #{_forward_impl.4} parent=5 // pred_region
      // Predicated region
      $region17: #{_forward_impl.4} parent=15 // pred_check
        %p114 = pneg %p35
      $region18: #{_forward_impl.4} parent=15 // pred_check_branch
        %116 = sbr.rel (%p114) target = $region20
      $region19: #{_forward_impl.4} parent=15 // pred_region
        %p117 = scmp.lt.s32.totalorder %s15, 15
        %s118 = scalar_select %p117, %s15, 15
        %s119 = smul.addr %s118, 7
        %s120 = smul.addr %s119, 4
        %s121 = scalar_lea.vmem %s1, %s120
      $region20: #{_forward_impl.4} parent=15 // pred_fallthru
        _
      // Predicated region
      $region21: #{_forward_impl.4} parent=15 // pred_check
        %p122 = pneg %p63
      $region22: #{_forward_impl.4} parent=15 // pred_check_branch
        %124 = sbr.rel (%p122) target = $region24
      $region23: #{_forward_impl.4} parent=15 // pred_region
        %s125 = sld [smem:[#allocation3 + %s15]]
        %p126 = scmp.lt.s32.totalorder %s125, 1
        %s127 = scalar_select %p126, %s125, 1
        %s128 = smul.addr %s127, 2
        %s129 = smul.addr %s128, 4
        %s130 = scalar_lea.vmem %s2, %s129
        %s131 = sld [smem:[#allocation3 + %s15]]
      $region24: #{_forward_impl.4} parent=15 // pred_fallthru
        _
    $region16: #{_forward_impl.4} parent=5 // pred_fallthru
      _
    %p132 = scmp.le.s32.totalorder 1, %s15
    %p133 = scmp.lt.s32.totalorder %s15, 17
    %p134 = pnand %p132, %p133
    %p135 = pneg %p134
    // Predicated region
    $region25: #{_forward_impl.4} parent=5 // pred_check
      _
    $region26: #{_forward_impl.4} parent=5 // pred_check_branch
      %137 = sbr.rel (%p134) target = $region28
    $region27: #{_forward_impl.4} parent=5 // pred_region
      %s138 = ssub.s32 %s15, 1
      %p139 = scmp.lt.s32.totalorder %s20, 15
      %s140 = scalar_select %p139, %s20, 15
      %s141 = smul.addr %s140, 7
      %s142 = smul.addr %s141, 4
      %s143 = scalar_lea.vmem %s1, %s142
      %p144 = pneg %p41
      %p145 = pneg %p38
      %s146 = sld [smem:[#allocation3 + %s20]]
      %p147 = scmp.lt.s32.totalorder %s146, 1
      %s148 = scalar_select %p147, %s146, 1
      %s149 = smul.addr %s148, 2
      %s150 = smul.addr %s149, 4
      %s151 = scalar_lea.vmem %s2, %s150
      %p152 = pneg %p69
      %p153 = pneg %p66
      %p154 = pneg %p95
      %p155 = pneg %p92
      %p156 = scmp.lt.s32.totalorder %s20, 15
      %s157 = scalar_select %p156, %s20, 15
      %s158 = smul.addr %s157, 7
      %s159 = smul.addr %s158, 4
      %s160 = scalar_lea.vmem %s3, %s159
      %p161 = scmp.lt.s32.totalorder %s20, 15
      %s162 = scalar_select %p161, %s20, 15
      %s163 = smul.addr %s162, 7
      %s164 = smul.addr %s163, 4
      %s165 = scalar_lea.vmem %s1, %s164
      %s166 = sld [smem:[#allocation3 + %s20]]
      %p167 = scmp.lt.s32.totalorder %s166, 1
      %s168 = scalar_select %p167, %s166, 1
      %s169 = smul.addr %s168, 2
      %s170 = smul.addr %s169, 4
      %s171 = scalar_lea.vmem %s2, %s170
      %s172 = sld [smem:[#allocation3 + %s20]]
      %p173 = scmp.lt.s32.totalorder %s20, 15
      %s174 = scalar_select %p173, %s20, 15
      %s175 = smul.addr %s174, 7
      %s176 = smul.addr %s175, 4
      %s177 = scalar_lea.vmem %s3, %s176
      %v179 = vld [vmem:[%s165] sm:$0xf]
      %v180 = vld [vmem:[%s165 + $0x4] sm:$0xf]
      %v181 = vld [vmem:[%s165 + $0x8] sm:$0xf]
      %v182 = vld [vmem:[%s165 + $0xc] sm:$0xf]
      %v183 = vld [vmem:[%s165 + $0x10] sm:$0xf]
      %v184 = vld [vmem:[%s165 + $0x14] sm:$0xf]
      %v185 = vld [vmem:[%s165 + $0x18] sm:$0x1]
      %v186 = vld [vmem:[%s171] sm:$0xf]
      %v187 = vld [vmem:[%s171 + $0x4] sm:$0xf]
      %v195 = vunpack.c.l.b16 %v179
      %v196 = vunpack.c.l.b16 %v180
      %v197 = vunpack.c.l.b16 %v181
      %v198 = vunpack.c.l.b16 %v182
      %v199 = vunpack.c.l.b16 %v183
      %v200 = vunpack.c.l.b16 %v184
      %v201 = vunpack.c.l.b16 %v185
      %v202 = vpack.c.b16 %v196, %v195
      %v203 = vpack.c.b16 %v198, %v197
      %v204 = vpack.c.b16 %v200, %v199
      %v205 = vpack.c.b16 %v201, %v201
      %v208 = vunpack.c.l.b16 %v186
      %v209 = vunpack.c.l.b16 %v187
      %v210 = vpack.c.b16 %v209, %v208
      %vm212 = vcmask 130048
      %v214 = vsel %vm212, %v202, 0
      %v217 = vsel %vm212, %v203, 0
      %v220 = vsel %vm212, %v204, 0
      %v223 = vsel %vm212, %v205, 0
      %225 = vmatprep.subr.bf16.mxu0 0
      %226 = vmatpush1.bf16.msra.mxu0 %v210
      %227 = vmatprep.subr.bf16.mxu0 0
      %228 = vmatpush1.bf16.msra.mxu0 0
      %229 = vmatprep.subr.bf16.mxu0 0
      %230 = vmatpush1.bf16.msra.mxu0 0
      %231 = vmatprep.subr.bf16.mxu0 0
      %232 = vmatpush1.bf16.msra.mxu0 0
      %233 = vmatprep.subr.bf16.mxu0 0
      %234 = vmatpush1.bf16.msra.mxu0 0
      %235 = vmatprep.subr.bf16.mxu0 0
      %236 = vmatpush1.bf16.msra.mxu0 0
      %237 = vmatprep.subr.bf16.mxu0 0
      %238 = vmatpush1.bf16.msra.mxu0 0
      %239 = vmatprep.subr.bf16.mxu0 0
      %240 = vmatpush1.bf16.msra.mxu0 0
      %241 = vmatprep.subr.bf16.mxu0 0
      %242 = vmatpush1.bf16.msra.mxu0 0
      %243 = vmatprep.subr.bf16.mxu0 0
      %244 = vmatpush1.bf16.msra.mxu0 0
      %245 = vmatprep.subr.bf16.mxu0 0
      %246 = vmatpush1.bf16.msra.mxu0 0
      %247 = vmatprep.subr.bf16.mxu0 0
      %248 = vmatpush1.bf16.msra.mxu0 0
      %249 = vmatprep.subr.bf16.mxu0 0
      %250 = vmatpush1.bf16.msra.mxu0 0
      %251 = vmatprep.subr.bf16.mxu0 0
      %252 = vmatpush1.bf16.msra.mxu0 0
      %253 = vmatprep.subr.bf16.mxu0 0
      %254 = vmatpush1.bf16.msra.mxu0 0
      %255 = vmatprep.subr.bf16.mxu0 0
      %256 = vmatpush1.bf16.msra.mxu0 0
      %257 = vmatprep.mubr.bf16.mxu0 0
      %258 = vmatmul.mubr.bf16.gmra.mrb[0].mxu0 %v214
      %v259 = vpop.f32.mrb[0].mxu0
      %v260 = vadd.f32 0.0, %v259
      %v261 = vpop.f32.mrb[0].mxu0
      %v262 = vpop.f32.mrb[0].mxu0
      %v263 = vadd.f32 0.0, %v262
      %v264 = vpop.f32.mrb[0].mxu0
      %265 = vmatprep.mubr.bf16.mxu0 0
      %266 = vmatmul.mubr.bf16.gmra.mrb[0].mxu0 %v217
      %v267 = vpop.f32.mrb[0].mxu0
      %v268 = vadd.f32 0.0, %v267
      %v269 = vpop.f32.mrb[0].mxu0
      %v270 = vpop.f32.mrb[0].mxu0
      %v271 = vadd.f32 0.0, %v270
      %v272 = vpop.f32.mrb[0].mxu0
      %273 = vmatprep.mubr.bf16.mxu0 0
      %274 = vmatmul.mubr.bf16.gmra.mrb[0].mxu0 %v220
      %v275 = vpop.f32.mrb[0].mxu0
      %v276 = vadd.f32 0.0, %v275
      %v277 = vpop.f32.mrb[0].mxu0
      %v278 = vpop.f32.mrb[0].mxu0
      %v279 = vadd.f32 0.0, %v278
      %v280 = vpop.f32.mrb[0].mxu0
      %281 = vmatprep.mubr.bf16.mxu0 0
      %282 = vmatmul.mubr.bf16.gmra.mrb[0].mxu0 %v223
      %v283 = vpop.f32.mrb[0].mxu0
      %v284 = vadd.f32 0.0, %v283
      %v285 = vpop.f32.mrb[0].mxu0
      %v286 = vpop.f32.mrb[0].mxu0
      %v287 = vpop.f32.mrb[0].mxu0
      %288 = vdwg.mxu0
      %v289 = vpack.c.bf16 %v263, %v260
      %v290 = vpack.c.bf16 %v271, %v268
      %v291 = vpack.c.bf16 %v279, %v276
      %v292 = vpack.c.bf16 %v284, %v284
      %v297 = vunpack.c.l.b16 %v289
      %v298 = vunpack.c.h.b16 %v289
      %v299 = vunpack.c.l.b16 %v290
      %v300 = vunpack.c.h.b16 %v290
      %v301 = vunpack.c.l.b16 %v291
      %v302 = vunpack.c.h.b16 %v291
      %v303 = vunpack.c.l.b16 %v292
      %v304 = vpack.c.b16 %v297, %v297
      %v305 = vpack.c.b16 %v298, %v298
      %v306 = vpack.c.b16 %v299, %v299
      %v307 = vpack.c.b16 %v300, %v300
      %v308 = vpack.c.b16 %v301, %v301
      %v309 = vpack.c.b16 %v302, %v302
      %v310 = vpack.c.b16 %v303, %v303
      %318 = vst [vmem:[%s177] sm:$0xf] %v304
      %319 = vst [vmem:[%s177 + $0x4] sm:$0xf] %v305
      %320 = vst [vmem:[%s177 + $0x8] sm:$0xf] %v306
      %321 = vst [vmem:[%s177 + $0xc] sm:$0xf] %v307
      %322 = vst [vmem:[%s177 + $0x10] sm:$0xf] %v308
      %323 = vst [vmem:[%s177 + $0x14] sm:$0xf] %v309
      %vm324 = vcmask 1040384
      %vm325 = vsmask.f32 256
      %vm326 = vmand %vm324, %vm325
      %v327 = vld [vmem:[%s177 + $0x18] sm:$0x1]
      %v328 = vsel %vm326, %v310, %v327
      %329 = vst [vmem:[%s177 + $0x18] sm:$0x1] %v328
      %p330 = scmp.lt.s32.totalorder %s20, 15
      %s331 = scalar_select %p330, %s20, 15
      %s332 = smul.addr %s331, 7
      %s333 = smul.addr %s332, 4
      %s334 = scalar_lea.vmem %s3, %s333
      // Predicated region
      $region29: #{_forward_impl.4} parent=27 // pred_check
        %p335 = pneg %p92
      $region30: #{_forward_impl.4} parent=27 // pred_check_branch
        %337 = sbr.rel (%p335) target = $region32
      $region31: #{_forward_impl.4} parent=27 // pred_region
        _
      $region32: #{_forward_impl.4} parent=27 // pred_fallthru
        _
    $region28: #{_forward_impl.4} parent=5 // pred_fallthru
      _
    %p338 = scmp.le.s32.totalorder 2, %s15
    // Predicated region
    $region33: #{_forward_impl.4} parent=5 // pred_check
      %p339 = pneg %p338
    $region34: #{_forward_impl.4} parent=5 // pred_check_branch
      %341 = sbr.rel (%p339) target = $region36
    $region35: #{_forward_impl.4} parent=5 // pred_region
      %s342 = ssub.s32 %s15, 2
      // Predicated region
      $region37: #{_forward_impl.4} parent=35 // pred_check
        %p343 = pneg %p98
      $region38: #{_forward_impl.4} parent=35 // pred_check_branch
        %345 = sbr.rel (%p343) target = $region40
      $region39: #{_forward_impl.4} parent=35 // pred_region
        %p346 = scmp.lt.s32.totalorder %s21, 15
        %s347 = scalar_select %p346, %s21, 15
        %s348 = smul.addr %s347, 7
        %s349 = smul.addr %s348, 4
        %s350 = scalar_lea.vmem %s3, %s349
      $region40: #{_forward_impl.4} parent=35 // pred_fallthru
        _
    $region36: #{_forward_impl.4} parent=5 // pred_fallthru
      _
  $region6: #{_forward_impl.4} parent=0 // loop_footer
    %s19 = sadd.s32 1, %s15
  $region7: #{_forward_impl.4} parent=0 // loop_footer_branch
    %14 = sbr.rel target = $region3
  $region8: #{_forward_impl.4} parent=0 // loop_exit
    _

// kernel: _forward_impl.3
$region0: #{_forward_impl.3}
  #allocation0 [shape = 'u32[]', space=smem, size = 0x4, offset = 0x4, fixed_abs, tag = 'smem constant byte address 0x4 - core index']
  #allocation1 [shape = 'u32[144,128]{1,0:T(1,128)}', space=vmem, size = 0x12000, scoped, tag = 'internal scratch']
  %s0 = inlined_call_operand.vmem [shape: bf16[2,4,1024,27], index: 0, kind: input, shape index: {}]
  %s1 = inlined_call_operand.vmem [shape: bf16[27,128], index: 1, kind: input, shape index: {}]
  %s2 = inlined_call_operand.vmem [shape: f32[1,128], index: 2, kind: input, shape index: {}]
  %s3 = inlined_call_operand.vmem [shape: bf16[2,4,4,128], index: 3, kind: output, shape index: {}]
  %s4 = sld [smem:[#allocation0]]
  $region45: #{_forward_impl.3} parent=0
    _
  %s6 = ssub.s32 1, %s4
  %s7 = scalar_select 0, %s6, %s4
  loop: start=0, step=1, limit=10
  $region2: #{_forward_impl.3} parent=0 // loop_pre_header
    _
  $region3: #{_forward_impl.3} parent=0 // loop_header
    %s9 = sphi 0, %s13
    %p10 = scmp.ge.s32.totalorder %s9, 10
    %s16 = sphi 0, %s28
    %s17 = sphi 0, %s24
    %s18 = sphi 0, %s16
    %s19 = sphi 0, %s17
    %s20 = sphi 0, %s18
    %s21 = sphi 0, %s19
    %s33 = sphi 0, %s35
    %s36 = sphi 0, %s33
    %s37 = sphi 0, %s36
    %s53 = sphi 0, %s37
    %s57 = sphi 0, %s57
    %s59 = sphi 0, %s57
    %s60 = sphi 0, %s59
    %s74 = sphi 0, %s60
    %s78 = sphi 0, %s78
    %s80 = sphi 0, %s78
    %s81 = sphi 0, %s80
    %s95 = sphi 0, %s81
    %s103 = sphi 0, %s105
    %s106 = sphi 0, %s103
    %s107 = sphi 0, %s106
    %s123 = sphi 0, %s107
  $region4: #{_forward_impl.3} parent=0 // loop_header_branch
    %12 = sbr.rel (%p10) target = $region8
  $region5: #{_forward_impl.3} parent=0 // loop_body
    %s14 = ssub.s32 %s9, 1
    %s15 = ssub.s32 %s9, 2
    %s22 = sadd.s32 1, %s17
    %p23 = scmp.ge.s32.totalorder %s22, 4
    %s24 = scalar_select %p23, 0, %s22
    %s25 = sadd.s32 1, %s16
    %s26 = scalar_select %p23, %s25, %s16
    %p27 = scmp.ge.s32.totalorder %s26, 2
    %s28 = scalar_select %p27, 0, %s26
    %s29 = ssub.s32 %s16, %s28
    %s30 = ssub.s32 %s17, %s24
    %s31 = sor.u32 %s29, %s30
    %p32 = scmp.eq.s32.totalorder %s31, 0
    %s34 = sadd.s32 %s33, 1
    %s35 = scalar_select %p32, %s33, %s34
    %p38 = pneg %p32
    %p39 = scmp.eq.s32.totalorder %s9, 7
    %p40 = por %p38, %p39
    %p41 = scmp.ne.s32.totalorder %s33, %s36
    %p42 = scmp.eq.s32.totalorder %s9, 0
    %p43 = por %p41, %p42
    %p44 = scmp.ne.s32.totalorder %s33, %s36
    %p45 = scmp.eq.s32.totalorder %s14, 7
    %p46 = por %p44, %p45
    %p47 = scmp.ne.s32.totalorder %s36, %s37
    %p48 = scmp.eq.s32.totalorder %s14, 0
    %p49 = por %p47, %p48
    %p50 = scmp.ne.s32.totalorder %s36, %s37
    %p51 = scmp.eq.s32.totalorder %s15, 7
    %p52 = por %p50, %p51
    %p54 = scmp.ne.s32.totalorder %s37, %s53
    %p55 = scmp.eq.s32.totalorder %s15, 0
    %p56 = por %p54, %p55
    %s58 = sadd.s32 %s57, 1
    %p61 = scmp.eq.s32.totalorder %s9, 7
    %p62 = scmp.ne.s32.totalorder %s57, %s59
    %p63 = scmp.eq.s32.totalorder %s9, 0
    %p64 = por %p62, %p63
    %p65 = scmp.ne.s32.totalorder %s57, %s59
    %p66 = scmp.eq.s32.totalorder %s14, 7
    %p67 = por %p65, %p66
    %p68 = scmp.ne.s32.totalorder %s59, %s60
    %p69 = scmp.eq.s32.totalorder %s14, 0
    %p70 = por %p68, %p69
    %p71 = scmp.ne.s32.totalorder %s59, %s60
    %p72 = scmp.eq.s32.totalorder %s15, 7
    %p73 = por %p71, %p72
    %p75 = scmp.ne.s32.totalorder %s60, %s74
    %p76 = scmp.eq.s32.totalorder %s15, 0
    %p77 = por %p75, %p76
    %s79 = sadd.s32 %s78, 1
    %p82 = scmp.eq.s32.totalorder %s9, 7
    %p83 = scmp.ne.s32.totalorder %s78, %s80
    %p84 = scmp.eq.s32.totalorder %s9, 0
    %p85 = por %p83, %p84
    %p86 = scmp.ne.s32.totalorder %s78, %s80
    %p87 = scmp.eq.s32.totalorder %s14, 7
    %p88 = por %p86, %p87
    %p89 = scmp.ne.s32.totalorder %s80, %s81
    %p90 = scmp.eq.s32.totalorder %s14, 0
    %p91 = por %p89, %p90
    %p92 = scmp.ne.s32.totalorder %s80, %s81
    %p93 = scmp.eq.s32.totalorder %s15, 7
    %p94 = por %p92, %p93
    %p96 = scmp.ne.s32.totalorder %s81, %s95
    %p97 = scmp.eq.s32.totalorder %s15, 0
    %p98 = por %p96, %p97
    %s99 = ssub.s32 %s16, %s28
    %s100 = ssub.s32 %s17, %s24
    %s101 = sor.u32 %s99, %s100
    %p102 = scmp.eq.s32.totalorder %s101, 0
    %s104 = sadd.s32 %s103, 1
    %s105 = scalar_select %p102, %s103, %s104
    %p108 = pneg %p102
    %p109 = scmp.eq.s32.totalorder %s9, 7
    %p110 = por %p108, %p109
    %p111 = scmp.ne.s32.totalorder %s103, %s106
    %p112 = scmp.eq.s32.totalorder %s9, 0
    %p113 = por %p111, %p112
    %p114 = scmp.ne.s32.totalorder %s103, %s106
    %p115 = scmp.eq.s32.totalorder %s14, 7
    %p116 = por %p114, %p115
    %p117 = scmp.ne.s32.totalorder %s106, %s107
    %p118 = scmp.eq.s32.totalorder %s14, 0
    %p119 = por %p117, %p118
    %p120 = scmp.ne.s32.totalorder %s106, %s107
    %p121 = scmp.eq.s32.totalorder %s15, 7
    %p122 = por %p120, %p121
    %p124 = scmp.ne.s32.totalorder %s107, %s123
    %p125 = scmp.eq.s32.totalorder %s15, 0
    %p126 = por %p124, %p125
    %p127 = scmp.le.s32.totalorder 1, %s9
    %p128 = scmp.lt.s32.totalorder %s9, 9
    %p129 = pnand %p127, %p128
    %p130 = pneg %p129
    // Predicated region
    $region9: #{_forward_impl.3} parent=5 // pred_check
      _
    $region10: #{_forward_impl.3} parent=5 // pred_check_branch
      %132 = sbr.rel (%p129) target = $region12
    $region11: #{_forward_impl.3} parent=5 // pred_region
      %s133 = ssub.s32 %s9, 1
      // Predicated region
      $region13: #{_forward_impl.3} parent=11 // pred_check
        %p134 = pneg %p70
      $region14: #{_forward_impl.3} parent=11 // pred_check_branch
        %136 = sbr.rel (%p134) target = $region16
      $region15: #{_forward_impl.3} parent=11 // pred_region
        _
      $region16: #{_forward_impl.3} parent=11 // pred_fallthru
        _
      // Predicated region
      $region17: #{_forward_impl.3} parent=11 // pred_check
        %p137 = pneg %p91
      $region18: #{_forward_impl.3} parent=11 // pred_check_branch
        %139 = sbr.rel (%p137) target = $region20
      $region19: #{_forward_impl.3} parent=11 // pred_region
        _
      $region20: #{_forward_impl.3} parent=11 // pred_fallthru
        _
    $region12: #{_forward_impl.3} parent=5 // pred_fallthru
      _
    %p140 = scmp.lt.s32.totalorder %s9, 8
    // Predicated region
    $region21: #{_forward_impl.3} parent=5 // pred_check
      %p141 = pneg %p140
    $region22: #{_forward_impl.3} parent=5 // pred_check_branch
      %143 = sbr.rel (%p141) target = $region24
    $region23: #{_forward_impl.3} parent=5 // pred_region
      // Predicated region
      $region25: #{_forward_impl.3} parent=23 // pred_check
        %p144 = pneg %p43
      $region26: #{_forward_impl.3} parent=23 // pred_check_branch
        %146 = sbr.rel (%p144) target = $region28
      $region27: #{_forward_impl.3} parent=23 // pred_region
        %p147 = scmp.lt.s32.totalorder %s16, 1
        %s148 = scalar_select %p147, %s16, 1
        %p149 = scmp.lt.s32.totalorder %s17, 3
        %s150 = scalar_select %p149, %s17, 3
        %s151 = smul.addr %s150, 128
        %s152 = smul.addr %s148, 512
        %s153 = sadd.s32 %s151, %s152
        %s154 = smul.addr %s153, 4
        %s155 = scalar_lea.vmem %s0, %s154
      $region28: #{_forward_impl.3} parent=23 // pred_fallthru
        _
    $region24: #{_forward_impl.3} parent=5 // pred_fallthru
      _
    %p156 = scmp.le.s32.totalorder 1, %s9
    %p157 = scmp.lt.s32.totalorder %s9, 9
    %p158 = pnand %p156, %p157
    %p159 = pneg %p158
    // Predicated region
    $region29: #{_forward_impl.3} parent=5 // pred_check
      _
    $region30: #{_forward_impl.3} parent=5 // pred_check_branch
      %161 = sbr.rel (%p158) target = $region32
    $region31: #{_forward_impl.3} parent=5 // pred_region
      %s162 = ssub.s32 %s9, 1
      %p163 = scmp.lt.s32.totalorder %s18, 1
      %s164 = scalar_select %p163, %s18, 1
      %p165 = scmp.lt.s32.totalorder %s19, 3
      %s166 = scalar_select %p165, %s19, 3
      %s167 = smul.addr %s166, 128
      %s168 = smul.addr %s164, 512
      %s169 = sadd.s32 %s167, %s168
      %s170 = smul.addr %s169, 4
      %s171 = scalar_lea.vmem %s0, %s170
      %p172 = pneg %p49
      %p173 = pneg %p46
      %p174 = pneg %p70
      %p175 = pneg %p67
      %p176 = pneg %p91
      %p177 = pneg %p88
      %p178 = pneg %p119
      %p179 = pneg %p116
      %p180 = scmp.lt.s32.totalorder %s18, 1
      %s181 = scalar_select %p180, %s18, 1
      %p182 = scmp.lt.s32.totalorder %s19, 3
      %s183 = scalar_select %p182, %s19, 3
      %s184 = smul.addr %s181, 4
      %s185 = sadd.s32 %s183, %s184
      %s186 = smul.addr %s185, 2
      %s187 = scalar_lea.vmem %s3, %s186
      %p188 = scmp.lt.s32.totalorder %s18, 1
      %s189 = scalar_select %p188, %s18, 1
      %p190 = scmp.lt.s32.totalorder %s19, 3
      %s191 = scalar_select %p190, %s19, 3
      %s192 = smul.addr %s191, 128
      %s193 = smul.addr %s189, 512
      %s194 = sadd.s32 %s192, %s193
      %s195 = smul.addr %s194, 4
      %s196 = scalar_lea.vmem %s0, %s195
      %p197 = scmp.lt.s32.totalorder %s18, 1
      %s198 = scalar_select %p197, %s18, 1
      %p199 = scmp.lt.s32.totalorder %s19, 3
      %s200 = scalar_select %p199, %s19, 3
      %s201 = smul.addr %s198, 4
      %s202 = sadd.s32 %s200, %s201
      %s203 = smul.addr %s202, 2
      %s204 = scalar_lea.vmem %s3, %s203
      %v206 = vld [vmem:[%s196] sm:$0xf]
      %v207 = vld [vmem:[%s196 + $0x4] sm:$0xf]
      %v208 = vld [vmem:[%s196 + $0x8] sm:$0xf]
      %v209 = vld [vmem:[%s196 + $0xc] sm:$0xf]
      %v210 = vld [vmem:[%s196 + $0x10] sm:$0xf]
      %v211 = vld [vmem:[%s196 + $0x14] sm:$0xf]
      %v212 = vld [vmem:[%s196 + $0x18] sm:$0xf]
      %v213 = vld [vmem:[%s196 + $0x1c] sm:$0xf]
      %v214 = vld [vmem:[%s196 + $0x20] sm:$0xf]
      %v215 = vld [vmem:[%s196 + $0x24] sm:$0xf]
      %v216 = vld [vmem:[%s196 + $0x28] sm:$0xf]
      %v217 = vld [vmem:[%s196 + $0x2c] sm:$0xf]
      %v218 = vld [vmem:[%s196 + $0x30] sm:$0xf]
      %v219 = vld [vmem:[%s196 + $0x34] sm:$0xf]
      %v220 = vld [vmem:[%s196 + $0x38] sm:$0xf]
      %v221 = vld [vmem:[%s196 + $0x3c] sm:$0xf]
      %v222 = vld [vmem:[%s196 + $0x40] sm:$0xf]
      %v223 = vld [vmem:[%s196 + $0x44] sm:$0xf]
      %v224 = vld [vmem:[%s196 + $0x48] sm:$0xf]
      %v225 = vld [vmem:[%s196 + $0x4c] sm:$0xf]
      %v226 = vld [vmem:[%s196 + $0x50] sm:$0xf]
      %v227 = vld [vmem:[%s196 + $0x54] sm:$0xf]
      %v228 = vld [vmem:[%s196 + $0x58] sm:$0xf]
      %v229 = vld [vmem:[%s196 + $0x5c] sm:$0xf]
      %v230 = vld [vmem:[%s196 + $0x60] sm:$0xf]
      %v231 = vld [vmem:[%s196 + $0x64] sm:$0xf]
      %v232 = vld [vmem:[%s196 + $0x68] sm:$0xf]
      %v233 = vld [vmem:[%s196 + $0x6c] sm:$0xf]
      %v234 = vld [vmem:[%s196 + $0x70] sm:$0xf]
      %v235 = vld [vmem:[%s196 + $0x74] sm:$0xf]
      %v236 = vld [vmem:[%s196 + $0x78] sm:$0xf]
      %v237 = vld [vmem:[%s196 + $0x7c] sm:$0xf]
      %v238 = vld [vmem:[%s196 + $0x80] sm:$0xf]
      %v239 = vld [vmem:[%s196 + $0x84] sm:$0xf]
      %v240 = vld [vmem:[%s196 + $0x88] sm:$0xf]
      %v241 = vld [vmem:[%s196 + $0x8c] sm:$0xf]
      %v242 = vld [vmem:[%s196 + $0x90] sm:$0xf]
      %v243 = vld [vmem:[%s196 + $0x94] sm:$0xf]
      %v244 = vld [vmem:[%s196 + $0x98] sm:$0xf]
      %v245 = vld [vmem:[%s196 + $0x9c] sm:$0xf]
      %v246 = vld [vmem:[%s196 + $0xa0] sm:$0xf]
      %v247 = vld [vmem:[%s196 + $0xa4] sm:$0xf]
      %v248 = vld [vmem:[%s196 + $0xa8] sm:$0xf]
      %v249 = vld [vmem:[%s196 + $0xac] sm:$0xf]
      %v250 = vld [vmem:[%s196 + $0xb0] sm:$0xf]
      %v251 = vld [vmem:[%s196 + $0xb4] sm:$0xf]
      %v252 = vld [vmem:[%s196 + $0xb8] sm:$0xf]
      %v253 = vld [vmem:[%s196 + $0xbc] sm:$0xf]
      %v254 = vld [vmem:[%s196 + $0xc0] sm:$0xf]
      %v255 = vld [vmem:[%s196 + $0xc4] sm:$0xf]
      %v256 = vld [vmem:[%s196 + $0xc8] sm:$0xf]
      %v257 = vld [vmem:[%s196 + $0xcc] sm:$0xf]
      %v258 = vld [vmem:[%s196 + $0xd0] sm:$0xf]
      %v259 = vld [vmem:[%s196 + $0xd4] sm:$0xf]
      %v260 = vld [vmem:[%s196 + $0xd8] sm:$0xf]
      %v261 = vld [vmem:[%s196 + $0xdc] sm:$0xf]
      %v262 = vld [vmem:[%s196 + $0xe0] sm:$0xf]
      %v263 = vld [vmem:[%s196 + $0xe4] sm:$0xf]
      %v264 = vld [vmem:[%s196 + $0xe8] sm:$0xf]
      %v265 = vld [vmem:[%s196 + $0xec] sm:$0xf]
      %v266 = vld [vmem:[%s196 + $0xf0] sm:$0xf]
      %v267 = vld [vmem:[%s196 + $0xf4] sm:$0xf]
      %v268 = vld [vmem:[%s196 + $0xf8] sm:$0xf]
      %v269 = vld [vmem:[%s196 + $0xfc] sm:$0xf]
      %v270 = vld [vmem:[%s196 + $0x100] sm:$0xf]
      %v271 = vld [vmem:[%s196 + $0x104] sm:$0xf]
      %v272 = vld [vmem:[%s196 + $0x108] sm:$0xf]
      %v273 = vld [vmem:[%s196 + $0x10c] sm:$0xf]
      %v274 = vld [vmem:[%s196 + $0x110] sm:$0xf]
      %v275 = vld [vmem:[%s196 + $0x114] sm:$0xf]
      %v276 = vld [vmem:[%s196 + $0x118] sm:$0xf]
      %v277 = vld [vmem:[%s196 + $0x11c] sm:$0xf]
      %v278 = vld [vmem:[%s196 + $0x120] sm:$0xf]
      %v279 = vld [vmem:[%s196 + $0x124] sm:$0xf]
      %v280 = vld [vmem:[%s196 + $0x128] sm:$0xf]
      %v281 = vld [vmem:[%s196 + $0x12c] sm:$0xf]
      %v282 = vld [vmem:[%s196 + $0x130] sm:$0xf]
      %v283 = vld [vmem:[%s196 + $0x134] sm:$0xf]
      %v284 = vld [vmem:[%s196 + $0x138] sm:$0xf]
      %v285 = vld [vmem:[%s196 + $0x13c] sm:$0xf]
      %v286 = vld [vmem:[%s196 + $0x140] sm:$0xf]
      %v287 = vld [vmem:[%s196 + $0x144] sm:$0xf]
      %v288 = vld [vmem:[%s196 + $0x148] sm:$0xf]
      %v289 = vld [vmem:[%s196 + $0x14c] sm:$0xf]
      %v290 = vld [vmem:[%s196 + $0x150] sm:$0xf]
      %v291 = vld [vmem:[%s196 + $0x154] sm:$0xf]
      %v292 = vld [vmem:[%s196 + $0x158] sm:$0xf]
      %v293 = vld [vmem:[%s196 + $0x15c] sm:$0xf]
      %v294 = vld [vmem:[%s196 + $0x160] sm:$0xf]
      %v295 = vld [vmem:[%s196 + $0x164] sm:$0xf]
      %v296 = vld [vmem:[%s196 + $0x168] sm:$0xf]
      %v297 = vld [vmem:[%s196 + $0x16c] sm:$0xf]
      %v298 = vld [vmem:[%s196 + $0x170] sm:$0xf]
      %v299 = vld [vmem:[%s196 + $0x174] sm:$0xf]
      %v300 = vld [vmem:[%s196 + $0x178] sm:$0xf]
      %v301 = vld [vmem:[%s196 + $0x17c] sm:$0xf]
      %v302 = vld [vmem:[%s196 + $0x180] sm:$0xf]
      %v303 = vld [vmem:[%s196 + $0x184] sm:$0xf]
      %v304 = vld [vmem:[%s196 + $0x188] sm:$0xf]
      %v305 = vld [vmem:[%s196 + $0x18c] sm:$0xf]
      %v306 = vld [vmem:[%s196 + $0x190] sm:$0xf]
      %v307 = vld [vmem:[%s196 + $0x194] sm:$0xf]
      %v308 = vld [vmem:[%s196 + $0x198] sm:$0xf]
      %v309 = vld [vmem:[%s196 + $0x19c] sm:$0xf]
      %v310 = vld [vmem:[%s196 + $0x1a0] sm:$0xf]
      %v311 = vld [vmem:[%s196 + $0x1a4] sm:$0xf]
      %v312 = vld [vmem:[%s196 + $0x1a8] sm:$0xf]
      %v313 = vld [vmem:[%s196 + $0x1ac] sm:$0xf]
      %v314 = vld [vmem:[%s196 + $0x1b0] sm:$0xf]
      %v315 = vld [vmem:[%s196 + $0x1b4] sm:$0xf]
      %v316 = vld [vmem:[%s196 + $0x1b8] sm:$0xf]
      %v317 = vld [vmem:[%s196 + $0x1bc] sm:$0xf]
      %v318 = vld [vmem:[%s196 + $0x1c0] sm:$0xf]
      %v319 = vld [vmem:[%s196 + $0x1c4] sm:$0xf]
      %v320 = vld [vmem:[%s196 + $0x1c8] sm:$0xf]
      %v321 = vld [vmem:[%s196 + $0x1cc] sm:$0xf]
      %v322 = vld [vmem:[%s196 + $0x1d0] sm:$0xf]
      %v323 = vld [vmem:[%s196 + $0x1d4] sm:$0xf]
      %v324 = vld [vmem:[%s196 + $0x1d8] sm:$0xf]
      %v325 = vld [vmem:[%s196 + $0x1dc] sm:$0xf]
      %v326 = vld [vmem:[%s196 + $0x1e0] sm:$0xf]
      %v327 = vld [vmem:[%s196 + $0x1e4] sm:$0xf]
      %v328 = vld [vmem:[%s196 + $0x1e8] sm:$0xf]
      %v329 = vld [vmem:[%s196 + $0x1ec] sm:$0xf]
      %v330 = vld [vmem:[%s196 + $0x1f0] sm:$0xf]
      %v331 = vld [vmem:[%s196 + $0x1f4] sm:$0xf]
      %v332 = vld [vmem:[%s196 + $0x1f8] sm:$0xf]
      %v333 = vld [vmem:[%s196 + $0x1fc] sm:$0xf]
      %v334 = vld [vmem:[%s1] sm:$0xf]
      %v335 = vld [vmem:[%s1 + $0x4] sm:$0xf]
      %v336 = vld [vmem:[%s1 + $0x8] sm:$0xf]
      %v337 = vld [vmem:[%s1 + $0xc] sm:$0x3]
      %v338 = vld [vmem:[%s2] sm:$0x1]
      %v340 = vlaneseq
      %v341 = vshrl.u32 %v340, 7
      %v342 = vsub.s32 0, %v341
      %v343 = vrot.slane %v338, %v342
      %v473 = vunpack.c.l.b16 %v206
      %v474 = vunpack.c.l.b16 %v207
      %v475 = vunpack.c.l.b16 %v208
      %v476 = vunpack.c.l.b16 %v209
      %v477 = vunpack.c.l.b16 %v210
      %v478 = vunpack.c.l.b16 %v211
      %v479 = vunpack.c.l.b16 %v212
      %v480 = vunpack.c.l.b16 %v213
      %v481 = vunpack.c.l.b16 %v214
      %v482 = vunpack.c.l.b16 %v215
      %v483 = vunpack.c.l.b16 %v216
      %v484 = vunpack.c.l.b16 %v217
      %v485 = vunpack.c.l.b16 %v218
      %v486 = vunpack.c.l.b16 %v219
      %v487 = vunpack.c.l.b16 %v220
      %v488 = vunpack.c.l.b16 %v221
      %v489 = vunpack.c.l.b16 %v222
      %v490 = vunpack.c.l.b16 %v223
      %v491 = vunpack.c.l.b16 %v224
      %v492 = vunpack.c.l.b16 %v225
      %v493 = vunpack.c.l.b16 %v226
      %v494 = vunpack.c.l.b16 %v227
      %v495 = vunpack.c.l.b16 %v228
      %v496 = vunpack.c.l.b16 %v229
      %v497 = vunpack.c.l.b16 %v230
      %v498 = vunpack.c.l.b16 %v231
      %v499 = vunpack.c.l.b16 %v232
      %v500 = vunpack.c.l.b16 %v233
      %v501 = vunpack.c.l.b16 %v234
      %v502 = vunpack.c.l.b16 %v235
      %v503 = vunpack.c.l.b16 %v236
      %v504 = vunpack.c.l.b16 %v237
      %v505 = vunpack.c.l.b16 %v238
      %v506 = vunpack.c.l.b16 %v239
      %v507 = vunpack.c.l.b16 %v240
      %v508 = vunpack.c.l.b16 %v241
      %v509 = vunpack.c.l.b16 %v242
      %v510 = vunpack.c.l.b16 %v243
      %v511 = vunpack.c.l.b16 %v244
      %v512 = vunpack.c.l.b16 %v245
      %v513 = vunpack.c.l.b16 %v246
      %v514 = vunpack.c.l.b16 %v247
      %v515 = vunpack.c.l.b16 %v248
      %v516 = vunpack.c.l.b16 %v249
      %v517 = vunpack.c.l.b16 %v250
      %v518 = vunpack.c.l.b16 %v251
      %v519 = vunpack.c.l.b16 %v252
      %v520 = vunpack.c.l.b16 %v253
      %v521 = vunpack.c.l.b16 %v254
      %v522 = vunpack.c.l.b16 %v255
      %v523 = vunpack.c.l.b16 %v256
      %v524 = vunpack.c.l.b16 %v257
      %v525 = vunpack.c.l.b16 %v258
      %v526 = vunpack.c.l.b16 %v259
      %v527 = vunpack.c.l.b16 %v260
      %v528 = vunpack.c.l.b16 %v261
      %v529 = vunpack.c.l.b16 %v262
      %v530 = vunpack.c.l.b16 %v263
      %v531 = vunpack.c.l.b16 %v264
      %v532 = vunpack.c.l.b16 %v265
      %v533 = vunpack.c.l.b16 %v266
      %v534 = vunpack.c.l.b16 %v267
      %v535 = vunpack.c.l.b16 %v268
      %v536 = vunpack.c.l.b16 %v269
      %v537 = vunpack.c.l.b16 %v270
      %v538 = vunpack.c.l.b16 %v271
      %v539 = vunpack.c.l.b16 %v272
      %v540 = vunpack.c.l.b16 %v273
      %v541 = vunpack.c.l.b16 %v274
      %v542 = vunpack.c.l.b16 %v275
      %v543 = vunpack.c.l.b16 %v276
      %v544 = vunpack.c.l.b16 %v277
      %v545 = vunpack.c.l.b16 %v278
      %v546 = vunpack.c.l.b16 %v279
      %v547 = vunpack.c.l.b16 %v280
      %v548 = vunpack.c.l.b16 %v281
      %v549 = vunpack.c.l.b16 %v282
      %v550 = vunpack.c.l.b16 %v283
      %v551 = vunpack.c.l.b16 %v284
      %v552 = vunpack.c.l.b16 %v285
      %v553 = vunpack.c.l.b16 %v286
      %v554 = vunpack.c.l.b16 %v287
      %v555 = vunpack.c.l.b16 %v288
      %v556 = vunpack.c.l.b16 %v289
      %v557 = vunpack.c.l.b16 %v290
      %v558 = vunpack.c.l.b16 %v291
      %v559 = vunpack.c.l.b16 %v292
      %v560 = vunpack.c.l.b16 %v293
      %v561 = vunpack.c.l.b16 %v294
      %v562 = vunpack.c.l.b16 %v295
      %v563 = vunpack.c.l.b16 %v296
      %v564 = vunpack.c.l.b16 %v297
      %v565 = vunpack.c.l.b16 %v298
      %v566 = vunpack.c.l.b16 %v299
      %v567 = vunpack.c.l.b16 %v300
      %v568 = vunpack.c.l.b16 %v301
      %v569 = vunpack.c.l.b16 %v302
      %v570 = vunpack.c.l.b16 %v303
      %v571 = vunpack.c.l.b16 %v304
      %v572 = vunpack.c.l.b16 %v305
      %v573 = vunpack.c.l.b16 %v306
      %v574 = vunpack.c.l.b16 %v307
      %v575 = vunpack.c.l.b16 %v308
      %v576 = vunpack.c.l.b16 %v309
      %v577 = vunpack.c.l.b16 %v310
      %v578 = vunpack.c.l.b16 %v311
      %v579 = vunpack.c.l.b16 %v312
      %v580 = vunpack.c.l.b16 %v313
      %v581 = vunpack.c.l.b16 %v314
      %v582 = vunpack.c.l.b16 %v315
      %v583 = vunpack.c.l.b16 %v316
      %v584 = vunpack.c.l.b16 %v317
      %v585 = vunpack.c.l.b16 %v318
      %v586 = vunpack.c.l.b16 %v319
      %v587 = vunpack.c.l.b16 %v320
      %v588 = vunpack.c.l.b16 %v321
      %v589 = vunpack.c.l.b16 %v322
      %v590 = vunpack.c.l.b16 %v323
      %v591 = vunpack.c.l.b16 %v324
      %v592 = vunpack.c.l.b16 %v325
      %v593 = vunpack.c.l.b16 %v326
      %v594 = vunpack.c.l.b16 %v327
      %v595 = vunpack.c.l.b16 %v328
      %v596 = vunpack.c.l.b16 %v329
      %v597 = vunpack.c.l.b16 %v330
      %v598 = vunpack.c.l.b16 %v331
      %v599 = vunpack.c.l.b16 %v332
      %v600 = vunpack.c.l.b16 %v333
      %v601 = vpack.c.b16 %v474, %v473
      %v602 = vpack.c.b16 %v476, %v475
      %v603 = vpack.c.b16 %v478, %v477
      %v604 = vpack.c.b16 %v480, %v479
      %v605 = vpack.c.b16 %v482, %v481
      %v606 = vpack.c.b16 %v484, %v483
      %v607 = vpack.c.b16 %v486, %v485
      %v608 = vpack.c.b16 %v488, %v487
      %v609 = vpack.c.b16 %v490, %v489
      %v610 = vpack.c.b16 %v492, %v491
      %v611 = vpack.c.b16 %v494, %v493
      %v612 = vpack.c.b16 %v496, %v495
      %v613 = vpack.c.b16 %v498, %v497
      %v614 = vpack.c.b16 %v500, %v499
      %v615 = vpack.c.b16 %v502, %v501
      %v616 = vpack.c.b16 %v504, %v503
      %v617 = vpack.c.b16 %v506, %v505
      %v618 = vpack.c.b16 %v508, %v507
      %v619 = vpack.c.b16 %v510, %v509
      %v620 = vpack.c.b16 %v512, %v511
      %v621 = vpack.c.b16 %v514, %v513
      %v622 = vpack.c.b16 %v516, %v515
      %v623 = vpack.c.b16 %v518, %v517
      %v624 = vpack.c.b16 %v520, %v519
      %v625 = vpack.c.b16 %v522, %v521
      %v626 = vpack.c.b16 %v524, %v523
      %v627 = vpack.c.b16 %v526, %v525
      %v628 = vpack.c.b16 %v528, %v527
      %v629 = vpack.c.b16 %v530, %v529
      %v630 = vpack.c.b16 %v532, %v531
      %v631 = vpack.c.b16 %v534, %v533
      %v632 = vpack.c.b16 %v536, %v535
      %v633 = vpack.c.b16 %v538, %v537
      %v634 = vpack.c.b16 %v540, %v539
      %v635 = vpack.c.b16 %v542, %v541
      %v636 = vpack.c.b16 %v544, %v543
      %v637 = vpack.c.b16 %v546, %v545
      %v638 = vpack.c.b16 %v548, %v547
      %v639 = vpack.c.b16 %v550, %v549
      %v640 = vpack.c.b16 %v552, %v551
      %v641 = vpack.c.b16 %v554, %v553
      %v642 = vpack.c.b16 %v556, %v555
      %v643 = vpack.c.b16 %v558, %v557
      %v644 = vpack.c.b16 %v560, %v559
      %v645 = vpack.c.b16 %v562, %v561
      %v646 = vpack.c.b16 %v564, %v563
      %v647 = vpack.c.b16 %v566, %v565
      %v648 = vpack.c.b16 %v568, %v567
      %v649 = vpack.c.b16 %v570, %v569
      %v650 = vpack.c.b16 %v572, %v571
      %v651 = vpack.c.b16 %v574, %v573
      %v652 = vpack.c.b16 %v576, %v575
      %v653 = vpack.c.b16 %v578, %v577
      %v654 = vpack.c.b16 %v580, %v579
      %v655 = vpack.c.b16 %v582, %v581
      %v656 = vpack.c.b16 %v584, %v583
      %v657 = vpack.c.b16 %v586, %v585
      %v658 = vpack.c.b16 %v588, %v587
      %v659 = vpack.c.b16 %v590, %v589
      %v660 = vpack.c.b16 %v592, %v591
      %v661 = vpack.c.b16 %v594, %v593
      %v662 = vpack.c.b16 %v596, %v595
      %v663 = vpack.c.b16 %v598, %v597
      %v664 = vpack.c.b16 %v600, %v599
      %v669 = vunpack.c.l.b16 %v334
      %v670 = vunpack.c.l.b16 %v335
      %v671 = vunpack.c.l.b16 %v336
      %v672 = vunpack.c.l.b16 %v337
      %v673 = vpack.c.b16 %v670, %v669
      %v674 = vpack.c.b16 %v672, %v671
      %vm676 = vcmask 220160
      %v678 = vsel %vm676, %v601, 0
      %v681 = vsel %vm676, %v602, 0
      %v684 = vsel %vm676, %v603, 0
      %v687 = vsel %vm676, %v604, 0
      %v690 = vsel %vm676, %v605, 0
      %v693 = vsel %vm676, %v606, 0
      %v696 = vsel %vm676, %v607, 0
      %v699 = vsel %vm676, %v608, 0
      %v702 = vsel %vm676, %v609, 0
      %v705 = vsel %vm676, %v610, 0
      %v708 = vsel %vm676, %v611, 0
      %v711 = vsel %vm676, %v612, 0
      %v714 = vsel %vm676, %v613, 0
      %v717 = vsel %vm676, %v614, 0
      %v720 = vsel %vm676, %v615, 0
      %v723 = vsel %vm676, %v616, 0
      %v726 = vsel %vm676, %v617, 0
      %v729 = vsel %vm676, %v618, 0
      %v732 = vsel %vm676, %v619, 0
      %v735 = vsel %vm676, %v620, 0
      %v738 = vsel %vm676, %v621, 0
      %v741 = vsel %vm676, %v622, 0
      %v744 = vsel %vm676, %v623, 0
      %v747 = vsel %vm676, %v624, 0
      %v750 = vsel %vm676, %v625, 0
      %v753 = vsel %vm676, %v626, 0
      %v756 = vsel %vm676, %v627, 0
      %v759 = vsel %vm676, %v628, 0
      %v762 = vsel %vm676, %v629, 0
      %v765 = vsel %vm676, %v630, 0
      %v768 = vsel %vm676, %v631, 0
      %v771 = vsel %vm676, %v632, 0
      %v774 = vsel %vm676, %v633, 0
      %v777 = vsel %vm676, %v634, 0
      %v780 = vsel %vm676, %v635, 0
      %v783 = vsel %vm676, %v636, 0
      %v786 = vsel %vm676, %v637, 0
      %v789 = vsel %vm676, %v638, 0
      %v792 = vsel %vm676, %v639, 0
      %v795 = vsel %vm676, %v640, 0
      %v798 = vsel %vm676, %v641, 0
      %v801 = vsel %vm676, %v642, 0
      %v804 = vsel %vm676, %v643, 0
      %v807 = vsel %vm676, %v644, 0
      %v810 = vsel %vm676, %v645, 0
      %v813 = vsel %vm676, %v646, 0
      %v816 = vsel %vm676, %v647, 0
      %v819 = vsel %vm676, %v648, 0
      %v822 = vsel %vm676, %v649, 0
      %v825 = vsel %vm676, %v650, 0
      %v828 = vsel %vm676, %v651, 0
      %v831 = vsel %vm676, %v652, 0
      %v834 = vsel %vm676, %v653, 0
      %v837 = vsel %vm676, %v654, 0
      %v840 = vsel %vm676, %v655, 0
      %v843 = vsel %vm676, %v656, 0
      %v846 = vsel %vm676, %v657, 0
      %v849 = vsel %vm676, %v658, 0
      %v852 = vsel %vm676, %v659, 0
      %v855 = vsel %vm676, %v660, 0
      %v858 = vsel %vm676, %v661, 0
      %v861 = vsel %vm676, %v662, 0
      %v864 = vsel %vm676, %v663, 0
      %v867 = vsel %vm676, %v664, 0
      %vm869 = vcmask 1044480
      %vm870 = vcmask 1045504
      %v871 = vsel %vm869, 4294967295, 65535
      %v872 = vsel %vm870, %v871, 0
      %v874 = vand.u32 %v674, %v872
      %876 = vmatprep.subr.bf16.mxu0 0
      %877 = vmatpush1.bf16.msra.mxu0 %v673
      %878 = vmatprep.subr.bf16.mxu0 0
      %879 = vmatpush1.bf16.msra.mxu0 %v874
      %880 = vmatprep.subr.bf16.mxu0 0
      %881 = vmatpush1.bf16.msra.mxu0 0
      %882 = vmatprep.subr.bf16.mxu0 0
      %883 = vmatpush1.bf16.msra.mxu0 0
      %884 = vmatprep.subr.bf16.mxu0 0
      %885 = vmatpush1.bf16.msra.mxu0 0
      %886 = vmatprep.subr.bf16.mxu0 0
      %887 = vmatpush1.bf16.msra.mxu0 0
      %888 = vmatprep.subr.bf16.mxu0 0
      %889 = vmatpush1.bf16.msra.mxu0 0
      %890 = vmatprep.subr.bf16.mxu0 0
      %891 = vmatpush1.bf16.msra.mxu0 0
      %892 = vmatprep.subr.bf16.mxu0 0
      %893 = vmatpush1.bf16.msra.mxu0 0
      %894 = vmatprep.subr.bf16.mxu0 0
      %895 = vmatpush1.bf16.msra.mxu0 0
      %896 = vmatprep.subr.bf16.mxu0 0
      %897 = vmatpush1.bf16.msra.mxu0 0
      %898 = vmatprep.subr.bf16.mxu0 0
      %899 = vmatpush1.bf16.msra.mxu0 0
      %900 = vmatprep.subr.bf16.mxu0 0
      %901 = vmatpush1.bf16.msra.mxu0 0
      %902 = vmatprep.subr.bf16.mxu0 0
      %903 = vmatpush1.bf16.msra.mxu0 0
      %904 = vmatprep.subr.bf16.mxu0 0
      %905 = vmatpush1.bf16.msra.mxu0 0
      %906 = vmatprep.subr.bf16.mxu0 0
      %907 = vmatpush1.bf16.msra.mxu0 0
      %908 = vmatprep.mubr.bf16.mxu0 0
      %909 = vmatmul.mubr.bf16.gmra.mrb[0].mxu0 %v678
      %v910 = vpop.f32.mrb[0].mxu0
      %v911 = vadd.f32 %v343, %v910
      %v912 = vpop.f32.mrb[0].mxu0
      %v913 = vpop.f32.mrb[0].mxu0
      %v914 = vadd.f32 %v343, %v913
      %v915 = vpop.f32.mrb[0].mxu0
      %916 = vmatprep.mubr.bf16.mxu0 0
      %917 = vmatmul.mubr.bf16.gmra.mrb[0].mxu0 %v681
      %v918 = vpop.f32.mrb[0].mxu0
      %v919 = vadd.f32 %v343, %v918
      %v920 = vpop.f32.mrb[0].mxu0
      %v921 = vpop.f32.mrb[0].mxu0
      %v922 = vadd.f32 %v343, %v921
      %v923 = vpop.f32.mrb[0].mxu0
      %924 = vmatprep.mubr.bf16.mxu0 0
      %925 = vmatmul.mubr.bf16.gmra.mrb[0].mxu0 %v684
      %v926 = vpop.f32.mrb[0].mxu0
      %v927 = vadd.f32 %v343, %v926
      %v928 = vpop.f32.mrb[0].mxu0
      %v929 = vpop.f32.mrb[0].mxu0
      %v930 = vadd.f32 %v343, %v929
      %v931 = vpop.f32.mrb[0].mxu0
      %932 = vmatprep.mubr.bf16.mxu0 0
      %933 = vmatmul.mubr.bf16.gmra.mrb[0].mxu0 %v687
      %v934 = vpop.f32.mrb[0].mxu0
      %v935 = vadd.f32 %v343, %v934
      %v936 = vpop.f32.mrb[0].mxu0
      %v937 = vpop.f32.mrb[0].mxu0
      %v938 = vadd.f32 %v343, %v937
      %v939 = vpop.f32.mrb[0].mxu0
      %940 = vmatprep.mubr.bf16.mxu0 0
      %941 = vmatmul.mubr.bf16.gmra.mrb[0].mxu0 %v690
      %v942 = vpop.f32.mrb[0].mxu0
      %v943 = vadd.f32 %v343, %v942
      %v944 = vpop.f32.mrb[0].mxu0
      %v945 = vpop.f32.mrb[0].mxu0
      %v946 = vadd.f32 %v343, %v945
      %v947 = vpop.f32.mrb[0].mxu0
      %948 = vmatprep.mubr.bf16.mxu0 0
      %949 = vmatmul.mubr.bf16.gmra.mrb[0].mxu0 %v693
      %v950 = vpop.f32.mrb[0].mxu0
      %v951 = vadd.f32 %v343, %v950
      %v952 = vpop.f32.mrb[0].mxu0
      %v953 = vpop.f32.mrb[0].mxu0
      %v954 = vadd.f32 %v343, %v953
      %v955 = vpop.f32.mrb[0].mxu0
      %956 = vmatprep.mubr.bf16.mxu0 0
      %957 = vmatmul.mubr.bf16.gmra.mrb[0].mxu0 %v696
      %v958 = vpop.f32.mrb[0].mxu0
      %v959 = vadd.f32 %v343, %v958
      %v960 = vpop.f32.mrb[0].mxu0
      %v961 = vpop.f32.mrb[0].mxu0
      %v962 = vadd.f32 %v343, %v961
      %v963 = vpop.f32.mrb[0].mxu0
      %964 = vmatprep.mubr.bf16.mxu0 0
      %965 = vmatmul.mubr.bf16.gmra.mrb[0].mxu0 %v699
      %v966 = vpop.f32.mrb[0].mxu0
      %v967 = vadd.f32 %v343, %v966
      %v968 = vpop.f32.mrb[0].mxu0
      %v969 = vpop.f32.mrb[0].mxu0
      %v970 = vadd.f32 %v343, %v969
      %v971 = vpop.f32.mrb[0].mxu0
      %972 = vmatprep.mubr.bf16.mxu0 0
      %973 = vmatmul.mubr.bf16.gmra.mrb[0].mxu0 %v702
      %v974 = vpop.f32.mrb[0].mxu0
      %v975 = vadd.f32 %v343, %v974
      %v976 = vpop.f32.mrb[0].mxu0
      %v977 = vpop.f32.mrb[0].mxu0
      %v978 = vadd.f32 %v343, %v977
      %v979 = vpop.f32.mrb[0].mxu0
      %980 = vmatprep.mubr.bf16.mxu0 0
      %981 = vmatmul.mubr.bf16.gmra.mrb[0].mxu0 %v705
      %v982 = vpop.f32.mrb[0].mxu0
      %v983 = vadd.f32 %v343, %v982
      %v984 = vpop.f32.mrb[0].mxu0
      %v985 = vpop.f32.mrb[0].mxu0
      %v986 = vadd.f32 %v343, %v985
      %v987 = vpop.f32.mrb[0].mxu0
      %988 = vmatprep.mubr.bf16.mxu0 0
      %989 = vmatmul.mubr.bf16.gmra.mrb[0].mxu0 %v708
      %v990 = vpop.f32.mrb[0].mxu0
      %v991 = vadd.f32 %v343, %v990
      %v992 = vpop.f32.mrb[0].mxu0
      %v993 = vpop.f32.mrb[0].mxu0
      %v994 = vadd.f32 %v343, %v993
      %v995 = vpop.f32.mrb[0].mxu0
      %996 = vmatprep.mubr.bf16.mxu0 0
      %997 = vmatmul.mubr.bf16.gmra.mrb[0].mxu0 %v711
      %v998 = vpop.f32.mrb[0].mxu0
      %v999 = vadd.f32 %v343, %v998
      %v1000 = vpop.f32.mrb[0].mxu0
      %v1001 = vpop.f32.mrb[0].mxu0
      %v1002 = vadd.f32 %v343, %v1001
      %v1003 = vpop.f32.mrb[0].mxu0
      %1004 = vmatprep.mubr.bf16.mxu0 0
      %1005 = vmatmul.mubr.bf16.gmra.mrb[0].mxu0 %v714
      %v1006 = vpop.f32.mrb[0].mxu0
      %v1007 = vadd.f32 %v343, %v1006
      %v1008 = vpop.f32.mrb[0].mxu0
      %v1009 = vpop.f32.mrb[0].mxu0
      %v1010 = vadd.f32 %v343, %v1009
      %v1011 = vpop.f32.mrb[0].mxu0
      %1012 = vmatprep.mubr.bf16.mxu0 0
      %1013 = vmatmul.mubr.bf16.gmra.mrb[0].mxu0 %v717
      %v1014 = vpop.f32.mrb[0].mxu0
      %v1015 = vadd.f32 %v343, %v1014
      %v1016 = vpop.f32.mrb[0].mxu0
      %v1017 = vpop.f32.mrb[0].mxu0
      %v1018 = vadd.f32 %v343, %v1017
      %v1019 = vpop.f32.mrb[0].mxu0
      %1020 = vmatprep.mubr.bf16.mxu0 0
      %1021 = vmatmul.mubr.bf16.gmra.mrb[0].mxu0 %v720
      %v1022 = vpop.f32.mrb[0].mxu0
      %v1023 = vadd.f32 %v343, %v1022
      %v1024 = vpop.f32.mrb[0].mxu0
      %v1025 = vpop.f32.mrb[0].mxu0
      %v1026 = vadd.f32 %v343, %v1025
      %v1027 = vpop.f32.mrb[0].mxu0
      %1028 = vmatprep.mubr.bf16.mxu0 0
      %1029 = vmatmul.mubr.bf16.gmra.mrb[0].mxu0 %v723
      %v1030 = vpop.f32.mrb[0].mxu0
      %v1031 = vadd.f32 %v343, %v1030
      %v1032 = vpop.f32.mrb[0].mxu0
      %v1033 = vpop.f32.mrb[0].mxu0
      %v1034 = vadd.f32 %v343, %v1033
      %v1035 = vpop.f32.mrb[0].mxu0
      %1036 = vmatprep.mubr.bf16.mxu0 0
      %1037 = vmatmul.mubr.bf16.gmra.mrb[0].mxu0 %v726
      %v1038 = vpop.f32.mrb[0].mxu0
      %v1039 = vadd.f32 %v343, %v1038
      %v1040 = vpop.f32.mrb[0].mxu0
      %v1041 = vpop.f32.mrb[0].mxu0
      %v1042 = vadd.f32 %v343, %v1041
      %v1043 = vpop.f32.mrb[0].mxu0
      %1044 = vmatprep.mubr.bf16.mxu0 0
      %1045 = vmatmul.mubr.bf16.gmra.mrb[0].mxu0 %v729
      %v1046 = vpop.f32.mrb[0].mxu0
      %v1047 = vadd.f32 %v343, %v1046
      %v1048 = vpop.f32.mrb[0].mxu0
      %v1049 = vpop.f32.mrb[0].mxu0
      %v1050 = vadd.f32 %v343, %v1049
      %v1051 = vpop.f32.mrb[0].mxu0
      %1052 = vmatprep.mubr.bf16.mxu0 0
      %1053 = vmatmul.mubr.bf16.gmra.mrb[0].mxu0 %v732
      %v1054 = vpop.f32.mrb[0].mxu0
      %v1055 = vadd.f32 %v343, %v1054
      %v1056 = vpop.f32.mrb[0].mxu0
      %v1057 = vpop.f32.mrb[0].mxu0
      %v1058 = vadd.f32 %v343, %v1057
      %v1059 = vpop.f32.mrb[0].mxu0
      %1060 = vmatprep.mubr.bf16.mxu0 0
      %1061 = vmatmul.mubr.bf16.gmra.mrb[0].mxu0 %v735
      %v1062 = vpop.f32.mrb[0].mxu0
      %v1063 = vadd.f32 %v343, %v1062
      %v1064 = vpop.f32.mrb[0].mxu0
      %v1065 = vpop.f32.mrb[0].mxu0
      %v1066 = vadd.f32 %v343, %v1065
      %v1067 = vpop.f32.mrb[0].mxu0
      %1068 = vmatprep.mubr.bf16.mxu0 0
      %1069 = vmatmul.mubr.bf16.gmra.mrb[0].mxu0 %v738
      %v1070 = vpop.f32.mrb[0].mxu0
      %v1071 = vadd.f32 %v343, %v1070
      %v1072 = vpop.f32.mrb[0].mxu0
      %v1073 = vpop.f32.mrb[0].mxu0
      %v1074 = vadd.f32 %v343, %v1073
      %v1075 = vpop.f32.mrb[0].mxu0
      %1076 = vmatprep.mubr.bf16.mxu0 0
      %1077 = vmatmul.mubr.bf16.gmra.mrb[0].mxu0 %v741
      %v1078 = vpop.f32.mrb[0].mxu0
      %v1079 = vadd.f32 %v343, %v1078
      %v1080 = vpop.f32.mrb[0].mxu0
      %v1081 = vpop.f32.mrb[0].mxu0
      %v1082 = vadd.f32 %v343, %v1081
      %v1083 = vpop.f32.mrb[0].mxu0
      %1084 = vmatprep.mubr.bf16.mxu0 0
      %1085 = vmatmul.mubr.bf16.gmra.mrb[0].mxu0 %v744
      %v1086 = vpop.f32.mrb[0].mxu0
      %v1087 = vadd.f32 %v343, %v1086
      %v1088 = vpop.f32.mrb[0].mxu0
      %v1089 = vpop.f32.mrb[0].mxu0
      %v1090 = vadd.f32 %v343, %v1089
      %v1091 = vpop.f32.mrb[0].mxu0
      %1092 = vmatprep.mubr.bf16.mxu0 0
      %1093 = vmatmul.mubr.bf16.gmra.mrb[0].mxu0 %v747
      %v1094 = vpop.f32.mrb[0].mxu0
      %v1095 = vadd.f32 %v343, %v1094
      %v1096 = vpop.f32.mrb[0].mxu0
      %v1097 = vpop.f32.mrb[0].mxu0
      %v1098 = vadd.f32 %v343, %v1097
      %v1099 = vpop.f32.mrb[0].mxu0
      %1100 = vmatprep.mubr.bf16.mxu0 0
      %1101 = vmatmul.mubr.bf16.gmra.mrb[0].mxu0 %v750
      %v1102 = vpop.f32.mrb[0].mxu0
      %v1103 = vadd.f32 %v343, %v1102
      %v1104 = vpop.f32.mrb[0].mxu0
      %v1105 = vpop.f32.mrb[0].mxu0
      %v1106 = vadd.f32 %v343, %v1105
      %v1107 = vpop.f32.mrb[0].mxu0
      %1108 = vmatprep.mubr.bf16.mxu0 0
      %1109 = vmatmul.mubr.bf16.gmra.mrb[0].mxu0 %v753
      %v1110 = vpop.f32.mrb[0].mxu0
      %v1111 = vadd.f32 %v343, %v1110
      %v1112 = vpop.f32.mrb[0].mxu0
      %v1113 = vpop.f32.mrb[0].mxu0
      %v1114 = vadd.f32 %v343, %v1113
      %v1115 = vpop.f32.mrb[0].mxu0
      %1116 = vmatprep.mubr.bf16.mxu0 0
      %1117 = vmatmul.mubr.bf16.gmra.mrb[0].mxu0 %v756
      %v1118 = vpop.f32.mrb[0].mxu0
      %v1119 = vadd.f32 %v343, %v1118
      %v1120 = vpop.f32.mrb[0].mxu0
      %v1121 = vpop.f32.mrb[0].mxu0
      %v1122 = vadd.f32 %v343, %v1121
      %v1123 = vpop.f32.mrb[0].mxu0
      %1124 = vmatprep.mubr.bf16.mxu0 0
      %1125 = vmatmul.mubr.bf16.gmra.mrb[0].mxu0 %v759
      %v1126 = vpop.f32.mrb[0].mxu0
      %v1127 = vadd.f32 %v343, %v1126
      %v1128 = vpop.f32.mrb[0].mxu0
      %v1129 = vpop.f32.mrb[0].mxu0
      %v1130 = vadd.f32 %v343, %v1129
      %v1131 = vpop.f32.mrb[0].mxu0
      %1132 = vmatprep.mubr.bf16.mxu0 0
      %1133 = vmatmul.mubr.bf16.gmra.mrb[0].mxu0 %v762
      %v1134 = vpop.f32.mrb[0].mxu0
      %v1135 = vadd.f32 %v343, %v1134
      %v1136 = vpop.f32.mrb[0].mxu0
      %v1137 = vpop.f32.mrb[0].mxu0
      %v1138 = vadd.f32 %v343, %v1137
      %v1139 = vpop.f32.mrb[0].mxu0
      %1140 = vmatprep.mubr.bf16.mxu0 0
      %1141 = vmatmul.mubr.bf16.gmra.mrb[0].mxu0 %v765
      %v1142 = vpop.f32.mrb[0].mxu0
      %v1143 = vadd.f32 %v343, %v1142
      %v1144 = vpop.f32.mrb[0].mxu0
      %v1145 = vpop.f32.mrb[0].mxu0
      %v1146 = vadd.f32 %v343, %v1145
      %v1147 = vpop.f32.mrb[0].mxu0
      %1148 = vmatprep.mubr.bf16.mxu0 0
      %1149 = vmatmul.mubr.bf16.gmra.mrb[0].mxu0 %v768
      %v1150 = vpop.f32.mrb[0].mxu0
      %v1151 = vadd.f32 %v343, %v1150
      %v1152 = vpop.f32.mrb[0].mxu0
      %v1153 = vpop.f32.mrb[0].mxu0
      %v1154 = vadd.f32 %v343, %v1153
      %v1155 = vpop.f32.mrb[0].mxu0
      %1156 = vmatprep.mubr.bf16.mxu0 0
      %1157 = vmatmul.mubr.bf16.gmra.mrb[0].mxu0 %v771
      %v1158 = vpop.f32.mrb[0].mxu0
      %v1159 = vadd.f32 %v343, %v1158
      %v1160 = vpop.f32.mrb[0].mxu0
      %v1161 = vpop.f32.mrb[0].mxu0
      %v1162 = vadd.f32 %v343, %v1161
      %v1163 = vpop.f32.mrb[0].mxu0
      %1164 = vmatprep.mubr.bf16.mxu0 0
      %1165 = vmatmul.mubr.bf16.gmra.mrb[0].mxu0 %v774
      %v1166 = vpop.f32.mrb[0].mxu0
      %v1167 = vadd.f32 %v343, %v1166
      %v1168 = vpop.f32.mrb[0].mxu0
      %v1169 = vpop.f32.mrb[0].mxu0
      %v1170 = vadd.f32 %v343, %v1169
      %v1171 = vpop.f32.mrb[0].mxu0
      %1172 = vmatprep.mubr.bf16.mxu0 0
      %1173 = vmatmul.mubr.bf16.gmra.mrb[0].mxu0 %v777
      %v1174 = vpop.f32.mrb[0].mxu0
      %v1175 = vadd.f32 %v343, %v1174
      %v1176 = vpop.f32.mrb[0].mxu0
      %v1177 = vpop.f32.mrb[0].mxu0
      %v1178 = vadd.f32 %v343, %v1177
      %v1179 = vpop.f32.mrb[0].mxu0
      %1180 = vmatprep.mubr.bf16.mxu0 0
      %1181 = vmatmul.mubr.bf16.gmra.mrb[0].mxu0 %v780
      %v1182 = vpop.f32.mrb[0].mxu0
      %v1183 = vadd.f32 %v343, %v1182
      %v1184 = vpop.f32.mrb[0].mxu0
      %v1185 = vpop.f32.mrb[0].mxu0
      %v1186 = vadd.f32 %v343, %v1185
      %v1187 = vpop.f32.mrb[0].mxu0
      %1188 = vmatprep.mubr.bf16.mxu0 0
      %1189 = vmatmul.mubr.bf16.gmra.mrb[0].mxu0 %v783
      %v1190 = vpop.f32.mrb[0].mxu0
      %v1191 = vadd.f32 %v343, %v1190
      %v1192 = vpop.f32.mrb[0].mxu0
      %v1193 = vpop.f32.mrb[0].mxu0
      %v1194 = vadd.f32 %v343, %v1193
      %v1195 = vpop.f32.mrb[0].mxu0
      %1196 = vmatprep.mubr.bf16.mxu0 0
      %1197 = vmatmul.mubr.bf16.gmra.mrb[0].mxu0 %v786
      %v1198 = vpop.f32.mrb[0].mxu0
      %v1199 = vadd.f32 %v343, %v1198
      %v1200 = vpop.f32.mrb[0].mxu0
      %v1201 = vpop.f32.mrb[0].mxu0
      %v1202 = vadd.f32 %v343, %v1201
      %v1203 = vpop.f32.mrb[0].mxu0
      %1204 = vmatprep.mubr.bf16.mxu0 0
      %1205 = vmatmul.mubr.bf16.gmra.mrb[0].mxu0 %v789
      %v1206 = vpop.f32.mrb[0].mxu0
      %v1207 = vadd.f32 %v343, %v1206
      %v1208 = vpop.f32.mrb[0].mxu0
      %v1209 = vpop.f32.mrb[0].mxu0
      %v1210 = vadd.f32 %v343, %v1209
      %v1211 = vpop.f32.mrb[0].mxu0
      %1212 = vmatprep.mubr.bf16.mxu0 0
      %1213 = vmatmul.mubr.bf16.gmra.mrb[0].mxu0 %v792
      %v1214 = vpop.f32.mrb[0].mxu0
      %v1215 = vadd.f32 %v343, %v1214
      %v1216 = vpop.f32.mrb[0].mxu0
      %v1217 = vpop.f32.mrb[0].mxu0
      %v1218 = vadd.f32 %v343, %v1217
      %v1219 = vpop.f32.mrb[0].mxu0
      %1220 = vmatprep.mubr.bf16.mxu0 0
      %1221 = vmatmul.mubr.bf16.gmra.mrb[0].mxu0 %v795
      %v1222 = vpop.f32.mrb[0].mxu0
      %v1223 = vadd.f32 %v343, %v1222
      %v1224 = vpop.f32.mrb[0].mxu0
      %v1225 = vpop.f32.mrb[0].mxu0
      %v1226 = vadd.f32 %v343, %v1225
      %v1227 = vpop.f32.mrb[0].mxu0
      %1228 = vmatprep.mubr.bf16.mxu0 0
      %1229 = vmatmul.mubr.bf16.gmra.mrb[0].mxu0 %v798
      %v1230 = vpop.f32.mrb[0].mxu0
      %v1231 = vadd.f32 %v343, %v1230
      %v1232 = vpop.f32.mrb[0].mxu0
      %v1233 = vpop.f32.mrb[0].mxu0
      %v1234 = vadd.f32 %v343, %v1233
      %v1235 = vpop.f32.mrb[0].mxu0
      %1236 = vmatprep.mubr.bf16.mxu0 0
      %1237 = vmatmul.mubr.bf16.gmra.mrb[0].mxu0 %v801
      %v1238 = vpop.f32.mrb[0].mxu0
      %v1239 = vadd.f32 %v343, %v1238
      %v1240 = vpop.f32.mrb[0].mxu0
      %v1241 = vpop.f32.mrb[0].mxu0
      %v1242 = vadd.f32 %v343, %v1241
      %v1243 = vpop.f32.mrb[0].mxu0
      %1244 = vmatprep.mubr.bf16.mxu0 0
      %1245 = vmatmul.mubr.bf16.gmra.mrb[0].mxu0 %v804
      %v1246 = vpop.f32.mrb[0].mxu0
      %v1247 = vadd.f32 %v343, %v1246
      %v1248 = vpop.f32.mrb[0].mxu0
      %v1249 = vpop.f32.mrb[0].mxu0
      %v1250 = vadd.f32 %v343, %v1249
      %v1251 = vpop.f32.mrb[0].mxu0
      %1252 = vmatprep.mubr.bf16.mxu0 0
      %1253 = vmatmul.mubr.bf16.gmra.mrb[0].mxu0 %v807
      %v1254 = vpop.f32.mrb[0].mxu0
      %v1255 = vadd.f32 %v343, %v1254
      %v1256 = vpop.f32.mrb[0].mxu0
      %v1257 = vpop.f32.mrb[0].mxu0
      %v1258 = vadd.f32 %v343, %v1257
      %v1259 = vpop.f32.mrb[0].mxu0
      %1260 = vmatprep.mubr.bf16.mxu0 0
      %1261 = vmatmul.mubr.bf16.gmra.mrb[0].mxu0 %v810
      %v1262 = vpop.f32.mrb[0].mxu0
      %v1263 = vadd.f32 %v343, %v1262
      %v1264 = vpop.f32.mrb[0].mxu0
      %v1265 = vpop.f32.mrb[0].mxu0
      %v1266 = vadd.f32 %v343, %v1265
      %v1267 = vpop.f32.mrb[0].mxu0
      %1268 = vmatprep.mubr.bf16.mxu0 0
      %1269 = vmatmul.mubr.bf16.gmra.mrb[0].mxu0 %v813
      %v1270 = vpop.f32.mrb[0].mxu0
      %v1271 = vadd.f32 %v343, %v1270
      %v1272 = vpop.f32.mrb[0].mxu0
      %v1273 = vpop.f32.mrb[0].mxu0
      %v1274 = vadd.f32 %v343, %v1273
      %v1275 = vpop.f32.mrb[0].mxu0
      %1276 = vmatprep.mubr.bf16.mxu0 0
      %1277 = vmatmul.mubr.bf16.gmra.mrb[0].mxu0 %v816
      %v1278 = vpop.f32.mrb[0].mxu0
      %v1279 = vadd.f32 %v343, %v1278
      %v1280 = vpop.f32.mrb[0].mxu0
      %v1281 = vpop.f32.mrb[0].mxu0
      %v1282 = vadd.f32 %v343, %v1281
      %v1283 = vpop.f32.mrb[0].mxu0
      %1284 = vmatprep.mubr.bf16.mxu0 0
      %1285 = vmatmul.mubr.bf16.gmra.mrb[0].mxu0 %v819
      %v1286 = vpop.f32.mrb[0].mxu0
      %v1287 = vadd.f32 %v343, %v1286
      %v1288 = vpop.f32.mrb[0].mxu0
      %v1289 = vpop.f32.mrb[0].mxu0
      %v1290 = vadd.f32 %v343, %v1289
      %v1291 = vpop.f32.mrb[0].mxu0
      %1292 = vmatprep.mubr.bf16.mxu0 0
      %1293 = vmatmul.mubr.bf16.gmra.mrb[0].mxu0 %v822
      %v1294 = vpop.f32.mrb[0].mxu0
      %v1295 = vadd.f32 %v343, %v1294
      %v1296 = vpop.f32.mrb[0].mxu0
      %v1297 = vpop.f32.mrb[0].mxu0
      %v1298 = vadd.f32 %v343, %v1297
      %v1299 = vpop.f32.mrb[0].mxu0
      %1300 = vmatprep.mubr.bf16.mxu0 0
      %1301 = vmatmul.mubr.bf16.gmra.mrb[0].mxu0 %v825
      %v1302 = vpop.f32.mrb[0].mxu0
      %v1303 = vadd.f32 %v343, %v1302
      %v1304 = vpop.f32.mrb[0].mxu0
      %v1305 = vpop.f32.mrb[0].mxu0
      %v1306 = vadd.f32 %v343, %v1305
      %v1307 = vpop.f32.mrb[0].mxu0
      %1308 = vmatprep.mubr.bf16.mxu0 0
      %1309 = vmatmul.mubr.bf16.gmra.mrb[0].mxu0 %v828
      %v1310 = vpop.f32.mrb[0].mxu0
      %v1311 = vadd.f32 %v343, %v1310
      %v1312 = vpop.f32.mrb[0].mxu0
      %v1313 = vpop.f32.mrb[0].mxu0
      %v1314 = vadd.f32 %v343, %v1313
      %v1315 = vpop.f32.mrb[0].mxu0
      %1316 = vmatprep.mubr.bf16.mxu0 0
      %1317 = vmatmul.mubr.bf16.gmra.mrb[0].mxu0 %v831
      %v1318 = vpop.f32.mrb[0].mxu0
      %v1319 = vadd.f32 %v343, %v1318
      %v1320 = vpop.f32.mrb[0].mxu0
      %v1321 = vpop.f32.mrb[0].mxu0
      %v1322 = vadd.f32 %v343, %v1321
      %v1323 = vpop.f32.mrb[0].mxu0
      %1324 = vmatprep.mubr.bf16.mxu0 0
      %1325 = vmatmul.mubr.bf16.gmra.mrb[0].mxu0 %v834
      %v1326 = vpop.f32.mrb[0].mxu0
      %v1327 = vadd.f32 %v343, %v1326
      %v1328 = vpop.f32.mrb[0].mxu0
      %v1329 = vpop.f32.mrb[0].mxu0
      %v1330 = vadd.f32 %v343, %v1329
      %v1331 = vpop.f32.mrb[0].mxu0
      %1332 = vmatprep.mubr.bf16.mxu0 0
      %1333 = vmatmul.mubr.bf16.gmra.mrb[0].mxu0 %v837
      %v1334 = vpop.f32.mrb[0].mxu0
      %v1335 = vadd.f32 %v343, %v1334
      %v1336 = vpop.f32.mrb[0].mxu0
      %v1337 = vpop.f32.mrb[0].mxu0
      %v1338 = vadd.f32 %v343, %v1337
      %v1339 = vpop.f32.mrb[0].mxu0
      %1340 = vmatprep.mubr.bf16.mxu0 0
      %1341 = vmatmul.mubr.bf16.gmra.mrb[0].mxu0 %v840
      %v1342 = vpop.f32.mrb[0].mxu0
      %v1343 = vadd.f32 %v343, %v1342
      %v1344 = vpop.f32.mrb[0].mxu0
      %v1345 = vpop.f32.mrb[0].mxu0
      %v1346 = vadd.f32 %v343, %v1345
      %v1347 = vpop.f32.mrb[0].mxu0
      %1348 = vmatprep.mubr.bf16.mxu0 0
      %1349 = vmatmul.mubr.bf16.gmra.mrb[0].mxu0 %v843
      %v1350 = vpop.f32.mrb[0].mxu0
      %v1351 = vadd.f32 %v343, %v1350
      %v1352 = vpop.f32.mrb[0].mxu0
      %v1353 = vpop.f32.mrb[0].mxu0
      %v1354 = vadd.f32 %v343, %v1353
      %v1355 = vpop.f32.mrb[0].mxu0
      %1356 = vmatprep.mubr.bf16.mxu0 0
      %1357 = vmatmul.mubr.bf16.gmra.mrb[0].mxu0 %v846
      %v1358 = vpop.f32.mrb[0].mxu0
      %v1359 = vadd.f32 %v343, %v1358
      %v1360 = vpop.f32.mrb[0].mxu0
      %v1361 = vpop.f32.mrb[0].mxu0
      %v1362 = vadd.f32 %v343, %v1361
      %v1363 = vpop.f32.mrb[0].mxu0
      %1364 = vmatprep.mubr.bf16.mxu0 0
      %1365 = vmatmul.mubr.bf16.gmra.mrb[0].mxu0 %v849
      %v1366 = vpop.f32.mrb[0].mxu0
      %v1367 = vadd.f32 %v343, %v1366
      %v1368 = vpop.f32.mrb[0].mxu0
      %v1369 = vpop.f32.mrb[0].mxu0
      %v1370 = vadd.f32 %v343, %v1369
      %v1371 = vpop.f32.mrb[0].mxu0
      %1372 = vmatprep.mubr.bf16.mxu0 0
      %1373 = vmatmul.mubr.bf16.gmra.mrb[0].mxu0 %v852
      %v1374 = vpop.f32.mrb[0].mxu0
      %v1375 = vadd.f32 %v343, %v1374
      %v1376 = vpop.f32.mrb[0].mxu0
      %v1377 = vpop.f32.mrb[0].mxu0
      %v1378 = vadd.f32 %v343, %v1377
      %v1379 = vpop.f32.mrb[0].mxu0
      %1380 = vmatprep.mubr.bf16.mxu0 0
      %1381 = vmatmul.mubr.bf16.gmra.mrb[0].mxu0 %v855
      %v1382 = vpop.f32.mrb[0].mxu0
      %v1383 = vadd.f32 %v343, %v1382
      %v1384 = vpop.f32.mrb[0].mxu0
      %v1385 = vpop.f32.mrb[0].mxu0
      %v1386 = vadd.f32 %v343, %v1385
      %v1387 = vpop.f32.mrb[0].mxu0
      %1388 = vmatprep.mubr.bf16.mxu0 0
      %1389 = vmatmul.mubr.bf16.gmra.mrb[0].mxu0 %v858
      %v1390 = vpop.f32.mrb[0].mxu0
      %v1391 = vadd.f32 %v343, %v1390
      %v1392 = vpop.f32.mrb[0].mxu0
      %v1393 = vpop.f32.mrb[0].mxu0
      %v1394 = vadd.f32 %v343, %v1393
      %v1395 = vpop.f32.mrb[0].mxu0
      %1396 = vmatprep.mubr.bf16.mxu0 0
      %1397 = vmatmul.mubr.bf16.gmra.mrb[0].mxu0 %v861
      %v1398 = vpop.f32.mrb[0].mxu0
      %v1399 = vadd.f32 %v343, %v1398
      %v1400 = vpop.f32.mrb[0].mxu0
      %v1401 = vpop.f32.mrb[0].mxu0
      %v1402 = vadd.f32 %v343, %v1401
      %v1403 = vpop.f32.mrb[0].mxu0
      %1404 = vmatprep.mubr.bf16.mxu0 0
      %1405 = vmatmul.mubr.bf16.gmra.mrb[0].mxu0 %v864
      %v1406 = vpop.f32.mrb[0].mxu0
      %v1407 = vadd.f32 %v343, %v1406
      %v1408 = vpop.f32.mrb[0].mxu0
      %v1409 = vpop.f32.mrb[0].mxu0
      %v1410 = vadd.f32 %v343, %v1409
      %v1411 = vpop.f32.mrb[0].mxu0
      %1412 = vmatprep.mubr.bf16.mxu0 0
      %1413 = vmatmul.mubr.bf16.gmra.mrb[0].mxu0 %v867
      %v1414 = vpop.f32.mrb[0].mxu0
      %v1415 = vadd.f32 %v343, %v1414
      %v1416 = vpop.f32.mrb[0].mxu0
      %v1417 = vpop.f32.mrb[0].mxu0
      %v1418 = vadd.f32 %v343, %v1417
      %v1419 = vpop.f32.mrb[0].mxu0
      %1420 = vdwg.mxu0
      %v1421 = vmax.f32 %v911, 0.0
      %v1422 = vmax.f32 %v914, 0.0
      %v1423 = vmax.f32 %v919, 0.0
      %v1424 = vmax.f32 %v922, 0.0
      %v1425 = vmax.f32 %v927, 0.0
      %v1426 = vmax.f32 %v930, 0.0
      %v1427 = vmax.f32 %v935, 0.0
      %v1428 = vmax.f32 %v938, 0.0
      %v1429 = vmax.f32 %v943, 0.0
      %v1430 = vmax.f32 %v946, 0.0
      %v1431 = vmax.f32 %v951, 0.0
      %v1432 = vmax.f32 %v954, 0.0
      %v1433 = vmax.f32 %v959, 0.0
      %v1434 = vmax.f32 %v962, 0.0
      %v1435 = vmax.f32 %v967, 0.0
      %v1436 = vmax.f32 %v970, 0.0
      %v1437 = vmax.f32 %v975, 0.0
      %v1438 = vmax.f32 %v978, 0.0
      %v1439 = vmax.f32 %v983, 0.0
      %v1440 = vmax.f32 %v986, 0.0
      %v1441 = vmax.f32 %v991, 0.0
      %v1442 = vmax.f32 %v994, 0.0
      %v1443 = vmax.f32 %v999, 0.0
      %v1444 = vmax.f32 %v1002, 0.0
      %v1445 = vmax.f32 %v1007, 0.0
      %v1446 = vmax.f32 %v1010, 0.0
      %v1447 = vmax.f32 %v1015, 0.0
      %v1448 = vmax.f32 %v1018, 0.0
      %v1449 = vmax.f32 %v1023, 0.0
      %v1450 = vmax.f32 %v1026, 0.0
      %v1451 = vmax.f32 %v1031, 0.0
      %v1452 = vmax.f32 %v1034, 0.0
      %v1453 = vmax.f32 %v1039, 0.0
      %v1454 = vmax.f32 %v1042, 0.0
      %v1455 = vmax.f32 %v1047, 0.0
      %v1456 = vmax.f32 %v1050, 0.0
      %v1457 = vmax.f32 %v1055, 0.0
      %v1458 = vmax.f32 %v1058, 0.0
      %v1459 = vmax.f32 %v1063, 0.0
      %v1460 = vmax.f32 %v1066, 0.0
      %v1461 = vmax.f32 %v1071, 0.0
      %v1462 = vmax.f32 %v1074, 0.0
      %v1463 = vmax.f32 %v1079, 0.0
      %v1464 = vmax.f32 %v1082, 0.0
      %v1465 = vmax.f32 %v1087, 0.0
      %v1466 = vmax.f32 %v1090, 0.0
      %v1467 = vmax.f32 %v1095, 0.0
      %v1468 = vmax.f32 %v1098, 0.0
      %v1469 = vmax.f32 %v1103, 0.0
      %v1470 = vmax.f32 %v1106, 0.0
      %v1471 = vmax.f32 %v1111, 0.0
      %v1472 = vmax.f32 %v1114, 0.0
      %v1473 = vmax.f32 %v1119, 0.0
      %v1474 = vmax.f32 %v1122, 0.0
      %v1475 = vmax.f32 %v1127, 0.0
      %v1476 = vmax.f32 %v1130, 0.0
      %v1477 = vmax.f32 %v1135, 0.0
      %v1478 = vmax.f32 %v1138, 0.0
      %v1479 = vmax.f32 %v1143, 0.0
      %v1480 = vmax.f32 %v1146, 0.0
      %v1481 = vmax.f32 %v1151, 0.0
      %v1482 = vmax.f32 %v1154, 0.0
      %v1483 = vmax.f32 %v1159, 0.0
      %v1484 = vmax.f32 %v1162, 0.0
      %v1485 = vmax.f32 %v1167, 0.0
      %v1486 = vmax.f32 %v1170, 0.0
      %v1487 = vmax.f32 %v1175, 0.0
      %v1488 = vmax.f32 %v1178, 0.0
      %v1489 = vmax.f32 %v1183, 0.0
      %v1490 = vmax.f32 %v1186, 0.0
      %v1491 = vmax.f32 %v1191, 0.0
      %v1492 = vmax.f32 %v1194, 0.0
      %v1493 = vmax.f32 %v1199, 0.0
      %v1494 = vmax.f32 %v1202, 0.0
      %v1495 = vmax.f32 %v1207, 0.0
      %v1496 = vmax.f32 %v1210, 0.0
      %v1497 = vmax.f32 %v1215, 0.0
      %v1498 = vmax.f32 %v1218, 0.0
      %v1499 = vmax.f32 %v1223, 0.0
      %v1500 = vmax.f32 %v1226, 0.0
      %v1501 = vmax.f32 %v1231, 0.0
      %v1502 = vmax.f32 %v1234, 0.0
      %v1503 = vmax.f32 %v1239, 0.0
      %v1504 = vmax.f32 %v1242, 0.0
      %v1505 = vmax.f32 %v1247, 0.0
      %v1506 = vmax.f32 %v1250, 0.0
      %v1507 = vmax.f32 %v1255, 0.0
      %v1508 = vmax.f32 %v1258, 0.0
      %v1509 = vmax.f32 %v1263, 0.0
      %v1510 = vmax.f32 %v1266, 0.0
      %v1511 = vmax.f32 %v1271, 0.0
      %v1512 = vmax.f32 %v1274, 0.0
      %v1513 = vmax.f32 %v1279, 0.0
      %v1514 = vmax.f32 %v1282, 0.0
      %v1515 = vmax.f32 %v1287, 0.0
      %v1516 = vmax.f32 %v1290, 0.0
      %v1517 = vmax.f32 %v1295, 0.0
      %v1518 = vmax.f32 %v1298, 0.0
      %v1519 = vmax.f32 %v1303, 0.0
      %v1520 = vmax.f32 %v1306, 0.0
      %v1521 = vmax.f32 %v1311, 0.0
      %v1522 = vmax.f32 %v1314, 0.0
      %v1523 = vmax.f32 %v1319, 0.0
      %v1524 = vmax.f32 %v1322, 0.0
      %v1525 = vmax.f32 %v1327, 0.0
      %v1526 = vmax.f32 %v1330, 0.0
      %v1527 = vmax.f32 %v1335, 0.0
      %v1528 = vmax.f32 %v1338, 0.0
      %v1529 = vmax.f32 %v1343, 0.0
      %v1530 = vmax.f32 %v1346, 0.0
      %v1531 = vmax.f32 %v1351, 0.0
      %v1532 = vmax.f32 %v1354, 0.0
      %v1533 = vmax.f32 %v1359, 0.0
      %v1534 = vmax.f32 %v1362, 0.0
      %v1535 = vmax.f32 %v1367, 0.0
      %v1536 = vmax.f32 %v1370, 0.0
      %v1537 = vmax.f32 %v1375, 0.0
      %v1538 = vmax.f32 %v1378, 0.0
      %v1539 = vmax.f32 %v1383, 0.0
      %v1540 = vmax.f32 %v1386, 0.0
      %v1541 = vmax.f32 %v1391, 0.0
      %v1542 = vmax.f32 %v1394, 0.0
      %v1543 = vmax.f32 %v1399, 0.0
      %v1544 = vmax.f32 %v1402, 0.0
      %v1545 = vmax.f32 %v1407, 0.0
      %v1546 = vmax.f32 %v1410, 0.0
      %v1547 = vmax.f32 %v1415, 0.0
      %v1548 = vmax.f32 %v1418, 0.0
      %v1549 = vmax.f32 %v1421, %v1429
      %v1550 = vmax.f32 %v1549, %v1437
      %v1551 = vmax.f32 %v1550, %v1445
      %v1552 = vmax.f32 %v1551, %v1453
      %v1553 = vmax.f32 %v1552, %v1461
      %v1554 = vmax.f32 %v1553, %v1469
      %v1555 = vmax.f32 %v1554, %v1477
      %v1556 = vmax.f32 %v1555, %v1485
      %v1557 = vmax.f32 %v1556, %v1493
      %v1558 = vmax.f32 %v1557, %v1501
      %v1559 = vmax.f32 %v1558, %v1509
      %v1560 = vmax.f32 %v1559, %v1517
      %v1561 = vmax.f32 %v1560, %v1525
      %v1562 = vmax.f32 %v1561, %v1533
      %v1563 = vmax.f32 %v1562, %v1541
      %v1564 = vmax.f32 %v1422, %v1430
      %v1565 = vmax.f32 %v1564, %v1438
      %v1566 = vmax.f32 %v1565, %v1446
      %v1567 = vmax.f32 %v1566, %v1454
      %v1568 = vmax.f32 %v1567, %v1462
      %v1569 = vmax.f32 %v1568, %v1470
      %v1570 = vmax.f32 %v1569, %v1478
      %v1571 = vmax.f32 %v1570, %v1486
      %v1572 = vmax.f32 %v1571, %v1494
      %v1573 = vmax.f32 %v1572, %v1502
      %v1574 = vmax.f32 %v1573, %v1510
      %v1575 = vmax.f32 %v1574, %v1518
      %v1576 = vmax.f32 %v1575, %v1526
      %v1577 = vmax.f32 %v1576, %v1534
      %v1578 = vmax.f32 %v1577, %v1542
      %v1579 = vmax.f32 %v1423, %v1431
      %v1580 = vmax.f32 %v1579, %v1439
      %v1581 = vmax.f32 %v1580, %v1447
      %v1582 = vmax.f32 %v1581, %v1455
      %v1583 = vmax.f32 %v1582, %v1463
      %v1584 = vmax.f32 %v1583, %v1471
      %v1585 = vmax.f32 %v1584, %v1479
      %v1586 = vmax.f32 %v1585, %v1487
      %v1587 = vmax.f32 %v1586, %v1495
      %v1588 = vmax.f32 %v1587, %v1503
      %v1589 = vmax.f32 %v1588, %v1511
      %v1590 = vmax.f32 %v1589, %v1519
      %v1591 = vmax.f32 %v1590, %v1527
      %v1592 = vmax.f32 %v1591, %v1535
      %v1593 = vmax.f32 %v1592, %v1543
      %v1594 = vmax.f32 %v1424, %v1432
      %v1595 = vmax.f32 %v1594, %v1440
      %v1596 = vmax.f32 %v1595, %v1448
      %v1597 = vmax.f32 %v1596, %v1456
      %v1598 = vmax.f32 %v1597, %v1464
      %v1599 = vmax.f32 %v1598, %v1472
      %v1600 = vmax.f32 %v1599, %v1480
      %v1601 = vmax.f32 %v1600, %v1488
      %v1602 = vmax.f32 %v1601, %v1496
      %v1603 = vmax.f32 %v1602, %v1504
      %v1604 = vmax.f32 %v1603, %v1512
      %v1605 = vmax.f32 %v1604, %v1520
      %v1606 = vmax.f32 %v1605, %v1528
      %v1607 = vmax.f32 %v1606, %v1536
      %v1608 = vmax.f32 %v1607, %v1544
      %v1609 = vmax.f32 %v1425, %v1433
      %v1610 = vmax.f32 %v1609, %v1441
      %v1611 = vmax.f32 %v1610, %v1449
      %v1612 = vmax.f32 %v1611, %v1457
      %v1613 = vmax.f32 %v1612, %v1465
      %v1614 = vmax.f32 %v1613, %v1473
      %v1615 = vmax.f32 %v1614, %v1481
      %v1616 = vmax.f32 %v1615, %v1489
      %v1617 = vmax.f32 %v1616, %v1497
      %v1618 = vmax.f32 %v1617, %v1505
      %v1619 = vmax.f32 %v1618, %v1513
      %v1620 = vmax.f32 %v1619, %v1521
      %v1621 = vmax.f32 %v1620, %v1529
      %v1622 = vmax.f32 %v1621, %v1537
      %v1623 = vmax.f32 %v1622, %v1545
      %v1624 = vmax.f32 %v1426, %v1434
      %v1625 = vmax.f32 %v1624, %v1442
      %v1626 = vmax.f32 %v1625, %v1450
      %v1627 = vmax.f32 %v1626, %v1458
      %v1628 = vmax.f32 %v1627, %v1466
      %v1629 = vmax.f32 %v1628, %v1474
      %v1630 = vmax.f32 %v1629, %v1482
      %v1631 = vmax.f32 %v1630, %v1490
      %v1632 = vmax.f32 %v1631, %v1498
      %v1633 = vmax.f32 %v1632, %v1506
      %v1634 = vmax.f32 %v1633, %v1514
      %v1635 = vmax.f32 %v1634, %v1522
      %v1636 = vmax.f32 %v1635, %v1530
      %v1637 = vmax.f32 %v1636, %v1538
      %v1638 = vmax.f32 %v1637, %v1546
      %v1639 = vmax.f32 %v1427, %v1435
      %v1640 = vmax.f32 %v1639, %v1443
      %v1641 = vmax.f32 %v1640, %v1451
      %v1642 = vmax.f32 %v1641, %v1459
      %v1643 = vmax.f32 %v1642, %v1467
      %v1644 = vmax.f32 %v1643, %v1475
      %v1645 = vmax.f32 %v1644, %v1483
      %v1646 = vmax.f32 %v1645, %v1491
      %v1647 = vmax.f32 %v1646, %v1499
      %v1648 = vmax.f32 %v1647, %v1507
      %v1649 = vmax.f32 %v1648, %v1515
      %v1650 = vmax.f32 %v1649, %v1523
      %v1651 = vmax.f32 %v1650, %v1531
      %v1652 = vmax.f32 %v1651, %v1539
      %v1653 = vmax.f32 %v1652, %v1547
      %v1654 = vmax.f32 %v1428, %v1436
      %v1655 = vmax.f32 %v1654, %v1444
      %v1656 = vmax.f32 %v1655, %v1452
      %v1657 = vmax.f32 %v1656, %v1460
      %v1658 = vmax.f32 %v1657, %v1468
      %v1659 = vmax.f32 %v1658, %v1476
      %v1660 = vmax.f32 %v1659, %v1484
      %v1661 = vmax.f32 %v1660, %v1492
      %v1662 = vmax.f32 %v1661, %v1500
      %v1663 = vmax.f32 %v1662, %v1508
      %v1664 = vmax.f32 %v1663, %v1516
      %v1665 = vmax.f32 %v1664, %v1524
      %v1666 = vmax.f32 %v1665, %v1532
      %v1667 = vmax.f32 %v1666, %v1540
      %v1668 = vmax.f32 %v1667, %v1548
      %v1669 = vmax.f32 %v1563, %v1578
      %v1670 = vrot.slane %v1669, 4
      %v1671 = vmax.f32 %v1669, %v1670
      %v1672 = vrot.slane %v1671, 2
      %v1673 = vmax.f32 %v1671, %v1672
      %v1674 = vrot.slane %v1673, 1
      %v1675 = vmax.f32 %v1673, %v1674
      %v1676 = vmax.f32 %v1593, %v1608
      %v1677 = vrot.slane %v1676, 4
      %v1678 = vmax.f32 %v1676, %v1677
      %v1679 = vrot.slane %v1678, 2
      %v1680 = vmax.f32 %v1678, %v1679
      %v1681 = vrot.slane %v1680, 1
      %v1682 = vmax.f32 %v1680, %v1681
      %v1683 = vmax.f32 %v1623, %v1638
      %v1684 = vrot.slane %v1683, 4
      %v1685 = vmax.f32 %v1683, %v1684
      %v1686 = vrot.slane %v1685, 2
      %v1687 = vmax.f32 %v1685, %v1686
      %v1688 = vrot.slane %v1687, 1
      %v1689 = vmax.f32 %v1687, %v1688
      %v1690 = vmax.f32 %v1653, %v1668
      %v1691 = vrot.slane %v1690, 4
      %v1692 = vmax.f32 %v1690, %v1691
      %v1693 = vrot.slane %v1692, 2
      %v1694 = vmax.f32 %v1692, %v1693
      %v1695 = vrot.slane %v1694, 1
      %v1696 = vmax.f32 %v1694, %v1695
      %v1697 = vpack.c.bf16 %v1675, %v1675
      %v1698 = vpack.c.bf16 %v1682, %v1682
      %v1699 = vpack.c.bf16 %v1689, %v1689
      %v1700 = vpack.c.bf16 %v1696, %v1696
      %v1706 = vunpack.c.l.s4 1983009808
      %v1707 = vunpack.c.0.s8 %v1706
      %v1708 = vlaneseq
      %v1709 = vshrl.u32 %v1708, 7
      %v1710 = vsub.s32 %v1707, %v1709
      %v1711 = vrot.slane %v1697, %v1710
      %v1713 = vunpack.c.l.s4 1983009808
      %v1714 = vunpack.c.0.s8 %v1713
      %v1715 = vlaneseq
      %v1716 = vshrl.u32 %v1715, 7
      %v1717 = vsub.s32 %v1714, %v1716
      %v1718 = vrot.slane %v1698, %v1717
      %v1720 = vunpack.c.l.s4 1983009808
      %v1721 = vunpack.c.0.s8 %v1720
      %v1722 = vlaneseq
      %v1723 = vshrl.u32 %v1722, 7
      %v1724 = vsub.s32 %v1721, %v1723
      %v1725 = vrot.slane %v1699, %v1724
      %v1727 = vunpack.c.l.s4 1983009808
      %v1728 = vunpack.c.0.s8 %v1727
      %v1729 = vlaneseq
      %v1730 = vshrl.u32 %v1729, 7
      %v1731 = vsub.s32 %v1728, %v1730
      %v1732 = vrot.slane %v1700, %v1731
      %v1734 = vunpack.c.l.s4 1983009808
      %v1735 = vunpack.c.0.s8 %v1734
      %v1736 = vlaneseq
      %v1737 = vshrl.u32 %v1736, 7
      %v1738 = vsub.s32 %v1735, %v1737
      %v1739 = vrot.slane %v1711, %v1738
      %v1741 = vunpack.c.l.s4 1983009808
      %v1742 = vunpack.c.0.s8 %v1741
      %v1743 = vlaneseq
      %v1744 = vshrl.u32 %v1743, 7
      %v1745 = vsub.s32 %v1742, %v1744
      %v1746 = vrot.slane %v1718, %v1745
      %v1748 = vunpack.c.l.s4 1983009808
      %v1749 = vunpack.c.0.s8 %v1748
      %v1750 = vlaneseq
      %v1751 = vshrl.u32 %v1750, 7
      %v1752 = vsub.s32 %v1749, %v1751
      %v1753 = vrot.slane %v1725, %v1752
      %v1755 = vunpack.c.l.s4 1983009808
      %v1756 = vunpack.c.0.s8 %v1755
      %v1757 = vlaneseq
      %v1758 = vshrl.u32 %v1757, 7
      %v1759 = vsub.s32 %v1756, %v1758
      %v1760 = vrot.slane %v1732, %v1759
      %v1761 = vunpack.c.l.b16 %v1739
      %v1762 = vunpack.c.l.b16 %v1746
      %v1763 = vunpack.c.l.b16 %v1753
      %v1764 = vunpack.c.l.b16 %v1760
      %v1765 = vrot.slane %v1762, 7
      %vm1766 = vcmask 1041409
      %v1767 = vsel %vm1766, %v1765, %v1761
      %v1768 = vrot.slane %v1763, 6
      %vm1769 = vcmask 1042434
      %v1770 = vsel %vm1769, %v1768, %v1767
      %v1771 = vrot.slane %v1764, 5
      %vm1772 = vcmask 1043459
      %v1773 = vsel %vm1772, %v1771, %v1770
      %v1774 = vpack.c.b16 %v1773, %v1773
      %v1776 = vunpack.c.l.s4 1983009808
      %v1777 = vunpack.c.0.s8 %v1776
      %v1778 = vlaneseq
      %v1779 = vshrl.u32 %v1778, 7
      %v1780 = vsub.s32 %v1777, %v1779
      %v1781 = vrot.slane %v1774, %v1780
      %1783 = vst [vmem:[%s204] sm:$0x3] %v1781
      %p1784 = scmp.lt.s32.totalorder %s18, 1
      %s1785 = scalar_select %p1784, %s18, 1
      %p1786 = scmp.lt.s32.totalorder %s19, 3
      %s1787 = scalar_select %p1786, %s19, 3
      %s1788 = smul.addr %s1785, 4
      %s1789 = sadd.s32 %s1787, %s1788
      %s1790 = smul.addr %s1789, 2
      %s1791 = scalar_lea.vmem %s3, %s1790
      // Predicated region
      $region33: #{_forward_impl.3} parent=31 // pred_check
        %p1792 = pneg %p116
      $region34: #{_forward_impl.3} parent=31 // pred_check_branch
        %1794 = sbr.rel (%p1792) target = $region36
      $region35: #{_forward_impl.3} parent=31 // pred_region
        _
      $region36: #{_forward_impl.3} parent=31 // pred_fallthru
        _
    $region32: #{_forward_impl.3} parent=5 // pred_fallthru
      _
    %p1795 = scmp.le.s32.totalorder 2, %s9
    // Predicated region
    $region37: #{_forward_impl.3} parent=5 // pred_check
      %p1796 = pneg %p1795
    $region38: #{_forward_impl.3} parent=5 // pred_check_branch
      %1798 = sbr.rel (%p1796) target = $region40
    $region39: #{_forward_impl.3} parent=5 // pred_region
      %s1799 = ssub.s32 %s9, 2
      // Predicated region
      $region41: #{_forward_impl.3} parent=39 // pred_check
        %p1800 = pneg %p122
      $region42: #{_forward_impl.3} parent=39 // pred_check_branch
        %1802 = sbr.rel (%p1800) target = $region44
      $region43: #{_forward_impl.3} parent=39 // pred_region
        %p1803 = scmp.lt.s32.totalorder %s20, 1
        %s1804 = scalar_select %p1803, %s20, 1
        %p1805 = scmp.lt.s32.totalorder %s21, 3
        %s1806 = scalar_select %p1805, %s21, 3
        %s1807 = smul.addr %s1804, 4
        %s1808 = sadd.s32 %s1806, %s1807
        %s1809 = smul.addr %s1808, 2
        %s1810 = scalar_lea.vmem %s3, %s1809
      $region44: #{_forward_impl.3} parent=39 // pred_fallthru
        _
    $region40: #{_forward_impl.3} parent=5 // pred_fallthru
      _
  $region6: #{_forward_impl.3} parent=0 // loop_footer
    %s13 = sadd.s32 1, %s9
  $region7: #{_forward_impl.3} parent=0 // loop_footer_branch
    %8 = sbr.rel target = $region3
  $region8: #{_forward_impl.3} parent=0 // loop_exit
    _

// kernel: _forward_impl.5
$region0: #{_forward_impl.5}
  #allocation0 [shape = 'u32[]', space=smem, size = 0x4, offset = 0x4, fixed_abs, tag = 'smem constant byte address 0x4 - core index']
  #allocation1 [shape = 'u32[144,128]{1,0:T(1,128)}', space=vmem, size = 0x12000, scoped, tag = 'internal scratch']
  %s0 = inlined_call_operand.vmem [shape: bf16[16,1568], index: 0, kind: input, shape index: {}]
  %s1 = inlined_call_operand.vmem [shape: bf16[1568,128], index: 1, kind: input, shape index: {}]
  %s2 = inlined_call_operand.vmem [shape: f32[1,128], index: 2, kind: input, shape index: {}]
  %s3 = inlined_call_operand.vmem [shape: bf16[128,128], index: 3, kind: input, shape index: {}]
  %s4 = inlined_call_operand.vmem [shape: f32[1,128], index: 4, kind: input, shape index: {}]
  %s5 = inlined_call_operand.vmem [shape: bf16[128,128], index: 5, kind: input, shape index: {}]
  %s6 = inlined_call_operand.vmem [shape: f32[1,128], index: 6, kind: input, shape index: {}]
  %s7 = inlined_call_operand.vmem [shape: bf16[128,128], index: 7, kind: input, shape index: {}]
  %s8 = inlined_call_operand.vmem [shape: f32[1,128], index: 8, kind: input, shape index: {}]
  %s9 = inlined_call_operand.vmem [shape: f32[16,128], index: 9, kind: output, shape index: {0}]
  %s10 = inlined_call_operand.vmem [shape: f32[16,128], index: 10, kind: output, shape index: {1}]
  %11 = xla_tuple %s9, %s10
  %s12 = sld [smem:[#allocation0]]
  $region54: #{_forward_impl.5} parent=0
    _
  %s14 = ssub.s32 1, %s12
  %s15 = scalar_select 0, %s14, %s12
  // Predicated region
  $region2: #{_forward_impl.5} parent=0 // pred_check
    _
  $region3: #{_forward_impl.5} parent=0 // pred_check_branch
    %17 = sbr.rel (0) target = $region5
  $region4: #{_forward_impl.5} parent=0 // pred_region
    _
  $region5: #{_forward_impl.5} parent=0 // pred_fallthru
    _
  // Predicated region
  $region6: #{_forward_impl.5} parent=0 // pred_check
    _
  $region7: #{_forward_impl.5} parent=0 // pred_check_branch
    %19 = sbr.rel (0) target = $region9
  $region8: #{_forward_impl.5} parent=0 // pred_region
    _
  $region9: #{_forward_impl.5} parent=0 // pred_fallthru
    _
  // Predicated region
  $region10: #{_forward_impl.5} parent=0 // pred_check
    _
  $region11: #{_forward_impl.5} parent=0 // pred_check_branch
    %21 = sbr.rel (0) target = $region13
  $region12: #{_forward_impl.5} parent=0 // pred_region
    _
  $region13: #{_forward_impl.5} parent=0 // pred_fallthru
    _
  // Predicated region
  $region14: #{_forward_impl.5} parent=0 // pred_check
    _
  $region15: #{_forward_impl.5} parent=0 // pred_check_branch
    %23 = sbr.rel (0) target = $region17
  $region16: #{_forward_impl.5} parent=0 // pred_region
    _
  $region17: #{_forward_impl.5} parent=0 // pred_fallthru
    _
  // Predicated region
  $region18: #{_forward_impl.5} parent=0 // pred_check
    _
  $region19: #{_forward_impl.5} parent=0 // pred_check_branch
    %25 = sbr.rel (0) target = $region21
  $region20: #{_forward_impl.5} parent=0 // pred_region
    _
  $region21: #{_forward_impl.5} parent=0 // pred_fallthru
    _
  // Predicated region
  $region22: #{_forward_impl.5} parent=0 // pred_check
    _
  $region23: #{_forward_impl.5} parent=0 // pred_check_branch
    %27 = sbr.rel (0) target = $region25
  $region24: #{_forward_impl.5} parent=0 // pred_region
    _
  $region25: #{_forward_impl.5} parent=0 // pred_fallthru
    _
  // Predicated region
  $region26: #{_forward_impl.5} parent=0 // pred_check
    _
  $region27: #{_forward_impl.5} parent=0 // pred_check_branch
    %29 = sbr.rel (0) target = $region29
  $region28: #{_forward_impl.5} parent=0 // pred_region
    _
  $region29: #{_forward_impl.5} parent=0 // pred_fallthru
    _
  // Predicated region
  $region30: #{_forward_impl.5} parent=0 // pred_check
    _
  $region31: #{_forward_impl.5} parent=0 // pred_check_branch
    %31 = sbr.rel (0) target = $region33
  $region32: #{_forward_impl.5} parent=0 // pred_region
    _
  $region33: #{_forward_impl.5} parent=0 // pred_fallthru
    _
  // Predicated region
  $region34: #{_forward_impl.5} parent=0 // pred_check
    _
  $region35: #{_forward_impl.5} parent=0 // pred_check_branch
    %33 = sbr.rel (0) target = $region37
  $region36: #{_forward_impl.5} parent=0 // pred_region
    _
  $region37: #{_forward_impl.5} parent=0 // pred_fallthru
    _
  %v35 = vld [vmem:[%s0] sm:$0xff]
  %v36 = vld [vmem:[%s0 + $0x8] sm:$0xff]
  %v37 = vld [vmem:[%s0 + $0x10] sm:$0xff]
  %v38 = vld [vmem:[%s0 + $0x18] sm:$0xff]
  %v39 = vld [vmem:[%s0 + $0x20] sm:$0xff]
  %v40 = vld [vmem:[%s0 + $0x28] sm:$0xff]
  %v41 = vld [vmem:[%s0 + $0x30] sm:$0xf]
  %v42 = vld [vmem:[%s0 + $0x34] sm:$0xff]
  %v43 = vld [vmem:[%s0 + $0x3c] sm:$0xff]
  %v44 = vld [vmem:[%s0 + $0x44] sm:$0xff]
  %v45 = vld [vmem:[%s0 + $0x4c] sm:$0xff]
  %v46 = vld [vmem:[%s0 + $0x54] sm:$0xff]
  %v47 = vld [vmem:[%s0 + $0x5c] sm:$0xff]
  %v48 = vld [vmem:[%s0 + $0x64] sm:$0xf]
  %v49 = vld [vmem:[%s1] sm:$0xf]
  %v50 = vld [vmem:[%s1 + $0x4] sm:$0xf]
  %v51 = vld [vmem:[%s1 + $0x8] sm:$0xf]
  %v52 = vld [vmem:[%s1 + $0xc] sm:$0xf]
  %v53 = vld [vmem:[%s1 + $0x10] sm:$0xf]
  %v54 = vld [vmem:[%s1 + $0x14] sm:$0xf]
  %v55 = vld [vmem:[%s1 + $0x18] sm:$0xf]
  %v56 = vld [vmem:[%s1 + $0x1c] sm:$0xf]
  %v57 = vld [vmem:[%s1 + $0x20] sm:$0xf]
  %v58 = vld [vmem:[%s1 + $0x24] sm:$0xf]
  %v59 = vld [vmem:[%s1 + $0x28] sm:$0xf]
  %v60 = vld [vmem:[%s1 + $0x2c] sm:$0xf]
  %v61 = vld [vmem:[%s1 + $0x30] sm:$0xf]
  %v62 = vld [vmem:[%s1 + $0x34] sm:$0xf]
  %v63 = vld [vmem:[%s1 + $0x38] sm:$0xf]
  %v64 = vld [vmem:[%s1 + $0x3c] sm:$0xf]
  %v65 = vld [vmem:[%s1 + $0x40] sm:$0xf]
  %v66 = vld [vmem:[%s1 + $0x44] sm:$0xf]
  %v67 = vld [vmem:[%s1 + $0x48] sm:$0xf]
  %v68 = vld [vmem:[%s1 + $0x4c] sm:$0xf]
  %v69 = vld [vmem:[%s1 + $0x50] sm:$0xf]
  %v70 = vld [vmem:[%s1 + $0x54] sm:$0xf]
  %v71 = vld [vmem:[%s1 + $0x58] sm:$0xf]
  %v72 = vld [vmem:[%s1 + $0x5c] sm:$0xf]
  %v73 = vld [vmem:[%s1 + $0x60] sm:$0xf]
  %v74 = vld [vmem:[%s1 + $0x64] sm:$0xf]
  %v75 = vld [vmem:[%s1 + $0x68] sm:$0xf]
  %v76 = vld [vmem:[%s1 + $0x6c] sm:$0xf]
  %v77 = vld [vmem:[%s1 + $0x70] sm:$0xf]
  %v78 = vld [vmem:[%s1 + $0x74] sm:$0xf]
  %v79 = vld [vmem:[%s1 + $0x78] sm:$0xf]
  %v80 = vld [vmem:[%s1 + $0x7c] sm:$0xf]
  %v81 = vld [vmem:[%s1 + $0x80] sm:$0xf]
  %v82 = vld [vmem:[%s1 + $0x84] sm:$0xf]
  %v83 = vld [vmem:[%s1 + $0x88] sm:$0xf]
  %v84 = vld [vmem:[%s1 + $0x8c] sm:$0xf]
  %v85 = vld [vmem:[%s1 + $0x90] sm:$0xf]
  %v86 = vld [vmem:[%s1 + $0x94] sm:$0xf]
  %v87 = vld [vmem:[%s1 + $0x98] sm:$0xf]
  %v88 = vld [vmem:[%s1 + $0x9c] sm:$0xf]
  %v89 = vld [vmem:[%s1 + $0xa0] sm:$0xf]
  %v90 = vld [vmem:[%s1 + $0xa4] sm:$0xf]
  %v91 = vld [vmem:[%s1 + $0xa8] sm:$0xf]
  %v92 = vld [vmem:[%s1 + $0xac] sm:$0xf]
  %v93 = vld [vmem:[%s1 + $0xb0] sm:$0xf]
  %v94 = vld [vmem:[%s1 + $0xb4] sm:$0xf]
  %v95 = vld [vmem:[%s1 + $0xb8] sm:$0xf]
  %v96 = vld [vmem:[%s1 + $0xbc] sm:$0xf]
  %v97 = vld [vmem:[%s1 + $0xc0] sm:$0xf]
  %v98 = vld [vmem:[%s1 + $0xc4] sm:$0xf]
  %v99 = vld [vmem:[%s1 + $0xc8] sm:$0xf]
  %v100 = vld [vmem:[%s1 + $0xcc] sm:$0xf]
  %v101 = vld [vmem:[%s1 + $0xd0] sm:$0xf]
  %v102 = vld [vmem:[%s1 + $0xd4] sm:$0xf]
  %v103 = vld [vmem:[%s1 + $0xd8] sm:$0xf]
  %v104 = vld [vmem:[%s1 + $0xdc] sm:$0xf]
  %v105 = vld [vmem:[%s1 + $0xe0] sm:$0xf]
  %v106 = vld [vmem:[%s1 + $0xe4] sm:$0xf]
  %v107 = vld [vmem:[%s1 + $0xe8] sm:$0xf]
  %v108 = vld [vmem:[%s1 + $0xec] sm:$0xf]
  %v109 = vld [vmem:[%s1 + $0xf0] sm:$0xf]
  %v110 = vld [vmem:[%s1 + $0xf4] sm:$0xf]
  %v111 = vld [vmem:[%s1 + $0xf8] sm:$0xf]
  %v112 = vld [vmem:[%s1 + $0xfc] sm:$0xf]
  %v113 = vld [vmem:[%s1 + $0x100] sm:$0xf]
  %v114 = vld [vmem:[%s1 + $0x104] sm:$0xf]
  %v115 = vld [vmem:[%s1 + $0x108] sm:$0xf]
  %v116 = vld [vmem:[%s1 + $0x10c] sm:$0xf]
  %v117 = vld [vmem:[%s1 + $0x110] sm:$0xf]
  %v118 = vld [vmem:[%s1 + $0x114] sm:$0xf]
  %v119 = vld [vmem:[%s1 + $0x118] sm:$0xf]
  %v120 = vld [vmem:[%s1 + $0x11c] sm:$0xf]
  %v121 = vld [vmem:[%s1 + $0x120] sm:$0xf]
  %v122 = vld [vmem:[%s1 + $0x124] sm:$0xf]
  %v123 = vld [vmem:[%s1 + $0x128] sm:$0xf]
  %v124 = vld [vmem:[%s1 + $0x12c] sm:$0xf]
  %v125 = vld [vmem:[%s1 + $0x130] sm:$0xf]
  %v126 = vld [vmem:[%s1 + $0x134] sm:$0xf]
  %v127 = vld [vmem:[%s1 + $0x138] sm:$0xf]
  %v128 = vld [vmem:[%s1 + $0x13c] sm:$0xf]
  %v129 = vld [vmem:[%s1 + $0x140] sm:$0xf]
  %v130 = vld [vmem:[%s1 + $0x144] sm:$0xf]
  %v131 = vld [vmem:[%s1 + $0x148] sm:$0xf]
  %v132 = vld [vmem:[%s1 + $0x14c] sm:$0xf]
  %v133 = vld [vmem:[%s1 + $0x150] sm:$0xf]
  %v134 = vld [vmem:[%s1 + $0x154] sm:$0xf]
  %v135 = vld [vmem:[%s1 + $0x158] sm:$0xf]
  %v136 = vld [vmem:[%s1 + $0x15c] sm:$0xf]
  %v137 = vld [vmem:[%s1 + $0x160] sm:$0xf]
  %v138 = vld [vmem:[%s1 + $0x164] sm:$0xf]
  %v139 = vld [vmem:[%s1 + $0x168] sm:$0xf]
  %v140 = vld [vmem:[%s1 + $0x16c] sm:$0xf]
  %v141 = vld [vmem:[%s1 + $0x170] sm:$0xf]
  %v142 = vld [vmem:[%s1 + $0x174] sm:$0xf]
  %v143 = vld [vmem:[%s1 + $0x178] sm:$0xf]
  %v144 = vld [vmem:[%s1 + $0x17c] sm:$0xf]
  %v145 = vld [vmem:[%s1 + $0x180] sm:$0xf]
  %v146 = vld [vmem:[%s1 + $0x184] sm:$0xf]
  %v147 = vld [vmem:[%s1 + $0x188] sm:$0xf]
  %v148 = vld [vmem:[%s1 + $0x18c] sm:$0xf]
  %v149 = vld [vmem:[%s1 + $0x190] sm:$0xf]
  %v150 = vld [vmem:[%s1 + $0x194] sm:$0xf]
  %v151 = vld [vmem:[%s1 + $0x198] sm:$0xf]
  %v152 = vld [vmem:[%s1 + $0x19c] sm:$0xf]
  %v153 = vld [vmem:[%s1 + $0x1a0] sm:$0xf]
  %v154 = vld [vmem:[%s1 + $0x1a4] sm:$0xf]
  %v155 = vld [vmem:[%s1 + $0x1a8] sm:$0xf]
  %v156 = vld [vmem:[%s1 + $0x1ac] sm:$0xf]
  %v157 = vld [vmem:[%s1 + $0x1b0] sm:$0xf]
  %v158 = vld [vmem:[%s1 + $0x1b4] sm:$0xf]
  %v159 = vld [vmem:[%s1 + $0x1b8] sm:$0xf]
  %v160 = vld [vmem:[%s1 + $0x1bc] sm:$0xf]
  %v161 = vld [vmem:[%s1 + $0x1c0] sm:$0xf]
  %v162 = vld [vmem:[%s1 + $0x1c4] sm:$0xf]
  %v163 = vld [vmem:[%s1 + $0x1c8] sm:$0xf]
  %v164 = vld [vmem:[%s1 + $0x1cc] sm:$0xf]
  %v165 = vld [vmem:[%s1 + $0x1d0] sm:$0xf]
  %v166 = vld [vmem:[%s1 + $0x1d4] sm:$0xf]
  %v167 = vld [vmem:[%s1 + $0x1d8] sm:$0xf]
  %v168 = vld [vmem:[%s1 + $0x1dc] sm:$0xf]
  %v169 = vld [vmem:[%s1 + $0x1e0] sm:$0xf]
  %v170 = vld [vmem:[%s1 + $0x1e4] sm:$0xf]
  %v171 = vld [vmem:[%s1 + $0x1e8] sm:$0xf]
  %v172 = vld [vmem:[%s1 + $0x1ec] sm:$0xf]
  %v173 = vld [vmem:[%s1 + $0x1f0] sm:$0xf]
  %v174 = vld [vmem:[%s1 + $0x1f4] sm:$0xf]
  %v175 = vld [vmem:[%s1 + $0x1f8] sm:$0xf]
  %v176 = vld [vmem:[%s1 + $0x1fc] sm:$0xf]
  %v177 = vld [vmem:[%s1 + $0x200] sm:$0xf]
  %v178 = vld [vmem:[%s1 + $0x204] sm:$0xf]
  %v179 = vld [vmem:[%s1 + $0x208] sm:$0xf]
  %v180 = vld [vmem:[%s1 + $0x20c] sm:$0xf]
  %v181 = vld [vmem:[%s1 + $0x210] sm:$0xf]
  %v182 = vld [vmem:[%s1 + $0x214] sm:$0xf]
  %v183 = vld [vmem:[%s1 + $0x218] sm:$0xf]
  %v184 = vld [vmem:[%s1 + $0x21c] sm:$0xf]
  %v185 = vld [vmem:[%s1 + $0x220] sm:$0xf]
  %v186 = vld [vmem:[%s1 + $0x224] sm:$0xf]
  %v187 = vld [vmem:[%s1 + $0x228] sm:$0xf]
  %v188 = vld [vmem:[%s1 + $0x22c] sm:$0xf]
  %v189 = vld [vmem:[%s1 + $0x230] sm:$0xf]
  %v190 = vld [vmem:[%s1 + $0x234] sm:$0xf]
  %v191 = vld [vmem:[%s1 + $0x238] sm:$0xf]
  %v192 = vld [vmem:[%s1 + $0x23c] sm:$0xf]
  %v193 = vld [vmem:[%s1 + $0x240] sm:$0xf]
  %v194 = vld [vmem:[%s1 + $0x244] sm:$0xf]
  %v195 = vld [vmem:[%s1 + $0x248] sm:$0xf]
  %v196 = vld [vmem:[%s1 + $0x24c] sm:$0xf]
  %v197 = vld [vmem:[%s1 + $0x250] sm:$0xf]
  %v198 = vld [vmem:[%s1 + $0x254] sm:$0xf]
  %v199 = vld [vmem:[%s1 + $0x258] sm:$0xf]
  %v200 = vld [vmem:[%s1 + $0x25c] sm:$0xf]
  %v201 = vld [vmem:[%s1 + $0x260] sm:$0xf]
  %v202 = vld [vmem:[%s1 + $0x264] sm:$0xf]
  %v203 = vld [vmem:[%s1 + $0x268] sm:$0xf]
  %v204 = vld [vmem:[%s1 + $0x26c] sm:$0xf]
  %v205 = vld [vmem:[%s1 + $0x270] sm:$0xf]
  %v206 = vld [vmem:[%s1 + $0x274] sm:$0xf]
  %v207 = vld [vmem:[%s1 + $0x278] sm:$0xf]
  %v208 = vld [vmem:[%s1 + $0x27c] sm:$0xf]
  %v209 = vld [vmem:[%s1 + $0x280] sm:$0xf]
  %v210 = vld [vmem:[%s1 + $0x284] sm:$0xf]
  %v211 = vld [vmem:[%s1 + $0x288] sm:$0xf]
  %v212 = vld [vmem:[%s1 + $0x28c] sm:$0xf]
  %v213 = vld [vmem:[%s1 + $0x290] sm:$0xf]
  %v214 = vld [vmem:[%s1 + $0x294] sm:$0xf]
  %v215 = vld [vmem:[%s1 + $0x298] sm:$0xf]
  %v216 = vld [vmem:[%s1 + $0x29c] sm:$0xf]
  %v217 = vld [vmem:[%s1 + $0x2a0] sm:$0xf]
  %v218 = vld [vmem:[%s1 + $0x2a4] sm:$0xf]
  %v219 = vld [vmem:[%s1 + $0x2a8] sm:$0xf]
  %v220 = vld [vmem:[%s1 + $0x2ac] sm:$0xf]
  %v221 = vld [vmem:[%s1 + $0x2b0] sm:$0xf]
  %v222 = vld [vmem:[%s1 + $0x2b4] sm:$0xf]
  %v223 = vld [vmem:[%s1 + $0x2b8] sm:$0xf]
  %v224 = vld [vmem:[%s1 + $0x2bc] sm:$0xf]
  %v225 = vld [vmem:[%s1 + $0x2c0] sm:$0xf]
  %v226 = vld [vmem:[%s1 + $0x2c4] sm:$0xf]
  %v227 = vld [vmem:[%s1 + $0x2c8] sm:$0xf]
  %v228 = vld [vmem:[%s1 + $0x2cc] sm:$0xf]
  %v229 = vld [vmem:[%s1 + $0x2d0] sm:$0xf]
  %v230 = vld [vmem:[%s1 + $0x2d4] sm:$0xf]
  %v231 = vld [vmem:[%s1 + $0x2d8] sm:$0xf]
  %v232 = vld [vmem:[%s1 + $0x2dc] sm:$0xf]
  %v233 = vld [vmem:[%s1 + $0x2e0] sm:$0xf]
  %v234 = vld [vmem:[%s1 + $0x2e4] sm:$0xf]
  %v235 = vld [vmem:[%s1 + $0x2e8] sm:$0xf]
  %v236 = vld [vmem:[%s1 + $0x2ec] sm:$0xf]
  %v237 = vld [vmem:[%s1 + $0x2f0] sm:$0xf]
  %v238 = vld [vmem:[%s1 + $0x2f4] sm:$0xf]
  %v239 = vld [vmem:[%s1 + $0x2f8] sm:$0xf]
  %v240 = vld [vmem:[%s1 + $0x2fc] sm:$0xf]
  %v241 = vld [vmem:[%s1 + $0x300] sm:$0xf]
  %v242 = vld [vmem:[%s1 + $0x304] sm:$0xf]
  %v243 = vld [vmem:[%s1 + $0x308] sm:$0xf]
  %v244 = vld [vmem:[%s1 + $0x30c] sm:$0xf]
  %v245 = vld [vmem:[%s2] sm:$0x1]
  %v247 = vlaneseq
  %v248 = vshrl.u32 %v247, 7
  %v249 = vsub.s32 0, %v248
  %v250 = vrot.slane %v245, %v249
  %v266 = vunpack.c.l.b16 %v35
  %v267 = vunpack.c.h.b16 %v35
  %v268 = vunpack.c.l.b16 %v36
  %v269 = vunpack.c.h.b16 %v36
  %v270 = vunpack.c.l.b16 %v37
  %v271 = vunpack.c.h.b16 %v37
  %v272 = vunpack.c.l.b16 %v38
  %v273 = vunpack.c.h.b16 %v38
  %v274 = vunpack.c.l.b16 %v39
  %v275 = vunpack.c.h.b16 %v39
  %v276 = vunpack.c.l.b16 %v40
  %v277 = vunpack.c.h.b16 %v40
  %v278 = vunpack.c.l.b16 %v41
  %v279 = vunpack.c.l.b16 %v42
  %v280 = vunpack.c.h.b16 %v42
  %v281 = vunpack.c.l.b16 %v43
  %v282 = vunpack.c.h.b16 %v43
  %v283 = vunpack.c.l.b16 %v44
  %v284 = vunpack.c.h.b16 %v44
  %v285 = vunpack.c.l.b16 %v45
  %v286 = vunpack.c.h.b16 %v45
  %v287 = vunpack.c.l.b16 %v46
  %v288 = vunpack.c.h.b16 %v46
  %v289 = vunpack.c.l.b16 %v47
  %v290 = vunpack.c.h.b16 %v47
  %v291 = vunpack.c.l.b16 %v48
  %v292 = vpack.c.b16 %v279, %v266
  %v293 = vpack.c.b16 %v280, %v267
  %v294 = vpack.c.b16 %v281, %v268
  %v295 = vpack.c.b16 %v282, %v269
  %v296 = vpack.c.b16 %v283, %v270
  %v297 = vpack.c.b16 %v284, %v271
  %v298 = vpack.c.b16 %v285, %v272
  %v299 = vpack.c.b16 %v286, %v273
  %v300 = vpack.c.b16 %v287, %v274
  %v301 = vpack.c.b16 %v288, %v275
  %v302 = vpack.c.b16 %v289, %v276
  %v303 = vpack.c.b16 %v290, %v277
  %v304 = vpack.c.b16 %v291, %v278
  %v513 = vunpack.c.l.b16 %v49
  %v514 = vunpack.c.l.b16 %v50
  %v515 = vunpack.c.l.b16 %v51
  %v516 = vunpack.c.l.b16 %v52
  %v517 = vunpack.c.l.b16 %v53
  %v518 = vunpack.c.l.b16 %v54
  %v519 = vunpack.c.l.b16 %v55
  %v520 = vunpack.c.l.b16 %v56
  %v521 = vunpack.c.l.b16 %v57
  %v522 = vunpack.c.l.b16 %v58
  %v523 = vunpack.c.l.b16 %v59
  %v524 = vunpack.c.l.b16 %v60
  %v525 = vunpack.c.l.b16 %v61
  %v526 = vunpack.c.l.b16 %v62
  %v527 = vunpack.c.l.b16 %v63
  %v528 = vunpack.c.l.b16 %v64
  %v529 = vunpack.c.l.b16 %v65
  %v530 = vunpack.c.l.b16 %v66
  %v531 = vunpack.c.l.b16 %v67
  %v532 = vunpack.c.l.b16 %v68
  %v533 = vunpack.c.l.b16 %v69
  %v534 = vunpack.c.l.b16 %v70
  %v535 = vunpack.c.l.b16 %v71
  %v536 = vunpack.c.l.b16 %v72
  %v537 = vunpack.c.l.b16 %v73
  %v538 = vunpack.c.l.b16 %v74
  %v539 = vunpack.c.l.b16 %v75
  %v540 = vunpack.c.l.b16 %v76
  %v541 = vunpack.c.l.b16 %v77
  %v542 = vunpack.c.l.b16 %v78
  %v543 = vunpack.c.l.b16 %v79
  %v544 = vunpack.c.l.b16 %v80
  %v545 = vunpack.c.l.b16 %v81
  %v546 = vunpack.c.l.b16 %v82
  %v547 = vunpack.c.l.b16 %v83
  %v548 = vunpack.c.l.b16 %v84
  %v549 = vunpack.c.l.b16 %v85
  %v550 = vunpack.c.l.b16 %v86
  %v551 = vunpack.c.l.b16 %v87
  %v552 = vunpack.c.l.b16 %v88
  %v553 = vunpack.c.l.b16 %v89
  %v554 = vunpack.c.l.b16 %v90
  %v555 = vunpack.c.l.b16 %v91
  %v556 = vunpack.c.l.b16 %v92
  %v557 = vunpack.c.l.b16 %v93
  %v558 = vunpack.c.l.b16 %v94
  %v559 = vunpack.c.l.b16 %v95
  %v560 = vunpack.c.l.b16 %v96
  %v561 = vunpack.c.l.b16 %v97
  %v562 = vunpack.c.l.b16 %v98
  %v563 = vunpack.c.l.b16 %v99
  %v564 = vunpack.c.l.b16 %v100
  %v565 = vunpack.c.l.b16 %v101
  %v566 = vunpack.c.l.b16 %v102
  %v567 = vunpack.c.l.b16 %v103
  %v568 = vunpack.c.l.b16 %v104
  %v569 = vunpack.c.l.b16 %v105
  %v570 = vunpack.c.l.b16 %v106
  %v571 = vunpack.c.l.b16 %v107
  %v572 = vunpack.c.l.b16 %v108
  %v573 = vunpack.c.l.b16 %v109
  %v574 = vunpack.c.l.b16 %v110
  %v575 = vunpack.c.l.b16 %v111
  %v576 = vunpack.c.l.b16 %v112
  %v577 = vunpack.c.l.b16 %v113
  %v578 = vunpack.c.l.b16 %v114
  %v579 = vunpack.c.l.b16 %v115
  %v580 = vunpack.c.l.b16 %v116
  %v581 = vunpack.c.l.b16 %v117
  %v582 = vunpack.c.l.b16 %v118
  %v583 = vunpack.c.l.b16 %v119
  %v584 = vunpack.c.l.b16 %v120
  %v585 = vunpack.c.l.b16 %v121
  %v586 = vunpack.c.l.b16 %v122
  %v587 = vunpack.c.l.b16 %v123
  %v588 = vunpack.c.l.b16 %v124
  %v589 = vunpack.c.l.b16 %v125
  %v590 = vunpack.c.l.b16 %v126
  %v591 = vunpack.c.l.b16 %v127
  %v592 = vunpack.c.l.b16 %v128
  %v593 = vunpack.c.l.b16 %v129
  %v594 = vunpack.c.l.b16 %v130
  %v595 = vunpack.c.l.b16 %v131
  %v596 = vunpack.c.l.b16 %v132
  %v597 = vunpack.c.l.b16 %v133
  %v598 = vunpack.c.l.b16 %v134
  %v599 = vunpack.c.l.b16 %v135
  %v600 = vunpack.c.l.b16 %v136
  %v601 = vunpack.c.l.b16 %v137
  %v602 = vunpack.c.l.b16 %v138
  %v603 = vunpack.c.l.b16 %v139
  %v604 = vunpack.c.l.b16 %v140
  %v605 = vunpack.c.l.b16 %v141
  %v606 = vunpack.c.l.b16 %v142
  %v607 = vunpack.c.l.b16 %v143
  %v608 = vunpack.c.l.b16 %v144
  %v609 = vunpack.c.l.b16 %v145
  %v610 = vunpack.c.l.b16 %v146
  %v611 = vunpack.c.l.b16 %v147
  %v612 = vunpack.c.l.b16 %v148
  %v613 = vunpack.c.l.b16 %v149
  %v614 = vunpack.c.l.b16 %v150
  %v615 = vunpack.c.l.b16 %v151
  %v616 = vunpack.c.l.b16 %v152
  %v617 = vunpack.c.l.b16 %v153
  %v618 = vunpack.c.l.b16 %v154
  %v619 = vunpack.c.l.b16 %v155
  %v620 = vunpack.c.l.b16 %v156
  %v621 = vunpack.c.l.b16 %v157
  %v622 = vunpack.c.l.b16 %v158
  %v623 = vunpack.c.l.b16 %v159
  %v624 = vunpack.c.l.b16 %v160
  %v625 = vunpack.c.l.b16 %v161
  %v626 = vunpack.c.l.b16 %v162
  %v627 = vunpack.c.l.b16 %v163
  %v628 = vunpack.c.l.b16 %v164
  %v629 = vunpack.c.l.b16 %v165
  %v630 = vunpack.c.l.b16 %v166
  %v631 = vunpack.c.l.b16 %v167
  %v632 = vunpack.c.l.b16 %v168
  %v633 = vunpack.c.l.b16 %v169
  %v634 = vunpack.c.l.b16 %v170
  %v635 = vunpack.c.l.b16 %v171
  %v636 = vunpack.c.l.b16 %v172
  %v637 = vunpack.c.l.b16 %v173
  %v638 = vunpack.c.l.b16 %v174
  %v639 = vunpack.c.l.b16 %v175
  %v640 = vunpack.c.l.b16 %v176
  %v641 = vunpack.c.l.b16 %v177
  %v642 = vunpack.c.l.b16 %v178
  %v643 = vunpack.c.l.b16 %v179
  %v644 = vunpack.c.l.b16 %v180
  %v645 = vunpack.c.l.b16 %v181
  %v646 = vunpack.c.l.b16 %v182
  %v647 = vunpack.c.l.b16 %v183
  %v648 = vunpack.c.l.b16 %v184
  %v649 = vunpack.c.l.b16 %v185
  %v650 = vunpack.c.l.b16 %v186
  %v651 = vunpack.c.l.b16 %v187
  %v652 = vunpack.c.l.b16 %v188
  %v653 = vunpack.c.l.b16 %v189
  %v654 = vunpack.c.l.b16 %v190
  %v655 = vunpack.c.l.b16 %v191
  %v656 = vunpack.c.l.b16 %v192
  %v657 = vunpack.c.l.b16 %v193
  %v658 = vunpack.c.l.b16 %v194
  %v659 = vunpack.c.l.b16 %v195
  %v660 = vunpack.c.l.b16 %v196
  %v661 = vunpack.c.l.b16 %v197
  %v662 = vunpack.c.l.b16 %v198
  %v663 = vunpack.c.l.b16 %v199
  %v664 = vunpack.c.l.b16 %v200
  %v665 = vunpack.c.l.b16 %v201
  %v666 = vunpack.c.l.b16 %v202
  %v667 = vunpack.c.l.b16 %v203
  %v668 = vunpack.c.l.b16 %v204
  %v669 = vunpack.c.l.b16 %v205
  %v670 = vunpack.c.l.b16 %v206
  %v671 = vunpack.c.l.b16 %v207
  %v672 = vunpack.c.l.b16 %v208
  %v673 = vunpack.c.l.b16 %v209
  %v674 = vunpack.c.l.b16 %v210
  %v675 = vunpack.c.l.b16 %v211
  %v676 = vunpack.c.l.b16 %v212
  %v677 = vunpack.c.l.b16 %v213
  %v678 = vunpack.c.l.b16 %v214
  %v679 = vunpack.c.l.b16 %v215
  %v680 = vunpack.c.l.b16 %v216
  %v681 = vunpack.c.l.b16 %v217
  %v682 = vunpack.c.l.b16 %v218
  %v683 = vunpack.c.l.b16 %v219
  %v684 = vunpack.c.l.b16 %v220
  %v685 = vunpack.c.l.b16 %v221
  %v686 = vunpack.c.l.b16 %v222
  %v687 = vunpack.c.l.b16 %v223
  %v688 = vunpack.c.l.b16 %v224
  %v689 = vunpack.c.l.b16 %v225
  %v690 = vunpack.c.l.b16 %v226
  %v691 = vunpack.c.l.b16 %v227
  %v692 = vunpack.c.l.b16 %v228
  %v693 = vunpack.c.l.b16 %v229
  %v694 = vunpack.c.l.b16 %v230
  %v695 = vunpack.c.l.b16 %v231
  %v696 = vunpack.c.l.b16 %v232
  %v697 = vunpack.c.l.b16 %v233
  %v698 = vunpack.c.l.b16 %v234
  %v699 = vunpack.c.l.b16 %v235
  %v700 = vunpack.c.l.b16 %v236
  %v701 = vunpack.c.l.b16 %v237
  %v702 = vunpack.c.l.b16 %v238
  %v703 = vunpack.c.l.b16 %v239
  %v704 = vunpack.c.l.b16 %v240
  %v705 = vunpack.c.l.b16 %v241
  %v706 = vunpack.c.l.b16 %v242
  %v707 = vunpack.c.l.b16 %v243
  %v708 = vunpack.c.l.b16 %v244
  %v709 = vpack.c.b16 %v514, %v513
  %v710 = vpack.c.b16 %v516, %v515
  %v711 = vpack.c.b16 %v518, %v517
  %v712 = vpack.c.b16 %v520, %v519
  %v713 = vpack.c.b16 %v522, %v521
  %v714 = vpack.c.b16 %v524, %v523
  %v715 = vpack.c.b16 %v526, %v525
  %v716 = vpack.c.b16 %v528, %v527
  %v717 = vpack.c.b16 %v530, %v529
  %v718 = vpack.c.b16 %v532, %v531
  %v719 = vpack.c.b16 %v534, %v533
  %v720 = vpack.c.b16 %v536, %v535
  %v721 = vpack.c.b16 %v538, %v537
  %v722 = vpack.c.b16 %v540, %v539
  %v723 = vpack.c.b16 %v542, %v541
  %v724 = vpack.c.b16 %v544, %v543
  %v725 = vpack.c.b16 %v546, %v545
  %v726 = vpack.c.b16 %v548, %v547
  %v727 = vpack.c.b16 %v550, %v549
  %v728 = vpack.c.b16 %v552, %v551
  %v729 = vpack.c.b16 %v554, %v553
  %v730 = vpack.c.b16 %v556, %v555
  %v731 = vpack.c.b16 %v558, %v557
  %v732 = vpack.c.b16 %v560, %v559
  %v733 = vpack.c.b16 %v562, %v561
  %v734 = vpack.c.b16 %v564, %v563
  %v735 = vpack.c.b16 %v566, %v565
  %v736 = vpack.c.b16 %v568, %v567
  %v737 = vpack.c.b16 %v570, %v569
  %v738 = vpack.c.b16 %v572, %v571
  %v739 = vpack.c.b16 %v574, %v573
  %v740 = vpack.c.b16 %v576, %v575
  %v741 = vpack.c.b16 %v578, %v577
  %v742 = vpack.c.b16 %v580, %v579
  %v743 = vpack.c.b16 %v582, %v581
  %v744 = vpack.c.b16 %v584, %v583
  %v745 = vpack.c.b16 %v586, %v585
  %v746 = vpack.c.b16 %v588, %v587
  %v747 = vpack.c.b16 %v590, %v589
  %v748 = vpack.c.b16 %v592, %v591
  %v749 = vpack.c.b16 %v594, %v593
  %v750 = vpack.c.b16 %v596, %v595
  %v751 = vpack.c.b16 %v598, %v597
  %v752 = vpack.c.b16 %v600, %v599
  %v753 = vpack.c.b16 %v602, %v601
  %v754 = vpack.c.b16 %v604, %v603
  %v755 = vpack.c.b16 %v606, %v605
  %v756 = vpack.c.b16 %v608, %v607
  %v757 = vpack.c.b16 %v610, %v609
  %v758 = vpack.c.b16 %v612, %v611
  %v759 = vpack.c.b16 %v614, %v613
  %v760 = vpack.c.b16 %v616, %v615
  %v761 = vpack.c.b16 %v618, %v617
  %v762 = vpack.c.b16 %v620, %v619
  %v763 = vpack.c.b16 %v622, %v621
  %v764 = vpack.c.b16 %v624, %v623
  %v765 = vpack.c.b16 %v626, %v625
  %v766 = vpack.c.b16 %v628, %v627
  %v767 = vpack.c.b16 %v630, %v629
  %v768 = vpack.c.b16 %v632, %v631
  %v769 = vpack.c.b16 %v634, %v633
  %v770 = vpack.c.b16 %v636, %v635
  %v771 = vpack.c.b16 %v638, %v637
  %v772 = vpack.c.b16 %v640, %v639
  %v773 = vpack.c.b16 %v642, %v641
  %v774 = vpack.c.b16 %v644, %v643
  %v775 = vpack.c.b16 %v646, %v645
  %v776 = vpack.c.b16 %v648, %v647
  %v777 = vpack.c.b16 %v650, %v649
  %v778 = vpack.c.b16 %v652, %v651
  %v779 = vpack.c.b16 %v654, %v653
  %v780 = vpack.c.b16 %v656, %v655
  %v781 = vpack.c.b16 %v658, %v657
  %v782 = vpack.c.b16 %v660, %v659
  %v783 = vpack.c.b16 %v662, %v661
  %v784 = vpack.c.b16 %v664, %v663
  %v785 = vpack.c.b16 %v666, %v665
  %v786 = vpack.c.b16 %v668, %v667
  %v787 = vpack.c.b16 %v670, %v669
  %v788 = vpack.c.b16 %v672, %v671
  %v789 = vpack.c.b16 %v674, %v673
  %v790 = vpack.c.b16 %v676, %v675
  %v791 = vpack.c.b16 %v678, %v677
  %v792 = vpack.c.b16 %v680, %v679
  %v793 = vpack.c.b16 %v682, %v681
  %v794 = vpack.c.b16 %v684, %v683
  %v795 = vpack.c.b16 %v686, %v685
  %v796 = vpack.c.b16 %v688, %v687
  %v797 = vpack.c.b16 %v690, %v689
  %v798 = vpack.c.b16 %v692, %v691
  %v799 = vpack.c.b16 %v694, %v693
  %v800 = vpack.c.b16 %v696, %v695
  %v801 = vpack.c.b16 %v698, %v697
  %v802 = vpack.c.b16 %v700, %v699
  %v803 = vpack.c.b16 %v702, %v701
  %v804 = vpack.c.b16 %v704, %v703
  %v805 = vpack.c.b16 %v706, %v705
  %v806 = vpack.c.b16 %v708, %v707
  %vm905 = vcmask 261120
  %v907 = vsel %vm905, %v304, 0
  %909 = vmatprep.subr.bf16.mxu0 0
  %910 = vmatpush1.bf16.msra.mxu0 %v709
  %911 = vmatprep.subr.bf16.mxu0 0
  %912 = vmatpush1.bf16.msra.mxu0 %v710
  %913 = vmatprep.subr.bf16.mxu0 0
  %914 = vmatpush1.bf16.msra.mxu0 %v711
  %915 = vmatprep.subr.bf16.mxu0 0
  %916 = vmatpush1.bf16.msra.mxu0 %v712
  %917 = vmatprep.subr.bf16.mxu0 0
  %918 = vmatpush1.bf16.msra.mxu0 %v713
  %919 = vmatprep.subr.bf16.mxu0 0
  %920 = vmatpush1.bf16.msra.mxu0 %v714
  %921 = vmatprep.subr.bf16.mxu0 0
  %922 = vmatpush1.bf16.msra.mxu0 %v715
  %923 = vmatprep.subr.bf16.mxu0 0
  %924 = vmatpush1.bf16.msra.mxu0 %v716
  %925 = vmatprep.subr.bf16.mxu0 0
  %926 = vmatpush1.bf16.msra.mxu0 %v717
  %927 = vmatprep.subr.bf16.mxu0 0
  %928 = vmatpush1.bf16.msra.mxu0 %v718
  %929 = vmatprep.subr.bf16.mxu0 0
  %930 = vmatpush1.bf16.msra.mxu0 %v719
  %931 = vmatprep.subr.bf16.mxu0 0
  %932 = vmatpush1.bf16.msra.mxu0 %v720
  %933 = vmatprep.subr.bf16.mxu0 0
  %934 = vmatpush1.bf16.msra.mxu0 %v721
  %935 = vmatprep.subr.bf16.mxu0 0
  %936 = vmatpush1.bf16.msra.mxu0 %v722
  %937 = vmatprep.subr.bf16.mxu0 0
  %938 = vmatpush1.bf16.msra.mxu0 %v723
  %939 = vmatprep.subr.bf16.mxu0 0
  %940 = vmatpush1.bf16.msra.mxu0 %v724
  %941 = vmatprep.mubr.bf16.mxu0 %v293
  %942 = vmatmul.mubr.bf16.gmra.mrb[0].mxu0 %v292
  %v943 = vpop.f32.mrb[0].mxu0
  %v944 = vadd.f32 %v250, %v943
  %v945 = vpop.f32.mrb[0].mxu0
  %v946 = vpop.f32.mrb[0].mxu0
  %v947 = vadd.f32 %v250, %v946
  %v948 = vpop.f32.mrb[0].mxu0
  %949 = vdwg.mxu0
  %950 = vmatprep.subr.bf16.mxu0 0
  %951 = vmatpush1.bf16.msra.mxu0 %v725
  %952 = vmatprep.subr.bf16.mxu0 0
  %953 = vmatpush1.bf16.msra.mxu0 %v726
  %954 = vmatprep.subr.bf16.mxu0 0
  %955 = vmatpush1.bf16.msra.mxu0 %v727
  %956 = vmatprep.subr.bf16.mxu0 0
  %957 = vmatpush1.bf16.msra.mxu0 %v728
  %958 = vmatprep.subr.bf16.mxu0 0
  %959 = vmatpush1.bf16.msra.mxu0 %v729
  %960 = vmatprep.subr.bf16.mxu0 0
  %961 = vmatpush1.bf16.msra.mxu0 %v730
  %962 = vmatprep.subr.bf16.mxu0 0
  %963 = vmatpush1.bf16.msra.mxu0 %v731
  %964 = vmatprep.subr.bf16.mxu0 0
  %965 = vmatpush1.bf16.msra.mxu0 %v732
  %966 = vmatprep.subr.bf16.mxu0 0
  %967 = vmatpush1.bf16.msra.mxu0 %v733
  %968 = vmatprep.subr.bf16.mxu0 0
  %969 = vmatpush1.bf16.msra.mxu0 %v734
  %970 = vmatprep.subr.bf16.mxu0 0
  %971 = vmatpush1.bf16.msra.mxu0 %v735
  %972 = vmatprep.subr.bf16.mxu0 0
  %973 = vmatpush1.bf16.msra.mxu0 %v736
  %974 = vmatprep.subr.bf16.mxu0 0
  %975 = vmatpush1.bf16.msra.mxu0 %v737
  %976 = vmatprep.subr.bf16.mxu0 0
  %977 = vmatpush1.bf16.msra.mxu0 %v738
  %978 = vmatprep.subr.bf16.mxu0 0
  %979 = vmatpush1.bf16.msra.mxu0 %v739
  %980 = vmatprep.subr.bf16.mxu0 0
  %981 = vmatpush1.bf16.msra.mxu0 %v740
  %982 = vmatprep.mubr.bf16.mxu0 %v295
  %983 = vmatmul.mubr.bf16.gmra.mrb[0].mxu0 %v294
  %v984 = vpop.f32.mrb[0].mxu0
  %v985 = vadd.f32 %v944, %v984
  %v986 = vpop.f32.mrb[0].mxu0
  %v987 = vpop.f32.mrb[0].mxu0
  %v988 = vadd.f32 %v947, %v987
  %v989 = vpop.f32.mrb[0].mxu0
  %990 = vdwg.mxu0
  %991 = vmatprep.subr.bf16.mxu0 0
  %992 = vmatpush1.bf16.msra.mxu0 %v741
  %993 = vmatprep.subr.bf16.mxu0 0
  %994 = vmatpush1.bf16.msra.mxu0 %v742
  %995 = vmatprep.subr.bf16.mxu0 0
  %996 = vmatpush1.bf16.msra.mxu0 %v743
  %997 = vmatprep.subr.bf16.mxu0 0
  %998 = vmatpush1.bf16.msra.mxu0 %v744
  %999 = vmatprep.subr.bf16.mxu0 0
  %1000 = vmatpush1.bf16.msra.mxu0 %v745
  %1001 = vmatprep.subr.bf16.mxu0 0
  %1002 = vmatpush1.bf16.msra.mxu0 %v746
  %1003 = vmatprep.subr.bf16.mxu0 0
  %1004 = vmatpush1.bf16.msra.mxu0 %v747
  %1005 = vmatprep.subr.bf16.mxu0 0
  %1006 = vmatpush1.bf16.msra.mxu0 %v748
  %1007 = vmatprep.subr.bf16.mxu0 0
  %1008 = vmatpush1.bf16.msra.mxu0 %v749
  %1009 = vmatprep.subr.bf16.mxu0 0
  %1010 = vmatpush1.bf16.msra.mxu0 %v750
  %1011 = vmatprep.subr.bf16.mxu0 0
  %1012 = vmatpush1.bf16.msra.mxu0 %v751
  %1013 = vmatprep.subr.bf16.mxu0 0
  %1014 = vmatpush1.bf16.msra.mxu0 %v752
  %1015 = vmatprep.subr.bf16.mxu0 0
  %1016 = vmatpush1.bf16.msra.mxu0 %v753
  %1017 = vmatprep.subr.bf16.mxu0 0
  %1018 = vmatpush1.bf16.msra.mxu0 %v754
  %1019 = vmatprep.subr.bf16.mxu0 0
  %1020 = vmatpush1.bf16.msra.mxu0 %v755
  %1021 = vmatprep.subr.bf16.mxu0 0
  %1022 = vmatpush1.bf16.msra.mxu0 %v756
  %1023 = vmatprep.mubr.bf16.mxu0 %v297
  %1024 = vmatmul.mubr.bf16.gmra.mrb[0].mxu0 %v296
  %v1025 = vpop.f32.mrb[0].mxu0
  %v1026 = vadd.f32 %v985, %v1025
  %v1027 = vpop.f32.mrb[0].mxu0
  %v1028 = vpop.f32.mrb[0].mxu0
  %v1029 = vadd.f32 %v988, %v1028
  %v1030 = vpop.f32.mrb[0].mxu0
  %1031 = vdwg.mxu0
  %1032 = vmatprep.subr.bf16.mxu0 0
  %1033 = vmatpush1.bf16.msra.mxu0 %v757
  %1034 = vmatprep.subr.bf16.mxu0 0
  %1035 = vmatpush1.bf16.msra.mxu0 %v758
  %1036 = vmatprep.subr.bf16.mxu0 0
  %1037 = vmatpush1.bf16.msra.mxu0 %v759
  %1038 = vmatprep.subr.bf16.mxu0 0
  %1039 = vmatpush1.bf16.msra.mxu0 %v760
  %1040 = vmatprep.subr.bf16.mxu0 0
  %1041 = vmatpush1.bf16.msra.mxu0 %v761
  %1042 = vmatprep.subr.bf16.mxu0 0
  %1043 = vmatpush1.bf16.msra.mxu0 %v762
  %1044 = vmatprep.subr.bf16.mxu0 0
  %1045 = vmatpush1.bf16.msra.mxu0 %v763
  %1046 = vmatprep.subr.bf16.mxu0 0
  %1047 = vmatpush1.bf16.msra.mxu0 %v764
  %1048 = vmatprep.subr.bf16.mxu0 0
  %1049 = vmatpush1.bf16.msra.mxu0 %v765
  %1050 = vmatprep.subr.bf16.mxu0 0
  %1051 = vmatpush1.bf16.msra.mxu0 %v766
  %1052 = vmatprep.subr.bf16.mxu0 0
  %1053 = vmatpush1.bf16.msra.mxu0 %v767
  %1054 = vmatprep.subr.bf16.mxu0 0
  %1055 = vmatpush1.bf16.msra.mxu0 %v768
  %1056 = vmatprep.subr.bf16.mxu0 0
  %1057 = vmatpush1.bf16.msra.mxu0 %v769
  %1058 = vmatprep.subr.bf16.mxu0 0
  %1059 = vmatpush1.bf16.msra.mxu0 %v770
  %1060 = vmatprep.subr.bf16.mxu0 0
  %1061 = vmatpush1.bf16.msra.mxu0 %v771
  %1062 = vmatprep.subr.bf16.mxu0 0
  %1063 = vmatpush1.bf16.msra.mxu0 %v772
  %1064 = vmatprep.mubr.bf16.mxu0 %v299
  %1065 = vmatmul.mubr.bf16.gmra.mrb[0].mxu0 %v298
  %v1066 = vpop.f32.mrb[0].mxu0
  %v1067 = vadd.f32 %v1026, %v1066
  %v1068 = vpop.f32.mrb[0].mxu0
  %v1069 = vpop.f32.mrb[0].mxu0
  %v1070 = vadd.f32 %v1029, %v1069
  %v1071 = vpop.f32.mrb[0].mxu0
  %1072 = vdwg.mxu0
  %1073 = vmatprep.subr.bf16.mxu0 0
  %1074 = vmatpush1.bf16.msra.mxu0 %v773
  %1075 = vmatprep.subr.bf16.mxu0 0
  %1076 = vmatpush1.bf16.msra.mxu0 %v774
  %1077 = vmatprep.subr.bf16.mxu0 0
  %1078 = vmatpush1.bf16.msra.mxu0 %v775
  %1079 = vmatprep.subr.bf16.mxu0 0
  %1080 = vmatpush1.bf16.msra.mxu0 %v776
  %1081 = vmatprep.subr.bf16.mxu0 0
  %1082 = vmatpush1.bf16.msra.mxu0 %v777
  %1083 = vmatprep.subr.bf16.mxu0 0
  %1084 = vmatpush1.bf16.msra.mxu0 %v778
  %1085 = vmatprep.subr.bf16.mxu0 0
  %1086 = vmatpush1.bf16.msra.mxu0 %v779
  %1087 = vmatprep.subr.bf16.mxu0 0
  %1088 = vmatpush1.bf16.msra.mxu0 %v780
  %1089 = vmatprep.subr.bf16.mxu0 0
  %1090 = vmatpush1.bf16.msra.mxu0 %v781
  %1091 = vmatprep.subr.bf16.mxu0 0
  %1092 = vmatpush1.bf16.msra.mxu0 %v782
  %1093 = vmatprep.subr.bf16.mxu0 0
  %1094 = vmatpush1.bf16.msra.mxu0 %v783
  %1095 = vmatprep.subr.bf16.mxu0 0
  %1096 = vmatpush1.bf16.msra.mxu0 %v784
  %1097 = vmatprep.subr.bf16.mxu0 0
  %1098 = vmatpush1.bf16.msra.mxu0 %v785
  %1099 = vmatprep.subr.bf16.mxu0 0
  %1100 = vmatpush1.bf16.msra.mxu0 %v786
  %1101 = vmatprep.subr.bf16.mxu0 0
  %1102 = vmatpush1.bf16.msra.mxu0 %v787
  %1103 = vmatprep.subr.bf16.mxu0 0
  %1104 = vmatpush1.bf16.msra.mxu0 %v788
  %1105 = vmatprep.mubr.bf16.mxu0 %v301
  %1106 = vmatmul.mubr.bf16.gmra.mrb[0].mxu0 %v300
  %v1107 = vpop.f32.mrb[0].mxu0
  %v1108 = vadd.f32 %v1067, %v1107
  %v1109 = vpop.f32.mrb[0].mxu0
  %v1110 = vpop.f32.mrb[0].mxu0
  %v1111 = vadd.f32 %v1070, %v1110
  %v1112 = vpop.f32.mrb[0].mxu0
  %1113 = vdwg.mxu0
  %1114 = vmatprep.subr.bf16.mxu0 0
  %1115 = vmatpush1.bf16.msra.mxu0 %v789
  %1116 = vmatprep.subr.bf16.mxu0 0
  %1117 = vmatpush1.bf16.msra.mxu0 %v790
  %1118 = vmatprep.subr.bf16.mxu0 0
  %1119 = vmatpush1.bf16.msra.mxu0 %v791
  %1120 = vmatprep.subr.bf16.mxu0 0
  %1121 = vmatpush1.bf16.msra.mxu0 %v792
  %1122 = vmatprep.subr.bf16.mxu0 0
  %1123 = vmatpush1.bf16.msra.mxu0 %v793
  %1124 = vmatprep.subr.bf16.mxu0 0
  %1125 = vmatpush1.bf16.msra.mxu0 %v794
  %1126 = vmatprep.subr.bf16.mxu0 0
  %1127 = vmatpush1.bf16.msra.mxu0 %v795
  %1128 = vmatprep.subr.bf16.mxu0 0
  %1129 = vmatpush1.bf16.msra.mxu0 %v796
  %1130 = vmatprep.subr.bf16.mxu0 0
  %1131 = vmatpush1.bf16.msra.mxu0 %v797
  %1132 = vmatprep.subr.bf16.mxu0 0
  %1133 = vmatpush1.bf16.msra.mxu0 %v798
  %1134 = vmatprep.subr.bf16.mxu0 0
  %1135 = vmatpush1.bf16.msra.mxu0 %v799
  %1136 = vmatprep.subr.bf16.mxu0 0
  %1137 = vmatpush1.bf16.msra.mxu0 %v800
  %1138 = vmatprep.subr.bf16.mxu0 0
  %1139 = vmatpush1.bf16.msra.mxu0 %v801
  %1140 = vmatprep.subr.bf16.mxu0 0
  %1141 = vmatpush1.bf16.msra.mxu0 %v802
  %1142 = vmatprep.subr.bf16.mxu0 0
  %1143 = vmatpush1.bf16.msra.mxu0 %v803
  %1144 = vmatprep.subr.bf16.mxu0 0
  %1145 = vmatpush1.bf16.msra.mxu0 %v804
  %1146 = vmatprep.mubr.bf16.mxu0 %v303
  %1147 = vmatmul.mubr.bf16.gmra.mrb[0].mxu0 %v302
  %v1148 = vpop.f32.mrb[0].mxu0
  %v1149 = vadd.f32 %v1108, %v1148
  %v1150 = vpop.f32.mrb[0].mxu0
  %v1151 = vpop.f32.mrb[0].mxu0
  %v1152 = vadd.f32 %v1111, %v1151
  %v1153 = vpop.f32.mrb[0].mxu0
  %1154 = vdwg.mxu0
  %1155 = vmatprep.subr.bf16.mxu0 0
  %1156 = vmatpush1.bf16.msra.mxu0 %v805
  %1157 = vmatprep.subr.bf16.mxu0 0
  %1158 = vmatpush1.bf16.msra.mxu0 %v806
  %1159 = vmatprep.subr.bf16.mxu0 0
  %1160 = vmatpush1.bf16.msra.mxu0 0
  %1161 = vmatprep.subr.bf16.mxu0 0
  %1162 = vmatpush1.bf16.msra.mxu0 0
  %1163 = vmatprep.subr.bf16.mxu0 0
  %1164 = vmatpush1.bf16.msra.mxu0 0
  %1165 = vmatprep.subr.bf16.mxu0 0
  %1166 = vmatpush1.bf16.msra.mxu0 0
  %1167 = vmatprep.subr.bf16.mxu0 0
  %1168 = vmatpush1.bf16.msra.mxu0 0
  %1169 = vmatprep.subr.bf16.mxu0 0
  %1170 = vmatpush1.bf16.msra.mxu0 0
  %1171 = vmatprep.subr.bf16.mxu0 0
  %1172 = vmatpush1.bf16.msra.mxu0 0
  %1173 = vmatprep.subr.bf16.mxu0 0
  %1174 = vmatpush1.bf16.msra.mxu0 0
  %1175 = vmatprep.subr.bf16.mxu0 0
  %1176 = vmatpush1.bf16.msra.mxu0 0
  %1177 = vmatprep.subr.bf16.mxu0 0
  %1178 = vmatpush1.bf16.msra.mxu0 0
  %1179 = vmatprep.subr.bf16.mxu0 0
  %1180 = vmatpush1.bf16.msra.mxu0 0
  %1181 = vmatprep.subr.bf16.mxu0 0
  %1182 = vmatpush1.bf16.msra.mxu0 0
  %1183 = vmatprep.subr.bf16.mxu0 0
  %1184 = vmatpush1.bf16.msra.mxu0 0
  %1185 = vmatprep.subr.bf16.mxu0 0
  %1186 = vmatpush1.bf16.msra.mxu0 0
  %1187 = vmatprep.mubr.bf16.mxu0 0
  %1188 = vmatmul.mubr.bf16.gmra.mrb[0].mxu0 %v907
  %v1189 = vpop.f32.mrb[0].mxu0
  %v1190 = vadd.f32 %v1149, %v1189
  %v1191 = vpop.f32.mrb[0].mxu0
  %v1192 = vpop.f32.mrb[0].mxu0
  %v1193 = vadd.f32 %v1152, %v1192
  %v1194 = vpop.f32.mrb[0].mxu0
  %1195 = vdwg.mxu0
  %v1196 = vmax.f32 %v1190, 0.0
  %v1197 = vmax.f32 %v1193, 0.0
  %v1198 = vpack.c.bf16 %v1197, %v1196
  %v1199 = vld [vmem:[%s3] sm:$0xf]
  %v1200 = vld [vmem:[%s3 + $0x4] sm:$0xf]
  %v1201 = vld [vmem:[%s3 + $0x8] sm:$0xf]
  %v1202 = vld [vmem:[%s3 + $0xc] sm:$0xf]
  %v1203 = vld [vmem:[%s3 + $0x10] sm:$0xf]
  %v1204 = vld [vmem:[%s3 + $0x14] sm:$0xf]
  %v1205 = vld [vmem:[%s3 + $0x18] sm:$0xf]
  %v1206 = vld [vmem:[%s3 + $0x1c] sm:$0xf]
  %v1207 = vld [vmem:[%s3 + $0x20] sm:$0xf]
  %v1208 = vld [vmem:[%s3 + $0x24] sm:$0xf]
  %v1209 = vld [vmem:[%s3 + $0x28] sm:$0xf]
  %v1210 = vld [vmem:[%s3 + $0x2c] sm:$0xf]
  %v1211 = vld [vmem:[%s3 + $0x30] sm:$0xf]
  %v1212 = vld [vmem:[%s3 + $0x34] sm:$0xf]
  %v1213 = vld [vmem:[%s3 + $0x38] sm:$0xf]
  %v1214 = vld [vmem:[%s3 + $0x3c] sm:$0xf]
  %v1215 = vld [vmem:[%s4] sm:$0x1]
  %v1217 = vlaneseq
  %v1218 = vshrl.u32 %v1217, 7
  %v1219 = vsub.s32 0, %v1218
  %v1220 = vrot.slane %v1215, %v1219
  %v1238 = vunpack.c.l.b16 %v1199
  %v1239 = vunpack.c.l.b16 %v1200
  %v1240 = vunpack.c.l.b16 %v1201
  %v1241 = vunpack.c.l.b16 %v1202
  %v1242 = vunpack.c.l.b16 %v1203
  %v1243 = vunpack.c.l.b16 %v1204
  %v1244 = vunpack.c.l.b16 %v1205
  %v1245 = vunpack.c.l.b16 %v1206
  %v1246 = vunpack.c.l.b16 %v1207
  %v1247 = vunpack.c.l.b16 %v1208
  %v1248 = vunpack.c.l.b16 %v1209
  %v1249 = vunpack.c.l.b16 %v1210
  %v1250 = vunpack.c.l.b16 %v1211
  %v1251 = vunpack.c.l.b16 %v1212
  %v1252 = vunpack.c.l.b16 %v1213
  %v1253 = vunpack.c.l.b16 %v1214
  %v1254 = vpack.c.b16 %v1239, %v1238
  %v1255 = vpack.c.b16 %v1241, %v1240
  %v1256 = vpack.c.b16 %v1243, %v1242
  %v1257 = vpack.c.b16 %v1245, %v1244
  %v1258 = vpack.c.b16 %v1247, %v1246
  %v1259 = vpack.c.b16 %v1249, %v1248
  %v1260 = vpack.c.b16 %v1251, %v1250
  %v1261 = vpack.c.b16 %v1253, %v1252
  %1270 = vmatprep.subr.bf16.mxu0 0
  %1271 = vmatpush1.bf16.msra.mxu0 %v1254
  %1272 = vmatprep.subr.bf16.mxu0 0
  %1273 = vmatpush1.bf16.msra.mxu0 %v1255
  %1274 = vmatprep.subr.bf16.mxu0 0
  %1275 = vmatpush1.bf16.msra.mxu0 %v1256
  %1276 = vmatprep.subr.bf16.mxu0 0
  %1277 = vmatpush1.bf16.msra.mxu0 %v1257
  %1278 = vmatprep.subr.bf16.mxu0 0
  %1279 = vmatpush1.bf16.msra.mxu0 %v1258
  %1280 = vmatprep.subr.bf16.mxu0 0
  %1281 = vmatpush1.bf16.msra.mxu0 %v1259
  %1282 = vmatprep.subr.bf16.mxu0 0
  %1283 = vmatpush1.bf16.msra.mxu0 %v1260
  %1284 = vmatprep.subr.bf16.mxu0 0
  %1285 = vmatpush1.bf16.msra.mxu0 %v1261
  %1286 = vmatprep.subr.bf16.mxu0 0
  %1287 = vmatpush1.bf16.msra.mxu0 0
  %1288 = vmatprep.subr.bf16.mxu0 0
  %1289 = vmatpush1.bf16.msra.mxu0 0
  %1290 = vmatprep.subr.bf16.mxu0 0
  %1291 = vmatpush1.bf16.msra.mxu0 0
  %1292 = vmatprep.subr.bf16.mxu0 0
  %1293 = vmatpush1.bf16.msra.mxu0 0
  %1294 = vmatprep.subr.bf16.mxu0 0
  %1295 = vmatpush1.bf16.msra.mxu0 0
  %1296 = vmatprep.subr.bf16.mxu0 0
  %1297 = vmatpush1.bf16.msra.mxu0 0
  %1298 = vmatprep.subr.bf16.mxu0 0
  %1299 = vmatpush1.bf16.msra.mxu0 0
  %1300 = vmatprep.subr.bf16.mxu0 0
  %1301 = vmatpush1.bf16.msra.mxu0 0
  %1302 = vmatprep.mubr.bf16.mxu0 0
  %1303 = vmatmul.mubr.bf16.gmra.mrb[0].mxu0 %v1198
  %v1304 = vpop.f32.mrb[0].mxu0
  %v1305 = vadd.f32 %v1220, %v1304
  %v1306 = vpop.f32.mrb[0].mxu0
  %v1307 = vpop.f32.mrb[0].mxu0
  %v1308 = vadd.f32 %v1220, %v1307
  %v1309 = vpop.f32.mrb[0].mxu0
  %1310 = vdwg.mxu0
  %v1311 = vmax.f32 %v1305, 0.0
  %v1312 = vmax.f32 %v1308, 0.0
  %v1313 = vpack.c.bf16 %v1312, %v1311
  %v1314 = vld [vmem:[%s5] sm:$0xf]
  %v1315 = vld [vmem:[%s5 + $0x4] sm:$0xf]
  %v1316 = vld [vmem:[%s5 + $0x8] sm:$0xf]
  %v1317 = vld [vmem:[%s5 + $0xc] sm:$0xf]
  %v1318 = vld [vmem:[%s5 + $0x10] sm:$0xf]
  %v1319 = vld [vmem:[%s5 + $0x14] sm:$0xf]
  %v1320 = vld [vmem:[%s5 + $0x18] sm:$0xf]
  %v1321 = vld [vmem:[%s5 + $0x1c] sm:$0xf]
  %v1322 = vld [vmem:[%s5 + $0x20] sm:$0xf]
  %v1323 = vld [vmem:[%s5 + $0x24] sm:$0xf]
  %v1324 = vld [vmem:[%s5 + $0x28] sm:$0xf]
  %v1325 = vld [vmem:[%s5 + $0x2c] sm:$0xf]
  %v1326 = vld [vmem:[%s5 + $0x30] sm:$0xf]
  %v1327 = vld [vmem:[%s5 + $0x34] sm:$0xf]
  %v1328 = vld [vmem:[%s5 + $0x38] sm:$0xf]
  %v1329 = vld [vmem:[%s5 + $0x3c] sm:$0xf]
  %v1330 = vld [vmem:[%s6] sm:$0x1]
  %v1332 = vlaneseq
  %v1333 = vshrl.u32 %v1332, 7
  %v1334 = vsub.s32 0, %v1333
  %v1335 = vrot.slane %v1330, %v1334
  %v1353 = vunpack.c.l.b16 %v1314
  %v1354 = vunpack.c.l.b16 %v1315
  %v1355 = vunpack.c.l.b16 %v1316
  %v1356 = vunpack.c.l.b16 %v1317
  %v1357 = vunpack.c.l.b16 %v1318
  %v1358 = vunpack.c.l.b16 %v1319
  %v1359 = vunpack.c.l.b16 %v1320
  %v1360 = vunpack.c.l.b16 %v1321
  %v1361 = vunpack.c.l.b16 %v1322
  %v1362 = vunpack.c.l.b16 %v1323
  %v1363 = vunpack.c.l.b16 %v1324
  %v1364 = vunpack.c.l.b16 %v1325
  %v1365 = vunpack.c.l.b16 %v1326
  %v1366 = vunpack.c.l.b16 %v1327
  %v1367 = vunpack.c.l.b16 %v1328
  %v1368 = vunpack.c.l.b16 %v1329
  %v1369 = vpack.c.b16 %v1354, %v1353
  %v1370 = vpack.c.b16 %v1356, %v1355
  %v1371 = vpack.c.b16 %v1358, %v1357
  %v1372 = vpack.c.b16 %v1360, %v1359
  %v1373 = vpack.c.b16 %v1362, %v1361
  %v1374 = vpack.c.b16 %v1364, %v1363
  %v1375 = vpack.c.b16 %v1366, %v1365
  %v1376 = vpack.c.b16 %v1368, %v1367
  %1385 = vmatprep.subr.bf16.mxu0 0
  %1386 = vmatpush1.bf16.msra.mxu0 %v1369
  %1387 = vmatprep.subr.bf16.mxu0 0
  %1388 = vmatpush1.bf16.msra.mxu0 %v1370
  %1389 = vmatprep.subr.bf16.mxu0 0
  %1390 = vmatpush1.bf16.msra.mxu0 %v1371
  %1391 = vmatprep.subr.bf16.mxu0 0
  %1392 = vmatpush1.bf16.msra.mxu0 %v1372
  %1393 = vmatprep.subr.bf16.mxu0 0
  %1394 = vmatpush1.bf16.msra.mxu0 %v1373
  %1395 = vmatprep.subr.bf16.mxu0 0
  %1396 = vmatpush1.bf16.msra.mxu0 %v1374
  %1397 = vmatprep.subr.bf16.mxu0 0
  %1398 = vmatpush1.bf16.msra.mxu0 %v1375
  %1399 = vmatprep.subr.bf16.mxu0 0
  %1400 = vmatpush1.bf16.msra.mxu0 %v1376
  %1401 = vmatprep.subr.bf16.mxu0 0
  %1402 = vmatpush1.bf16.msra.mxu0 0
  %1403 = vmatprep.subr.bf16.mxu0 0
  %1404 = vmatpush1.bf16.msra.mxu0 0
  %1405 = vmatprep.subr.bf16.mxu0 0
  %1406 = vmatpush1.bf16.msra.mxu0 0
  %1407 = vmatprep.subr.bf16.mxu0 0
  %1408 = vmatpush1.bf16.msra.mxu0 0
  %1409 = vmatprep.subr.bf16.mxu0 0
  %1410 = vmatpush1.bf16.msra.mxu0 0
  %1411 = vmatprep.subr.bf16.mxu0 0
  %1412 = vmatpush1.bf16.msra.mxu0 0
  %1413 = vmatprep.subr.bf16.mxu0 0
  %1414 = vmatpush1.bf16.msra.mxu0 0
  %1415 = vmatprep.subr.bf16.mxu0 0
  %1416 = vmatpush1.bf16.msra.mxu0 0
  %1417 = vmatprep.mubr.bf16.mxu0 0
  %1418 = vmatmul.mubr.bf16.gmra.mrb[0].mxu0 %v1313
  %v1419 = vpop.f32.mrb[0].mxu0
  %v1420 = vadd.f32 %v1335, %v1419
  %v1421 = vpop.f32.mrb[0].mxu0
  %v1422 = vpop.f32.mrb[0].mxu0
  %v1423 = vadd.f32 %v1335, %v1422
  %v1424 = vpop.f32.mrb[0].mxu0
  %1425 = vdwg.mxu0
  %1426 = vmax.xlane.f32.xlu0 %v1420
  %v1427 = vpop.xlane.xlu0 %1426
  %1428 = vmax.xlane.f32.xlu0 %v1423
  %v1429 = vpop.xlane.xlu0 %1428
  %v1430 = vsub.f32 %v1420, %v1427
  %v1431 = vsub.f32 %v1423, %v1429
  %v1432 = vmul.f32 %v1430, 1.442695
  %v1433 = vpow.pop %v1432
  %v1434 = vmul.f32 %v1431, 1.442695
  %v1435 = vpow.pop %v1434
  %1436 = vadd.xlane.f32.xlu0 %v1433
  %v1437 = vpop.xlane.xlu0 %1436
  %1438 = vadd.xlane.f32.xlu0 %v1435
  %v1439 = vpop.xlane.xlu0 %1438
  %v1440 = vrcp.pop %v1437
  %v1441 = vrcp.pop %v1439
  %v1442 = vmul.f32 %v1433, %v1440
  %v1443 = vmul.f32 %v1435, %v1441
  %1444 = vst [vmem:[%s9] sm:$0xff] %v1442
  %1445 = vst [vmem:[%s9 + $0x8] sm:$0xff] %v1443
  %v1446 = vld [vmem:[%s7] sm:$0xf]
  %v1447 = vld [vmem:[%s7 + $0x4] sm:$0xf]
  %v1448 = vld [vmem:[%s7 + $0x8] sm:$0xf]
  %v1449 = vld [vmem:[%s7 + $0xc] sm:$0xf]
  %v1450 = vld [vmem:[%s7 + $0x10] sm:$0xf]
  %v1451 = vld [vmem:[%s7 + $0x14] sm:$0xf]
  %v1452 = vld [vmem:[%s7 + $0x18] sm:$0xf]
  %v1453 = vld [vmem:[%s7 + $0x1c] sm:$0xf]
  %v1454 = vld [vmem:[%s7 + $0x20] sm:$0xf]
  %v1455 = vld [vmem:[%s7 + $0x24] sm:$0xf]
  %v1456 = vld [vmem:[%s7 + $0x28] sm:$0xf]
  %v1457 = vld [vmem:[%s7 + $0x2c] sm:$0xf]
  %v1458 = vld [vmem:[%s7 + $0x30] sm:$0xf]
  %v1459 = vld [vmem:[%s7 + $0x34] sm:$0xf]
  %v1460 = vld [vmem:[%s7 + $0x38] sm:$0xf]
  %v1461 = vld [vmem:[%s7 + $0x3c] sm:$0xf]
  %v1462 = vld [vmem:[%s8] sm:$0x1]
  %v1464 = vlaneseq
  %v1465 = vshrl.u32 %v1464, 7
  %v1466 = vsub.s32 0, %v1465
  %v1467 = vrot.slane %v1462, %v1466
  %v1485 = vunpack.c.l.b16 %v1446
  %v1486 = vunpack.c.l.b16 %v1447
  %v1487 = vunpack.c.l.b16 %v1448
  %v1488 = vunpack.c.l.b16 %v1449
  %v1489 = vunpack.c.l.b16 %v1450
  %v1490 = vunpack.c.l.b16 %v1451
  %v1491 = vunpack.c.l.b16 %v1452
  %v1492 = vunpack.c.l.b16 %v1453
  %v1493 = vunpack.c.l.b16 %v1454
  %v1494 = vunpack.c.l.b16 %v1455
  %v1495 = vunpack.c.l.b16 %v1456
  %v1496 = vunpack.c.l.b16 %v1457
  %v1497 = vunpack.c.l.b16 %v1458
  %v1498 = vunpack.c.l.b16 %v1459
  %v1499 = vunpack.c.l.b16 %v1460
  %v1500 = vunpack.c.l.b16 %v1461
  %v1501 = vpack.c.b16 %v1486, %v1485
  %v1502 = vpack.c.b16 %v1488, %v1487
  %v1503 = vpack.c.b16 %v1490, %v1489
  %v1504 = vpack.c.b16 %v1492, %v1491
  %v1505 = vpack.c.b16 %v1494, %v1493
  %v1506 = vpack.c.b16 %v1496, %v1495
  %v1507 = vpack.c.b16 %v1498, %v1497
  %v1508 = vpack.c.b16 %v1500, %v1499
  %1517 = vmatprep.subr.bf16.mxu0 0
  %1518 = vmatpush1.bf16.msra.mxu0 %v1501
  %1519 = vmatprep.subr.bf16.mxu0 0
  %1520 = vmatpush1.bf16.msra.mxu0 %v1502
  %1521 = vmatprep.subr.bf16.mxu0 0
  %1522 = vmatpush1.bf16.msra.mxu0 %v1503
  %1523 = vmatprep.subr.bf16.mxu0 0
  %1524 = vmatpush1.bf16.msra.mxu0 %v1504
  %1525 = vmatprep.subr.bf16.mxu0 0
  %1526 = vmatpush1.bf16.msra.mxu0 %v1505
  %1527 = vmatprep.subr.bf16.mxu0 0
  %1528 = vmatpush1.bf16.msra.mxu0 %v1506
  %1529 = vmatprep.subr.bf16.mxu0 0
  %1530 = vmatpush1.bf16.msra.mxu0 %v1507
  %1531 = vmatprep.subr.bf16.mxu0 0
  %1532 = vmatpush1.bf16.msra.mxu0 %v1508
  %1533 = vmatprep.subr.bf16.mxu0 0
  %1534 = vmatpush1.bf16.msra.mxu0 0
  %1535 = vmatprep.subr.bf16.mxu0 0
  %1536 = vmatpush1.bf16.msra.mxu0 0
  %1537 = vmatprep.subr.bf16.mxu0 0
  %1538 = vmatpush1.bf16.msra.mxu0 0
  %1539 = vmatprep.subr.bf16.mxu0 0
  %1540 = vmatpush1.bf16.msra.mxu0 0
  %1541 = vmatprep.subr.bf16.mxu0 0
  %1542 = vmatpush1.bf16.msra.mxu0 0
  %1543 = vmatprep.subr.bf16.mxu0 0
  %1544 = vmatpush1.bf16.msra.mxu0 0
  %1545 = vmatprep.subr.bf16.mxu0 0
  %1546 = vmatpush1.bf16.msra.mxu0 0
  %1547 = vmatprep.subr.bf16.mxu0 0
  %1548 = vmatpush1.bf16.msra.mxu0 0
  %1549 = vmatprep.mubr.bf16.mxu0 0
  %1550 = vmatmul.mubr.bf16.gmra.mrb[0].mxu0 %v1313
  %v1551 = vpop.f32.mrb[0].mxu0
  %v1552 = vadd.f32 %v1467, %v1551
  %v1553 = vpop.f32.mrb[0].mxu0
  %v1554 = vpop.f32.mrb[0].mxu0
  %v1555 = vadd.f32 %v1467, %v1554
  %v1556 = vpop.f32.mrb[0].mxu0
  %1557 = vdwg.mxu0
  %1558 = vst [vmem:[%s10] sm:$0xff] %v1552
  %1559 = vst [vmem:[%s10 + $0x8] sm:$0xff] %v1555
  // Predicated region
  $region38: #{_forward_impl.5} parent=0 // pred_check
    _
  $region39: #{_forward_impl.5} parent=0 // pred_check_branch
    %1561 = sbr.rel (0) target = $region41
  $region40: #{_forward_impl.5} parent=0 // pred_region
    _
  $region41: #{_forward_impl.5} parent=0 // pred_fallthru
    _
  // Predicated region
  $region42: #{_forward_impl.5} parent=0 // pred_check
    _
  $region43: #{_forward_impl.5} parent=0 // pred_check_branch
    %1563 = sbr.rel (0) target = $region45
  $region44: #{_forward_impl.5} parent=0 // pred_region
    _
  $region45: #{_forward_impl.5} parent=0 // pred_fallthru
    _
  // Predicated region
  $region46: #{_forward_impl.5} parent=0 // pred_check
    _
  $region47: #{_forward_impl.5} parent=0 // pred_check_branch
    %1565 = sbr.rel (0) target = $region49
  $region48: #{_forward_impl.5} parent=0 // pred_region
    _
  $region49: #{_forward_impl.5} parent=0 // pred_fallthru
    _
  // Predicated region
  $region50: #{_forward_impl.5} parent=0 // pred_check
    _
  $region51: #{_forward_impl.5} parent=0 // pred_check_branch
    %1567 = sbr.rel (0) target = $region53
  $region52: #{_forward_impl.5} parent=0 // pred_region
    _
  $region53: #{_forward_impl.5} parent=0 // pred_fallthru
    _

</llo_original>
